<compile_context>
chip_gen: v7x
topology: tpu7x:2x2x1
jax: 0.10.0
libtpu: 0.0.40
codegen_flags: <defaults>
</compile_context>

<pallas_src>
import functools

import numpy as np
import jax
import jax.numpy as jnp
from jax import lax
from jax.experimental import pallas as pl
from jax.experimental.pallas import tpu as pltpu

NEG_INF = float("-inf")


def _vmem_capacity_bytes():
    try:
        return int(pltpu.get_tpu_info().vmem_capacity_bytes)
    except Exception:                      # pragma: no cover - conservative fallback
        return 64 * 1024 * 1024            # v7x per-core VMEM (smallest of v5e/v6e/v7x)


def _choose_tiles(B, S, V, itemsize, cap):
    """Batch tile, sequence tile (sublane aligned) and top-k lane chunk."""
    sub = max(8, 32 // max(1, itemsize))            # 8 f32 / 16 bf16 / 32 int8
    bt = B if B <= 8 else 8
    budget = max(1 << 20, cap // 12)                # logits bytes per tile
    rows = int(budget // max(1, bt * V * itemsize))
    rows = max(sub, min(rows, 64))                  # row loop is unrolled -> cap it
    ts = S if S <= rows else (rows // sub) * sub    # multiple of sublane or == S
    # top-k chunk: keep the (bt*ts, chunk) f32 working set within ~32 vregs
    if V <= 128:
        chunk = V
    else:
        c = ((32 * 1024) // max(1, bt * ts)) // 128 * 128
        chunk = min(V, max(128, c))
    return bt, ts, chunk


# ----------------------------------------------------------------------------
# Fused kernel: log-softmax + batch beam search + MWER dist/err + reduction.
# Grid (B_tiles parallel, S_tiles arbitrary).  Per batch-tile state (beam
# log-probs, end flag, n-best log distribution, n-best word-error count) lives
# in VMEM scratch and is (re)initialized on the first sequence tile.
# ----------------------------------------------------------------------------
def _mwer_beam_kernel(logit_ref, mask_ref, tgt_ref, out_ref,
                      lp_scr, ef_scr, dist_scr, err_scr,
                      *, seq_len, beam, chunk):
    bt, ts, V = logit_ref.shape
    st = pl.program_id(1)
    n_st = pl.num_programs(1)

    # ---- one vectorized pass over the resident tile: chunked running-winner
    #      top-`beam` per row + online logZ (no (rows, V) array is rewritten).
    run_v = jnp.full((bt, ts, beam), NEG_INF, jnp.float32)   # running top values (raw logits)
    run_t = jnp.full((bt, ts, beam), V, jnp.int32)           # running top tokens
    m_run = jnp.full((bt, ts, 1), NEG_INF, jnp.float32)      # running row max
    sumexp = jnp.zeros((bt, ts, 1), jnp.float32)             # running sum(exp(x - m))
    for c0 in range(0, V, chunk):
        cs = min(chunk, V - c0)
        xc = logit_ref[:, :, c0:c0 + cs].astype(jnp.float32)           # (bt, ts, cs)
        tc = lax.broadcasted_iota(jnp.int32, (bt, ts, cs), 2) + c0
        wv = jnp.concatenate([run_v, xc], axis=-1)                     # small: fits vregs
        wt = jnp.concatenate([run_t, tc], axis=-1)
        vs, tks = [], []
        for _ in range(beam):
            m = jnp.max(wv, axis=-1, keepdims=True)
            t = jnp.min(jnp.where(wv == m, wt, V), axis=-1, keepdims=True)  # lowest-index tie-break
            vs.append(m)
            tks.append(t)
            wv = jnp.where((wv == m) & (wt == t), NEG_INF, wv)
        run_v = jnp.concatenate(vs, axis=-1)
        run_t = jnp.concatenate(tks, axis=-1)
        m_new = run_v[:, :, 0:1]                                       # running row max
        sumexp = sumexp * jnp.exp(m_run - m_new) + jnp.sum(
            jnp.exp(xc - m_new), axis=-1, keepdims=True)
        m_run = m_new
    logz = m_run + jnp.log(sumexp)                                     # (bt, ts, 1)
    # top-k order is invariant to the per-row shift, so subtract logZ only on
    # the (bt, ts, beam) winners instead of the whole tile.
    sv_all = run_v - logz                                              # top-beam log-probs
    sp_all = run_t                                                     # top-beam tokens

    bcol = lax.broadcasted_iota(jnp.int32, (bt, beam), 1)
    nc = beam * beam
    ccol = lax.broadcasted_iota(jnp.int32, (bt, nc), 1)

    def row0():
        mk = mask_ref[:, 0, :]                                         # (bt, 1)
        ef = mk == 1
        sv = sv_all[:, 0, :]                                           # (bt, beam)
        sp = sp_all[:, 0, :]
        lp = jnp.where(ef & (bcol == 0), 0.0, sv)                      # mask_finished_scores
        lp = jnp.where(ef & (bcol > 0), NEG_INF, lp)
        lp_scr[...] = lp
        notpad = mk == 0
        dist_scr[...] = jnp.where(notpad, sv, 0.0)                     # gathered log-prob
        err_scr[...] = jnp.where(notpad & (sp != tgt_ref[:, 0, :]), 1.0, 0.0)
        ef_scr[...] = mk

    def row(j):
        mk = mask_ref[:, j, :]
        ef = ef_scr[...] == 1                         # end flag = mask[pos - 1]
        lp = lp_scr[...]                              # (bt, beam)
        sv = sv_all[:, j, :]
        sp = sp_all[:, j, :]
        # lp_q is a per-row scalar shift, so the flattened (beam, V) top-k only
        # ever selects the per-row top-`beam` tokens; the beam-major candidate
        # order + lowest-index tie-break reproduce torch.topk exactly.
        cand_v = jnp.concatenate([lp[:, q:q + 1] + sv for q in range(beam)], axis=1)
        cand_t = jnp.concatenate([sp] * beam, axis=1)                  # (bt, beam*beam)
        cand_g = jnp.concatenate([sv] * beam, axis=1)                  # per-step log-prob
        w = cand_v
        vals, toks, gath = [], [], []
        for _ in range(beam):
            m = jnp.max(w, axis=1, keepdims=True)
            p = jnp.min(jnp.where(w == m, ccol, nc), axis=1, keepdims=True)
            sel = ccol == p
            vals.append(m)
            toks.append(jnp.min(jnp.where(sel, cand_t, V), axis=1, keepdims=True))
            gath.append(jnp.sum(jnp.where(sel, cand_g, 0.0), axis=1, keepdims=True))
            w = jnp.where(sel, NEG_INF, w)
        lp_new = jnp.concatenate(vals, axis=1)
        tok_new = jnp.concatenate(toks, axis=1)
        g_new = jnp.concatenate(gath, axis=1)
        # finished rows: lp carries unchanged (torch reaches the same values via
        # its 0/-inf score masking); their dist/err contributions are zero.
        lp_scr[...] = jnp.where(ef, lp, lp_new)
        notpad = mk == 0
        dist_scr[...] += jnp.where(notpad, g_new, 0.0)
        err_scr[...] += jnp.where(notpad & (tok_new != tgt_ref[:, j, :]), 1.0, 0.0)
        ef_scr[...] = mk

    # sequential part: only (bt, beam^2)-sized ops per row, so the static unroll
    # (ts <= 64) keeps live ranges tiny -- the heavy V-wide work is above.
    for j in range(ts):
        if j == 0:
            pl.when(st == 0)(row0)
            pl.when(st != 0)(functools.partial(row, 0))
        else:
            pl.when(st * ts + j < seq_len)(functools.partial(row, j))

    @pl.when(st == n_st - 1)
    def _():
        dist = dist_scr[...]                                           # (bt, beam)
        err = err_scr[...]
        m = jnp.max(dist, axis=1, keepdims=True)
        lse = m + jnp.log(jnp.sum(jnp.exp(dist - m), axis=1, keepdims=True))
        p = jnp.exp(dist - lse)
        loss = jnp.sum(p * (err - jnp.mean(err, axis=1, keepdims=True)),
                       axis=1, keepdims=True)                          # (bt, 1)
        out_ref[...] = loss


def mwer_loss_pallas(logit, tgt_i32, masks_i32, beam):
    B, S, V = logit.shape
    itemsize = jnp.dtype(logit.dtype).itemsize
    cap = _vmem_capacity_bytes()
    bt, ts, chunk = _choose_tiles(B, S, V, itemsize, cap)

    # right-size the VMEM request from the actual footprint (double-buffered
    # logits tile + chunked f32 working set + headroom), capped below capacity.
    tile_bytes = bt * ts * V * itemsize
    work_bytes = 8 * bt * ts * max(chunk, 128) * 4
    need = 2 * tile_bytes + work_bytes + (6 << 20)
    vmem_limit = int(min(max(need, 32 << 20), cap - (4 << 20)))

    kern = functools.partial(_mwer_beam_kernel, seq_len=S, beam=beam, chunk=chunk)
    out = pl.pallas_call(
        kern,
        out_shape=jax.ShapeDtypeStruct((B, 1), jnp.float32),
        grid=(pl.cdiv(B, bt), pl.cdiv(S, ts)),
        in_specs=[pl.BlockSpec((bt, ts, V), lambda b, s: (b, s, 0)),
                  pl.BlockSpec((bt, ts, 1), lambda b, s: (b, s, 0)),
                  pl.BlockSpec((bt, ts, 1), lambda b, s: (b, s, 0))],
        out_specs=pl.BlockSpec((bt, 1), lambda b, s: (b, 0)),
        scratch_shapes=[pltpu.VMEM((bt, beam), jnp.float32),   # running beam log-probs
                        pltpu.VMEM((bt, 1), jnp.int32),        # end flag (prev mask)
                        pltpu.VMEM((bt, beam), jnp.float32),   # n-best log distribution
                        pltpu.VMEM((bt, beam), jnp.float32)],  # n-best word-error count
        compiler_params=pltpu.CompilerParams(
            dimension_semantics=("parallel", "arbitrary"),
            vmem_limit_bytes=vmem_limit),
    )(logit, masks_i32[..., None], tgt_i32[..., None])
    return out[:, 0]                                                   # (B,)


# ----------------------------------------------------------------------------
# Forward pass (glue in plain JAX; the logits tensor is only touched by the
# single fused kernel above).
# ----------------------------------------------------------------------------
@functools.partial(jax.jit, static_argnames=("beam", "reduction", "eos_id"))
def _mwer_forward(logit, tgt, tgt_lens, beam, reduction, eos_id):
    B, S, V = logit.shape
    lens = tgt_lens if eos_id < 0 else tgt_lens - 1
    # make_pad_mask: 1 where position >= length
    masks = (jnp.arange(S, dtype=jnp.int32)[None, :] >= lens[:, None]).astype(jnp.int32)
    loss_b = mwer_loss_pallas(logit, tgt.astype(jnp.int32), masks, beam)
    if reduction == "sum":
        return jnp.sum(loss_b)
    if reduction == "mean":
        return jnp.mean(loss_b)
    return loss_b


class Seq2seqMwerLoss:
    """Pallas-TPU implementation of the beam-search MWER loss (no parameters)."""

    def __init__(self, sampling_method="beam_search", candidate_paths_num=4,
                 reduction="mean", eos_id=-1):
        if sampling_method != "beam_search":
            # TODO(synk): negative_sampling path (torch.randint sampling mask) not implemented.
            raise NotImplementedError("only sampling_method='beam_search' is implemented")
        self.candidate_paths_num = candidate_paths_num
        self.reduction = reduction
        self.eos_id = eos_id

    def __call__(self, logit, tgt, tgt_lens):
        assert tgt_lens.shape[0] == tgt.shape[0] == logit.shape[0]
        assert logit.shape[1] == tgt.shape[1]
        return _mwer_forward(logit, tgt, tgt_lens,
                             beam=self.candidate_paths_num,
                             reduction=self.reduction,
                             eos_id=self.eos_id)


# ----------------------------------------------------------------------------
# Pure-JAX reference (same math, lax.top_k) — used only for a sanity check.
# ----------------------------------------------------------------------------
def _reference_loss(logit, tgt, masks_bool, beam, reduction):
    x = logit.astype(jnp.float32)
    m = jnp.max(x, axis=-1, keepdims=True)
    logz = m + jnp.log(jnp.sum(jnp.exp(x - m), axis=-1, keepdims=True))
    logp = x - logz
    B, S, V = logp.shape
    eos = V - 1
    lp, idx = jax.lax.top_k(logp[:, 0, :], beam)
    ef = masks_bool[:, 0][:, None]
    col = jnp.arange(beam)[None, :]
    lp = jnp.where(ef & (col == 0), 0.0, lp)
    lp = jnp.where(ef & (col > 0), -jnp.inf, lp)
    idx = jnp.where(ef, eos, idx)
    toks = [idx]
    vcol = jnp.arange(V)[None, :]
    for i in range(1, S):
        scores = jnp.where(ef & (vcol == 0), 0.0, logp[:, i, :])
        scores = jnp.where(ef & (vcol > 0), -jnp.inf, scores)
        comb = (lp[:, :, None] + scores[:, None, :]).reshape(B, beam * V)
        lp, top_idx = jax.lax.top_k(comb, beam)
        idx = jnp.where(ef, eos, top_idx)
        toks.append(idx % V)
        ef = masks_bool[:, i][:, None]
    indices = jnp.stack(toks, axis=-1)                                   # (B, beam, S)
    nlog = jnp.broadcast_to(logp[:, None], (B, beam, S, V))
    g = jnp.take_along_axis(nlog, indices[..., None], axis=-1)[..., 0]   # (B, beam, S)
    dist = jnp.sum(jnp.where(masks_bool[:, None, :], 0.0, g), axis=-1).T  # (beam, B)
    pred = jnp.transpose(indices, (1, 0, 2))                             # (beam, B, S)
    tgt_m = jnp.where(masks_bool, -1, tgt)
    pred_m = jnp.where(masks_bool[None], -1, pred)
    err = jnp.sum(tgt_m[None] != pred_m, axis=-1).astype(jnp.float32)    # (beam, B)
    dm = jnp.max(dist, axis=0, keepdims=True)
    lse = dm + jnp.log(jnp.sum(jnp.exp(dist - dm), axis=0, keepdims=True))
    p = jnp.exp(dist - lse)
    loss_b = jnp.sum(p * (err - jnp.mean(err, axis=0, keepdims=True)), axis=0)
    return jnp.mean(loss_b) if reduction == "mean" else jnp.sum(loss_b)


if __name__ == "__main__":
    B, S, V = 2, 8, 32
    beam = 4
    key = jax.random.PRNGKey(0)
    k1, k2 = jax.random.split(key)
    logit = jax.random.normal(k1, (B, S, V), dtype=jnp.float32)
    tgt = jax.random.randint(k2, (B, S), 0, V, dtype=jnp.int32)
    tgt_lens = jnp.array([S, 5], dtype=jnp.int32)

    loss_fn = Seq2seqMwerLoss(sampling_method="beam_search",
                              candidate_paths_num=beam, reduction="mean", eos_id=-1)
    loss = jax.block_until_ready(loss_fn(logit, tgt, tgt_lens))

    # sanity check against a pure-JAX reference
    masks_bool = jnp.arange(S)[None, :] >= tgt_lens[:, None]
    ref = _reference_loss(logit, tgt, masks_bool, beam, "mean")
    np.testing.assert_allclose(np.asarray(loss), np.asarray(ref), rtol=1e-4, atol=1e-4)

    print("KERNEL_OK")
</pallas_src>

<mosaic_0001>
module attributes {stable_mosaic.version = 11 : i64} {
  func.func @_mwer_beam_kernel(%arg0: i32, %arg1: i32, %arg2: memref<2x8x32xf32, #tpu.memory_space<vmem>>, %arg3: memref<2x8x1xi32, #tpu.memory_space<vmem>>, %arg4: memref<2x8x1xi32, #tpu.memory_space<vmem>>, %arg5: memref<2x1xf32, #tpu.memory_space<vmem>>, %arg6: memref<2x4xf32, #tpu.memory_space<vmem>>, %arg7: memref<2x1xi32, #tpu.memory_space<vmem>>, %arg8: memref<2x4xf32, #tpu.memory_space<vmem>>, %arg9: memref<2x4xf32, #tpu.memory_space<vmem>>) attributes {dimension_semantics = [#tpu.dimension_semantics<parallel>, #tpu.dimension_semantics<arbitrary>], iteration_bounds = array<i64: 1, 1>, scalar_prefetch = 0 : i64, scratch_operands = 4 : i64, tpu.core_type = #tpu.core_type<tc>, window_params = [{transform_indices = @transform_0, window_bounds = array<i64: 2, 8, 32>}, {transform_indices = @transform_1, window_bounds = array<i64: 2, 8, 1>}, {transform_indices = @transform_2, window_bounds = array<i64: 2, 8, 1>}, {transform_indices = @transform_3, window_bounds = array<i64: 2, 1>}]} {
    %cst = arith.constant 0xFF800000 : f32
    %0 = vector.broadcast %cst : f32 to vector<2x8x4xf32>
    %c32_i32 = arith.constant 32 : i32
    %1 = vector.broadcast %c32_i32 : i32 to vector<2x8x4xi32>
    %cst_0 = arith.constant 0xFF800000 : f32
    %2 = vector.broadcast %cst_0 : f32 to vector<2x8x1xf32>
    %cst_1 = arith.constant 0.000000e+00 : f32
    %3 = vector.broadcast %cst_1 : f32 to vector<2x8x1xf32>
    %c0 = arith.constant 0 : index
    %c0_2 = arith.constant 0 : index
    %c0_3 = arith.constant 0 : index
    %4 = vector.load %arg2[%c0, %c0_2, %c0_3] : memref<2x8x32xf32, #tpu.memory_space<vmem>>, vector<2x8x32xf32>
    %5 = tpu.iota {dimensions = array<i32: 2>} : vector<2x8x32xi32>
    %c0_i32 = arith.constant 0 : i32
    %6 = vector.broadcast %c0_i32 : i32 to vector<2x8x32xi32>
    %7 = arith.addi %5, %6 : vector<2x8x32xi32>
    %8 = tpu.concatenate %0, %4 in 2 : vector<2x8x4xf32>, vector<2x8x32xf32> -> vector<2x8x36xf32>
    %9 = tpu.concatenate %1, %7 in 2 : vector<2x8x4xi32>, vector<2x8x32xi32> -> vector<2x8x36xi32>
    %cst_4 = arith.constant dense<0xFF800000> : vector<2x8xf32>
    %10 = vector.multi_reduction <maximumf>, %8, %cst_4 [2] : vector<2x8x36xf32> to vector<2x8xf32>
    %11 = vector.shape_cast %10 : vector<2x8xf32> to vector<2x8x1xf32>
    %12 = vector.broadcast %11 : vector<2x8x1xf32> to vector<2x8x36xf32>
    %13 = arith.cmpf oeq, %8, %12 : vector<2x8x36xf32>
    %c32_i32_5 = arith.constant 32 : i32
    %14 = vector.broadcast %c32_i32_5 : i32 to vector<2x8x36xi32>
    %15 = arith.select %13, %9, %14 : vector<2x8x36xi1>, vector<2x8x36xi32>
    %cst_6 = arith.constant dense<2147483647> : vector<2x8xi32>
    %16 = vector.multi_reduction <minsi>, %15, %cst_6 [2] : vector<2x8x36xi32> to vector<2x8xi32>
    %17 = vector.shape_cast %16 : vector<2x8xi32> to vector<2x8x1xi32>
    %18 = vector.broadcast %11 : vector<2x8x1xf32> to vector<2x8x36xf32>
    %19 = arith.cmpf oeq, %8, %18 : vector<2x8x36xf32>
    %20 = vector.broadcast %17 : vector<2x8x1xi32> to vector<2x8x36xi32>
    %21 = arith.cmpi eq, %9, %20 : vector<2x8x36xi32>
    %22 = arith.andi %19, %21 : vector<2x8x36xi1>
    %cst_7 = arith.constant 0xFF800000 : f32
    %23 = vector.broadcast %cst_7 : f32 to vector<2x8x36xf32>
    %24 = arith.select %22, %23, %8 : vector<2x8x36xi1>, vector<2x8x36xf32>
    %cst_8 = arith.constant dense<0xFF800000> : vector<2x8xf32>
    %25 = vector.multi_reduction <maximumf>, %24, %cst_8 [2] : vector<2x8x36xf32> to vector<2x8xf32>
    %26 = vector.shape_cast %25 : vector<2x8xf32> to vector<2x8x1xf32>
    %27 = vector.broadcast %26 : vector<2x8x1xf32> to vector<2x8x36xf32>
    %28 = arith.cmpf oeq, %24, %27 : vector<2x8x36xf32>
    %c32_i32_9 = arith.constant 32 : i32
    %29 = vector.broadcast %c32_i32_9 : i32 to vector<2x8x36xi32>
    %30 = arith.select %28, %9, %29 : vector<2x8x36xi1>, vector<2x8x36xi32>
    %cst_10 = arith.constant dense<2147483647> : vector<2x8xi32>
    %31 = vector.multi_reduction <minsi>, %30, %cst_10 [2] : vector<2x8x36xi32> to vector<2x8xi32>
    %32 = vector.shape_cast %31 : vector<2x8xi32> to vector<2x8x1xi32>
    %33 = vector.broadcast %26 : vector<2x8x1xf32> to vector<2x8x36xf32>
    %34 = arith.cmpf oeq, %24, %33 : vector<2x8x36xf32>
    %35 = vector.broadcast %32 : vector<2x8x1xi32> to vector<2x8x36xi32>
    %36 = arith.cmpi eq, %9, %35 : vector<2x8x36xi32>
    %37 = arith.andi %34, %36 : vector<2x8x36xi1>
    %cst_11 = arith.constant 0xFF800000 : f32
    %38 = vector.broadcast %cst_11 : f32 to vector<2x8x36xf32>
    %39 = arith.select %37, %38, %24 : vector<2x8x36xi1>, vector<2x8x36xf32>
    %cst_12 = arith.constant dense<0xFF800000> : vector<2x8xf32>
    %40 = vector.multi_reduction <maximumf>, %39, %cst_12 [2] : vector<2x8x36xf32> to vector<2x8xf32>
    %41 = vector.shape_cast %40 : vector<2x8xf32> to vector<2x8x1xf32>
    %42 = vector.broadcast %41 : vector<2x8x1xf32> to vector<2x8x36xf32>
    %43 = arith.cmpf oeq, %39, %42 : vector<2x8x36xf32>
    %c32_i32_13 = arith.constant 32 : i32
    %44 = vector.broadcast %c32_i32_13 : i32 to vector<2x8x36xi32>
    %45 = arith.select %43, %9, %44 : vector<2x8x36xi1>, vector<2x8x36xi32>
    %cst_14 = arith.constant dense<2147483647> : vector<2x8xi32>
    %46 = vector.multi_reduction <minsi>, %45, %cst_14 [2] : vector<2x8x36xi32> to vector<2x8xi32>
    %47 = vector.shape_cast %46 : vector<2x8xi32> to vector<2x8x1xi32>
    %48 = vector.broadcast %41 : vector<2x8x1xf32> to vector<2x8x36xf32>
    %49 = arith.cmpf oeq, %39, %48 : vector<2x8x36xf32>
    %50 = vector.broadcast %47 : vector<2x8x1xi32> to vector<2x8x36xi32>
    %51 = arith.cmpi eq, %9, %50 : vector<2x8x36xi32>
    %52 = arith.andi %49, %51 : vector<2x8x36xi1>
    %cst_15 = arith.constant 0xFF800000 : f32
    %53 = vector.broadcast %cst_15 : f32 to vector<2x8x36xf32>
    %54 = arith.select %52, %53, %39 : vector<2x8x36xi1>, vector<2x8x36xf32>
    %cst_16 = arith.constant dense<0xFF800000> : vector<2x8xf32>
    %55 = vector.multi_reduction <maximumf>, %54, %cst_16 [2] : vector<2x8x36xf32> to vector<2x8xf32>
    %56 = vector.shape_cast %55 : vector<2x8xf32> to vector<2x8x1xf32>
    %57 = vector.broadcast %56 : vector<2x8x1xf32> to vector<2x8x36xf32>
    %58 = arith.cmpf oeq, %54, %57 : vector<2x8x36xf32>
    %c32_i32_17 = arith.constant 32 : i32
    %59 = vector.broadcast %c32_i32_17 : i32 to vector<2x8x36xi32>
    %60 = arith.select %58, %9, %59 : vector<2x8x36xi1>, vector<2x8x36xi32>
    %cst_18 = arith.constant dense<2147483647> : vector<2x8xi32>
    %61 = vector.multi_reduction <minsi>, %60, %cst_18 [2] : vector<2x8x36xi32> to vector<2x8xi32>
    %62 = vector.shape_cast %61 : vector<2x8xi32> to vector<2x8x1xi32>
    %63 = tpu.concatenate %11, %26, %41, %56 in 2 : vector<2x8x1xf32>, vector<2x8x1xf32>, vector<2x8x1xf32>, vector<2x8x1xf32> -> vector<2x8x4xf32>
    %64 = tpu.concatenate %17, %32, %47, %62 in 2 : vector<2x8x1xi32>, vector<2x8x1xi32>, vector<2x8x1xi32>, vector<2x8x1xi32> -> vector<2x8x4xi32>
    %65 = vector.extract_strided_slice %63 {offsets = [0, 0, 0], sizes = [2, 8, 1], strides = [1, 1, 1]} : vector<2x8x4xf32> to vector<2x8x1xf32>
    %66 = arith.subf %2, %65 : vector<2x8x1xf32>
    %67 = math.exp %66 : vector<2x8x1xf32>
    %68 = arith.mulf %3, %67 : vector<2x8x1xf32>
    %69 = vector.broadcast %65 : vector<2x8x1xf32> to vector<2x8x32xf32>
    %70 = arith.subf %4, %69 : vector<2x8x32xf32>
    %71 = math.exp %70 : vector<2x8x32xf32>
    %cst_19 = arith.constant dense<0.000000e+00> : vector<2x8xf32>
    %72 = vector.multi_reduction <add>, %71, %cst_19 [2] : vector<2x8x32xf32> to vector<2x8xf32>
    %73 = vector.shape_cast %72 : vector<2x8xf32> to vector<2x8x1xf32>
    %74 = arith.addf %68, %73 : vector<2x8x1xf32>
    %75 = math.log %74 : vector<2x8x1xf32>
    %76 = arith.addf %65, %75 : vector<2x8x1xf32>
    %77 = vector.broadcast %76 : vector<2x8x1xf32> to vector<2x8x4xf32>
    %78 = arith.subf %63, %77 : vector<2x8x4xf32>
    %79 = tpu.iota {dimensions = array<i32: 1>} : vector<2x4xi32>
    %80 = tpu.iota {dimensions = array<i32: 1>} : vector<2x16xi32>
    %c0_i32_20 = arith.constant 0 : i32
    %81 = arith.cmpi eq, %arg1, %c0_i32_20 : i32
    %82 = arith.extui %81 : i1 to i32
    %c0_i32_21 = arith.constant 0 : i32
    %83 = arith.cmpi ne, %82, %c0_i32_21 : i32
    scf.if %83 {
      %c0_46 = arith.constant 0 : index
      %c0_47 = arith.constant 0 : index
      %c0_48 = arith.constant 0 : index
      %125 = vector.load %arg3[%c0_46, %c0_47, %c0_48] : memref<2x8x1xi32, #tpu.memory_space<vmem>>, vector<2x1x1xi32>
      %126 = vector.shape_cast %125 : vector<2x1x1xi32> to vector<2x1xi32>
      %c1_i32_49 = arith.constant 1 : i32
      %127 = vector.broadcast %c1_i32_49 : i32 to vector<2x1xi32>
      %128 = arith.cmpi eq, %126, %127 : vector<2x1xi32>
      %129 = vector.extract_strided_slice %78 {offsets = [0, 0, 0], sizes = [2, 1, 4], strides = [1, 1, 1]} : vector<2x8x4xf32> to vector<2x1x4xf32>
      %130 = vector.shape_cast %129 : vector<2x1x4xf32> to vector<2x4xf32>
      %131 = vector.extract_strided_slice %64 {offsets = [0, 0, 0], sizes = [2, 1, 4], strides = [1, 1, 1]} : vector<2x8x4xi32> to vector<2x1x4xi32>
      %132 = vector.shape_cast %131 : vector<2x1x4xi32> to vector<2x4xi32>
      %c0_i32_50 = arith.constant 0 : i32
      %133 = vector.broadcast %c0_i32_50 : i32 to vector<2x4xi32>
      %134 = arith.cmpi eq, %79, %133 : vector<2x4xi32>
      %135 = vector.broadcast %128 : vector<2x1xi1> to vector<2x4xi1>
      %136 = arith.andi %135, %134 : vector<2x4xi1>
      %cst_51 = arith.constant 0.000000e+00 : f32
      %137 = vector.broadcast %cst_51 : f32 to vector<2x4xf32>
      %138 = arith.select %136, %137, %130 : vector<2x4xi1>, vector<2x4xf32>
      %c0_i32_52 = arith.constant 0 : i32
      %139 = vector.broadcast %c0_i32_52 : i32 to vector<2x4xi32>
      %140 = arith.cmpi sgt, %79, %139 : vector<2x4xi32>
      %141 = vector.broadcast %128 : vector<2x1xi1> to vector<2x4xi1>
      %142 = arith.andi %141, %140 : vector<2x4xi1>
      %cst_53 = arith.constant 0xFF800000 : f32
      %143 = vector.broadcast %cst_53 : f32 to vector<2x4xf32>
      %144 = arith.select %142, %143, %138 : vector<2x4xi1>, vector<2x4xf32>
      %c0_54 = arith.constant 0 : index
      %c0_55 = arith.constant 0 : index
      %145 = vector.load %arg6[%c0_54, %c0_55] : memref<2x4xf32, #tpu.memory_space<vmem>>, vector<2x4xf32>
      tpu.vector_store %arg6[%c0_54, %c0_55], %144 {strides = array<i32>} : memref<2x4xf32, #tpu.memory_space<vmem>>, vector<2x4xf32>,
      %c0_i32_56 = arith.constant 0 : i32
      %146 = vector.broadcast %c0_i32_56 : i32 to vector<2x1xi32>
      %147 = arith.cmpi eq, %126, %146 : vector<2x1xi32>
      %cst_57 = arith.constant 0.000000e+00 : f32
      %148 = vector.shape_cast %147 : vector<2x1xi1> to vector<2x1xi1>
      %149 = vector.broadcast %148 : vector<2x1xi1> to vector<2x4xi1>
      %150 = vector.broadcast %cst_57 : f32 to vector<2x4xf32>
      %151 = arith.select %149, %130, %150 : vector<2x4xi1>, vector<2x4xf32>
      %c0_58 = arith.constant 0 : index
      %c0_59 = arith.constant 0 : index
      %152 = vector.load %arg8[%c0_58, %c0_59] : memref<2x4xf32, #tpu.memory_space<vmem>>, vector<2x4xf32>
      tpu.vector_store %arg8[%c0_58, %c0_59], %151 {strides = array<i32>} : memref<2x4xf32, #tpu.memory_space<vmem>>, vector<2x4xf32>,
      %c0_60 = arith.constant 0 : index
      %c0_61 = arith.constant 0 : index
      %c0_62 = arith.constant 0 : index
      %153 = vector.load %arg4[%c0_60, %c0_61, %c0_62] : memref<2x8x1xi32, #tpu.memory_space<vmem>>, vector<2x1x1xi32>
      %154 = vector.shape_cast %153 : vector<2x1x1xi32> to vector<2x1xi32>
      %155 = vector.broadcast %154 : vector<2x1xi32> to vector<2x4xi32>
      %156 = arith.cmpi ne, %132, %155 : vector<2x4xi32>
      %157 = vector.broadcast %147 : vector<2x1xi1> to vector<2x4xi1>
      %158 = arith.andi %157, %156 : vector<2x4xi1>
      %cst_63 = arith.constant 1.000000e+00 : f32
      %cst_64 = arith.constant 0.000000e+00 : f32
      %159 = vector.broadcast %cst_63 : f32 to vector<2x4xf32>
      %160 = vector.broadcast %cst_64 : f32 to vector<2x4xf32>
      %161 = arith.select %158, %159, %160 : vector<2x4xi1>, vector<2x4xf32>
      %c0_65 = arith.constant 0 : index
      %c0_66 = arith.constant 0 : index
      %162 = vector.load %arg9[%c0_65, %c0_66] : memref<2x4xf32, #tpu.memory_space<vmem>>, vector<2x4xf32>
      tpu.vector_store %arg9[%c0_65, %c0_66], %161 {strides = array<i32>} : memref<2x4xf32, #tpu.memory_space<vmem>>, vector<2x4xf32>,
      %c0_67 = arith.constant 0 : index
      %c0_68 = arith.constant 0 : index
      %163 = vector.load %arg7[%c0_67, %c0_68] : memref<2x1xi32, #tpu.memory_space<vmem>>, vector<2x1xi32>
      tpu.vector_store %arg7[%c0_67, %c0_68], %126 {strides = array<i32>} : memref<2x1xi32, #tpu.memory_space<vmem>>, vector<2x1xi32>,
    } else {
    }
    %c0_i32_22 = arith.constant 0 : i32
    %84 = arith.cmpi ne, %arg1, %c0_i32_22 : i32
    %85 = arith.extui %84 : i1 to i32
    %c0_i32_23 = arith.constant 0 : i32
    %86 = arith.cmpi ne, %85, %c0_i32_23 : i32
    scf.if %86 {
      %c0_46 = arith.constant 0 : index
      %c0_47 = arith.constant 0 : index
      %c0_48 = arith.constant 0 : index
      %125 = vector.load %arg3[%c0_46, %c0_47, %c0_48] : memref<2x8x1xi32, #tpu.memory_space<vmem>>, vector<2x1x1xi32>
      %126 = vector.shape_cast %125 : vector<2x1x1xi32> to vector<2x1xi32>
      %c0_49 = arith.constant 0 : index
      %c0_50 = arith.constant 0 : index
      %127 = vector.load %arg7[%c0_49, %c0_50] : memref<2x1xi32, #tpu.memory_space<vmem>>, vector<2x1xi32>
      %c1_i32_51 = arith.constant 1 : i32
      %128 = vector.broadcast %c1_i32_51 : i32 to vector<2x1xi32>
      %129 = arith.cmpi eq, %127, %128 : vector<2x1xi32>
      %c0_52 = arith.constant 0 : index
      %c0_53 = arith.constant 0 : index
      %130 = vector.load %arg6[%c0_52, %c0_53] : memref<2x4xf32, #tpu.memory_space<vmem>>, vector<2x4xf32>
      %131 = vector.extract_strided_slice %78 {offsets = [0, 0, 0], sizes = [2, 1, 4], strides = [1, 1, 1]} : vector<2x8x4xf32> to vector<2x1x4xf32>
      %132 = vector.shape_cast %131 : vector<2x1x4xf32> to vector<2x4xf32>
      %133 = vector.extract_strided_slice %64 {offsets = [0, 0, 0], sizes = [2, 1, 4], strides = [1, 1, 1]} : vector<2x8x4xi32> to vector<2x1x4xi32>
      %134 = vector.shape_cast %133 : vector<2x1x4xi32> to vector<2x4xi32>
      %135 = vector.extract_strided_slice %130 {offsets = [0, 0], sizes = [2, 1], strides = [1, 1]} : vector<2x4xf32> to vector<2x1xf32>
      %136 = vector.broadcast %135 : vector<2x1xf32> to vector<2x4xf32>
      %137 = arith.addf %136, %132 : vector<2x4xf32>
      %138 = vector.extract_strided_slice %130 {offsets = [0, 1], sizes = [2, 1], strides = [1, 1]} : vector<2x4xf32> to vector<2x1xf32>
      %139 = vector.broadcast %138 : vector<2x1xf32> to vector<2x4xf32>
      %140 = arith.addf %139, %132 : vector<2x4xf32>
      %141 = vector.extract_strided_slice %130 {offsets = [0, 2], sizes = [2, 1], strides = [1, 1]} : vector<2x4xf32> to vector<2x1xf32>
      %142 = vector.broadcast %141 : vector<2x1xf32> to vector<2x4xf32>
      %143 = arith.addf %142, %132 : vector<2x4xf32>
      %144 = vector.extract_strided_slice %130 {offsets = [0, 3], sizes = [2, 1], strides = [1, 1]} : vector<2x4xf32> to vector<2x1xf32>
      %145 = vector.broadcast %144 : vector<2x1xf32> to vector<2x4xf32>
      %146 = arith.addf %145, %132 : vector<2x4xf32>
      %147 = tpu.concatenate %137, %140, %143, %146 in 1 : vector<2x4xf32>, vector<2x4xf32>, vector<2x4xf32>, vector<2x4xf32> -> vector<2x16xf32>
      %148 = tpu.concatenate %134, %134, %134, %134 in 1 : vector<2x4xi32>, vector<2x4xi32>, vector<2x4xi32>, vector<2x4xi32> -> vector<2x16xi32>
      %149 = tpu.concatenate %132, %132, %132, %132 in 1 : vector<2x4xf32>, vector<2x4xf32>, vector<2x4xf32>, vector<2x4xf32> -> vector<2x16xf32>
      %cst_54 = arith.constant dense<0xFF800000> : vector<2xf32>
      %150 = vector.multi_reduction <maximumf>, %147, %cst_54 [1] : vector<2x16xf32> to vector<2xf32>
      %151 = vector.shape_cast %150 : vector<2xf32> to vector<2x1xf32>
      %152 = vector.broadcast %151 : vector<2x1xf32> to vector<2x16xf32>
      %153 = arith.cmpf oeq, %147, %152 : vector<2x16xf32>
      %c16_i32 = arith.constant 16 : i32
      %154 = vector.broadcast %c16_i32 : i32 to vector<2x16xi32>
      %155 = arith.select %153, %80, %154 : vector<2x16xi1>, vector<2x16xi32>
      %cst_55 = arith.constant dense<2147483647> : vector<2xi32>
      %156 = vector.multi_reduction <minsi>, %155, %cst_55 [1] : vector<2x16xi32> to vector<2xi32>
      %157 = vector.shape_cast %156 : vector<2xi32> to vector<2x1xi32>
      %158 = vector.broadcast %157 : vector<2x1xi32> to vector<2x16xi32>
      %159 = arith.cmpi eq, %80, %158 : vector<2x16xi32>
      %c32_i32_56 = arith.constant 32 : i32
      %160 = vector.broadcast %c32_i32_56 : i32 to vector<2x16xi32>
      %161 = arith.select %159, %148, %160 : vector<2x16xi1>, vector<2x16xi32>
      %cst_57 = arith.constant dense<2147483647> : vector<2xi32>
      %162 = vector.multi_reduction <minsi>, %161, %cst_57 [1] : vector<2x16xi32> to vector<2xi32>
      %163 = vector.shape_cast %162 : vector<2xi32> to vector<2x1xi32>
      %cst_58 = arith.constant 0.000000e+00 : f32
      %164 = vector.broadcast %cst_58 : f32 to vector<2x16xf32>
      %165 = arith.select %159, %149, %164 : vector<2x16xi1>, vector<2x16xf32>
      %cst_59 = arith.constant dense<0.000000e+00> : vector<2xf32>
      %166 = vector.multi_reduction <add>, %165, %cst_59 [1] : vector<2x16xf32> to vector<2xf32>
      %167 = vector.shape_cast %166 : vector<2xf32> to vector<2x1xf32>
      %cst_60 = arith.constant 0xFF800000 : f32
      %168 = vector.broadcast %cst_60 : f32 to vector<2x16xf32>
      %169 = arith.select %159, %168, %147 : vector<2x16xi1>, vector<2x16xf32>
      %cst_61 = arith.constant dense<0xFF800000> : vector<2xf32>
      %170 = vector.multi_reduction <maximumf>, %169, %cst_61 [1] : vector<2x16xf32> to vector<2xf32>
      %171 = vector.shape_cast %170 : vector<2xf32> to vector<2x1xf32>
      %172 = vector.broadcast %171 : vector<2x1xf32> to vector<2x16xf32>
      %173 = arith.cmpf oeq, %169, %172 : vector<2x16xf32>
      %c16_i32_62 = arith.constant 16 : i32
      %174 = vector.broadcast %c16_i32_62 : i32 to vector<2x16xi32>
      %175 = arith.select %173, %80, %174 : vector<2x16xi1>, vector<2x16xi32>
      %cst_63 = arith.constant dense<2147483647> : vector<2xi32>
      %176 = vector.multi_reduction <minsi>, %175, %cst_63 [1] : vector<2x16xi32> to vector<2xi32>
      %177 = vector.shape_cast %176 : vector<2xi32> to vector<2x1xi32>
      %178 = vector.broadcast %177 : vector<2x1xi32> to vector<2x16xi32>
      %179 = arith.cmpi eq, %80, %178 : vector<2x16xi32>
      %c32_i32_64 = arith.constant 32 : i32
      %180 = vector.broadcast %c32_i32_64 : i32 to vector<2x16xi32>
      %181 = arith.select %179, %148, %180 : vector<2x16xi1>, vector<2x16xi32>
      %cst_65 = arith.constant dense<2147483647> : vector<2xi32>
      %182 = vector.multi_reduction <minsi>, %181, %cst_65 [1] : vector<2x16xi32> to vector<2xi32>
      %183 = vector.shape_cast %182 : vector<2xi32> to vector<2x1xi32>
      %cst_66 = arith.constant 0.000000e+00 : f32
      %184 = vector.broadcast %cst_66 : f32 to vector<2x16xf32>
      %185 = arith.select %179, %149, %184 : vector<2x16xi1>, vector<2x16xf32>
      %cst_67 = arith.constant dense<0.000000e+00> : vector<2xf32>
      %186 = vector.multi_reduction <add>, %185, %cst_67 [1] : vector<2x16xf32> to vector<2xf32>
      %187 = vector.shape_cast %186 : vector<2xf32> to vector<2x1xf32>
      %cst_68 = arith.constant 0xFF800000 : f32
      %188 = vector.broadcast %cst_68 : f32 to vector<2x16xf32>
      %189 = arith.select %179, %188, %169 : vector<2x16xi1>, vector<2x16xf32>
      %cst_69 = arith.constant dense<0xFF800000> : vector<2xf32>
      %190 = vector.multi_reduction <maximumf>, %189, %cst_69 [1] : vector<2x16xf32> to vector<2xf32>
      %191 = vector.shape_cast %190 : vector<2xf32> to vector<2x1xf32>
      %192 = vector.broadcast %191 : vector<2x1xf32> to vector<2x16xf32>
      %193 = arith.cmpf oeq, %189, %192 : vector<2x16xf32>
      %c16_i32_70 = arith.constant 16 : i32
      %194 = vector.broadcast %c16_i32_70 : i32 to vector<2x16xi32>
      %195 = arith.select %193, %80, %194 : vector<2x16xi1>, vector<2x16xi32>
      %cst_71 = arith.constant dense<2147483647> : vector<2xi32>
      %196 = vector.multi_reduction <minsi>, %195, %cst_71 [1] : vector<2x16xi32> to vector<2xi32>
      %197 = vector.shape_cast %196 : vector<2xi32> to vector<2x1xi32>
      %198 = vector.broadcast %197 : vector<2x1xi32> to vector<2x16xi32>
      %199 = arith.cmpi eq, %80, %198 : vector<2x16xi32>
      %c32_i32_72 = arith.constant 32 : i32
      %200 = vector.broadcast %c32_i32_72 : i32 to vector<2x16xi32>
      %201 = arith.select %199, %148, %200 : vector<2x16xi1>, vector<2x16xi32>
      %cst_73 = arith.constant dense<2147483647> : vector<2xi32>
      %202 = vector.multi_reduction <minsi>, %201, %cst_73 [1] : vector<2x16xi32> to vector<2xi32>
      %203 = vector.shape_cast %202 : vector<2xi32> to vector<2x1xi32>
      %cst_74 = arith.constant 0.000000e+00 : f32
      %204 = vector.broadcast %cst_74 : f32 to vector<2x16xf32>
      %205 = arith.select %199, %149, %204 : vector<2x16xi1>, vector<2x16xf32>
      %cst_75 = arith.constant dense<0.000000e+00> : vector<2xf32>
      %206 = vector.multi_reduction <add>, %205, %cst_75 [1] : vector<2x16xf32> to vector<2xf32>
      %207 = vector.shape_cast %206 : vector<2xf32> to vector<2x1xf32>
      %cst_76 = arith.constant 0xFF800000 : f32
      %208 = vector.broadcast %cst_76 : f32 to vector<2x16xf32>
      %209 = arith.select %199, %208, %189 : vector<2x16xi1>, vector<2x16xf32>
      %cst_77 = arith.constant dense<0xFF800000> : vector<2xf32>
      %210 = vector.multi_reduction <maximumf>, %209, %cst_77 [1] : vector<2x16xf32> to vector<2xf32>
      %211 = vector.shape_cast %210 : vector<2xf32> to vector<2x1xf32>
      %212 = vector.broadcast %211 : vector<2x1xf32> to vector<2x16xf32>
      %213 = arith.cmpf oeq, %209, %212 : vector<2x16xf32>
      %c16_i32_78 = arith.constant 16 : i32
      %214 = vector.broadcast %c16_i32_78 : i32 to vector<2x16xi32>
      %215 = arith.select %213, %80, %214 : vector<2x16xi1>, vector<2x16xi32>
      %cst_79 = arith.constant dense<2147483647> : vector<2xi32>
      %216 = vector.multi_reduction <minsi>, %215, %cst_79 [1] : vector<2x16xi32> to vector<2xi32>
      %217 = vector.shape_cast %216 : vector<2xi32> to vector<2x1xi32>
      %218 = vector.broadcast %217 : vector<2x1xi32> to vector<2x16xi32>
      %219 = arith.cmpi eq, %80, %218 : vector<2x16xi32>
      %c32_i32_80 = arith.constant 32 : i32
      %220 = vector.broadcast %c32_i32_80 : i32 to vector<2x16xi32>
      %221 = arith.select %219, %148, %220 : vector<2x16xi1>, vector<2x16xi32>
      %cst_81 = arith.constant dense<2147483647> : vector<2xi32>
      %222 = vector.multi_reduction <minsi>, %221, %cst_81 [1] : vector<2x16xi32> to vector<2xi32>
      %223 = vector.shape_cast %222 : vector<2xi32> to vector<2x1xi32>
      %cst_82 = arith.constant 0.000000e+00 : f32
      %224 = vector.broadcast %cst_82 : f32 to vector<2x16xf32>
      %225 = arith.select %219, %149, %224 : vector<2x16xi1>, vector<2x16xf32>
      %cst_83 = arith.constant dense<0.000000e+00> : vector<2xf32>
      %226 = vector.multi_reduction <add>, %225, %cst_83 [1] : vector<2x16xf32> to vector<2xf32>
      %227 = vector.shape_cast %226 : vector<2xf32> to vector<2x1xf32>
      %228 = tpu.concatenate %151, %171, %191, %211 in 1 : vector<2x1xf32>, vector<2x1xf32>, vector<2x1xf32>, vector<2x1xf32> -> vector<2x4xf32>
      %229 = tpu.concatenate %163, %183, %203, %223 in 1 : vector<2x1xi32>, vector<2x1xi32>, vector<2x1xi32>, vector<2x1xi32> -> vector<2x4xi32>
      %230 = tpu.concatenate %167, %187, %207, %227 in 1 : vector<2x1xf32>, vector<2x1xf32>, vector<2x1xf32>, vector<2x1xf32> -> vector<2x4xf32>
      %231 = vector.shape_cast %129 : vector<2x1xi1> to vector<2x1xi1>
      %232 = vector.broadcast %231 : vector<2x1xi1> to vector<2x4xi1>
      %233 = arith.select %232, %130, %228 : vector<2x4xi1>, vector<2x4xf32>
      %c0_84 = arith.constant 0 : index
      %c0_85 = arith.constant 0 : index
      %234 = vector.load %arg6[%c0_84, %c0_85] : memref<2x4xf32, #tpu.memory_space<vmem>>, vector<2x4xf32>
      tpu.vector_store %arg6[%c0_84, %c0_85], %233 {strides = array<i32>} : memref<2x4xf32, #tpu.memory_space<vmem>>, vector<2x4xf32>,
      %c0_i32_86 = arith.constant 0 : i32
      %235 = vector.broadcast %c0_i32_86 : i32 to vector<2x1xi32>
      %236 = arith.cmpi eq, %126, %235 : vector<2x1xi32>
      %c0_87 = arith.constant 0 : index
      %c0_88 = arith.constant 0 : index
      %237 = vector.load %arg8[%c0_87, %c0_88] : memref<2x4xf32, #tpu.memory_space<vmem>>, vector<2x4xf32>
      %cst_89 = arith.constant 0.000000e+00 : f32
      %238 = vector.shape_cast %236 : vector<2x1xi1> to vector<2x1xi1>
      %239 = vector.broadcast %238 : vector<2x1xi1> to vector<2x4xi1>
      %240 = vector.broadcast %cst_89 : f32 to vector<2x4xf32>
      %241 = arith.select %239, %230, %240 : vector<2x4xi1>, vector<2x4xf32>
      %242 = arith.addf %237, %241 : vector<2x4xf32>
      %c0_90 = arith.constant 0 : index
      %c0_91 = arith.constant 0 : index
      %243 = vector.load %arg8[%c0_90, %c0_91] : memref<2x4xf32, #tpu.memory_space<vmem>>, vector<2x4xf32>
      tpu.vector_store %arg8[%c0_90, %c0_91], %242 {strides = array<i32>} : memref<2x4xf32, #tpu.memory_space<vmem>>, vector<2x4xf32>,
      %c0_92 = arith.constant 0 : index
      %c0_93 = arith.constant 0 : index
      %244 = vector.load %arg9[%c0_92, %c0_93] : memref<2x4xf32, #tpu.memory_space<vmem>>, vector<2x4xf32>
      %c0_94 = arith.constant 0 : index
      %c0_95 = arith.constant 0 : index
      %c0_96 = arith.constant 0 : index
      %245 = vector.load %arg4[%c0_94, %c0_95, %c0_96] : memref<2x8x1xi32, #tpu.memory_space<vmem>>, vector<2x1x1xi32>
      %246 = vector.shape_cast %245 : vector<2x1x1xi32> to vector<2x1xi32>
      %247 = vector.broadcast %246 : vector<2x1xi32> to vector<2x4xi32>
      %248 = arith.cmpi ne, %229, %247 : vector<2x4xi32>
      %249 = vector.broadcast %236 : vector<2x1xi1> to vector<2x4xi1>
      %250 = arith.andi %249, %248 : vector<2x4xi1>
      %cst_97 = arith.constant 1.000000e+00 : f32
      %cst_98 = arith.constant 0.000000e+00 : f32
      %251 = vector.broadcast %cst_97 : f32 to vector<2x4xf32>
      %252 = vector.broadcast %cst_98 : f32 to vector<2x4xf32>
      %253 = arith.select %250, %251, %252 : vector<2x4xi1>, vector<2x4xf32>
      %254 = arith.addf %244, %253 : vector<2x4xf32>
      %c0_99 = arith.constant 0 : index
      %c0_100 = arith.constant 0 : index
      %255 = vector.load %arg9[%c0_99, %c0_100] : memref<2x4xf32, #tpu.memory_space<vmem>>, vector<2x4xf32>
      tpu.vector_store %arg9[%c0_99, %c0_100], %254 {strides = array<i32>} : memref<2x4xf32, #tpu.memory_space<vmem>>, vector<2x4xf32>,
      %c0_101 = arith.constant 0 : index
      %c0_102 = arith.constant 0 : index
      %256 = vector.load %arg7[%c0_101, %c0_102] : memref<2x1xi32, #tpu.memory_space<vmem>>, vector<2x1xi32>
      tpu.vector_store %arg7[%c0_101, %c0_102], %126 {strides = array<i32>} : memref<2x1xi32, #tpu.memory_space<vmem>>, vector<2x1xi32>,
    } else {
    }
    %c8_i32 = arith.constant 8 : i32
    %87 = arith.muli %arg1, %c8_i32 : i32
    %c1_i32 = arith.constant 1 : i32
    %88 = arith.addi %87, %c1_i32 : i32
    %c8_i32_24 = arith.constant 8 : i32
    %89 = arith.cmpi slt, %88, %c8_i32_24 : i32
    %90 = arith.extui %89 : i1 to i32
    %c0_i32_25 = arith.constant 0 : i32
    %91 = arith.cmpi ne, %90, %c0_i32_25 : i32
    scf.if %91 {
      %c0_46 = arith.constant 0 : index
      %c1 = arith.constant 1 : index
      %c0_47 = arith.constant 0 : index
      %125 = vector.load %arg3[%c0_46, %c1, %c0_47] : memref<2x8x1xi32, #tpu.memory_space<vmem>>, vector<2x1x1xi32>
      %126 = vector.shape_cast %125 : vector<2x1x1xi32> to vector<2x1xi32>
      %c0_48 = arith.constant 0 : index
      %c0_49 = arith.constant 0 : index
      %127 = vector.load %arg7[%c0_48, %c0_49] : memref<2x1xi32, #tpu.memory_space<vmem>>, vector<2x1xi32>
      %c1_i32_50 = arith.constant 1 : i32
      %128 = vector.broadcast %c1_i32_50 : i32 to vector<2x1xi32>
      %129 = arith.cmpi eq, %127, %128 : vector<2x1xi32>
      %c0_51 = arith.constant 0 : index
      %c0_52 = arith.constant 0 : index
      %130 = vector.load %arg6[%c0_51, %c0_52] : memref<2x4xf32, #tpu.memory_space<vmem>>, vector<2x4xf32>
      %131 = vector.extract_strided_slice %78 {offsets = [0, 1, 0], sizes = [2, 1, 4], strides = [1, 1, 1]} : vector<2x8x4xf32> to vector<2x1x4xf32>
      %132 = vector.shape_cast %131 : vector<2x1x4xf32> to vector<2x4xf32>
      %133 = vector.extract_strided_slice %64 {offsets = [0, 1, 0], sizes = [2, 1, 4], strides = [1, 1, 1]} : vector<2x8x4xi32> to vector<2x1x4xi32>
      %134 = vector.shape_cast %133 : vector<2x1x4xi32> to vector<2x4xi32>
      %135 = vector.extract_strided_slice %130 {offsets = [0, 0], sizes = [2, 1], strides = [1, 1]} : vector<2x4xf32> to vector<2x1xf32>
      %136 = vector.broadcast %135 : vector<2x1xf32> to vector<2x4xf32>
      %137 = arith.addf %136, %132 : vector<2x4xf32>
      %138 = vector.extract_strided_slice %130 {offsets = [0, 1], sizes = [2, 1], strides = [1, 1]} : vector<2x4xf32> to vector<2x1xf32>
      %139 = vector.broadcast %138 : vector<2x1xf32> to vector<2x4xf32>
      %140 = arith.addf %139, %132 : vector<2x4xf32>
      %141 = vector.extract_strided_slice %130 {offsets = [0, 2], sizes = [2, 1], strides = [1, 1]} : vector<2x4xf32> to vector<2x1xf32>
      %142 = vector.broadcast %141 : vector<2x1xf32> to vector<2x4xf32>
      %143 = arith.addf %142, %132 : vector<2x4xf32>
      %144 = vector.extract_strided_slice %130 {offsets = [0, 3], sizes = [2, 1], strides = [1, 1]} : vector<2x4xf32> to vector<2x1xf32>
      %145 = vector.broadcast %144 : vector<2x1xf32> to vector<2x4xf32>
      %146 = arith.addf %145, %132 : vector<2x4xf32>
      %147 = tpu.concatenate %137, %140, %143, %146 in 1 : vector<2x4xf32>, vector<2x4xf32>, vector<2x4xf32>, vector<2x4xf32> -> vector<2x16xf32>
      %148 = tpu.concatenate %134, %134, %134, %134 in 1 : vector<2x4xi32>, vector<2x4xi32>, vector<2x4xi32>, vector<2x4xi32> -> vector<2x16xi32>
      %149 = tpu.concatenate %132, %132, %132, %132 in 1 : vector<2x4xf32>, vector<2x4xf32>, vector<2x4xf32>, vector<2x4xf32> -> vector<2x16xf32>
      %cst_53 = arith.constant dense<0xFF800000> : vector<2xf32>
      %150 = vector.multi_reduction <maximumf>, %147, %cst_53 [1] : vector<2x16xf32> to vector<2xf32>
      %151 = vector.shape_cast %150 : vector<2xf32> to vector<2x1xf32>
      %152 = vector.broadcast %151 : vector<2x1xf32> to vector<2x16xf32>
      %153 = arith.cmpf oeq, %147, %152 : vector<2x16xf32>
      %c16_i32 = arith.constant 16 : i32
      %154 = vector.broadcast %c16_i32 : i32 to vector<2x16xi32>
      %155 = arith.select %153, %80, %154 : vector<2x16xi1>, vector<2x16xi32>
      %cst_54 = arith.constant dense<2147483647> : vector<2xi32>
      %156 = vector.multi_reduction <minsi>, %155, %cst_54 [1] : vector<2x16xi32> to vector<2xi32>
      %157 = vector.shape_cast %156 : vector<2xi32> to vector<2x1xi32>
      %158 = vector.broadcast %157 : vector<2x1xi32> to vector<2x16xi32>
      %159 = arith.cmpi eq, %80, %158 : vector<2x16xi32>
      %c32_i32_55 = arith.constant 32 : i32
      %160 = vector.broadcast %c32_i32_55 : i32 to vector<2x16xi32>
      %161 = arith.select %159, %148, %160 : vector<2x16xi1>, vector<2x16xi32>
      %cst_56 = arith.constant dense<2147483647> : vector<2xi32>
      %162 = vector.multi_reduction <minsi>, %161, %cst_56 [1] : vector<2x16xi32> to vector<2xi32>
      %163 = vector.shape_cast %162 : vector<2xi32> to vector<2x1xi32>
      %cst_57 = arith.constant 0.000000e+00 : f32
      %164 = vector.broadcast %cst_57 : f32 to vector<2x16xf32>
      %165 = arith.select %159, %149, %164 : vector<2x16xi1>, vector<2x16xf32>
      %cst_58 = arith.constant dense<0.000000e+00> : vector<2xf32>
      %166 = vector.multi_reduction <add>, %165, %cst_58 [1] : vector<2x16xf32> to vector<2xf32>
      %167 = vector.shape_cast %166 : vector<2xf32> to vector<2x1xf32>
      %cst_59 = arith.constant 0xFF800000 : f32
      %168 = vector.broadcast %cst_59 : f32 to vector<2x16xf32>
      %169 = arith.select %159, %168, %147 : vector<2x16xi1>, vector<2x16xf32>
      %cst_60 = arith.constant dense<0xFF800000> : vector<2xf32>
      %170 = vector.multi_reduction <maximumf>, %169, %cst_60 [1] : vector<2x16xf32> to vector<2xf32>
      %171 = vector.shape_cast %170 : vector<2xf32> to vector<2x1xf32>
      %172 = vector.broadcast %171 : vector<2x1xf32> to vector<2x16xf32>
      %173 = arith.cmpf oeq, %169, %172 : vector<2x16xf32>
      %c16_i32_61 = arith.constant 16 : i32
      %174 = vector.broadcast %c16_i32_61 : i32 to vector<2x16xi32>
      %175 = arith.select %173, %80, %174 : vector<2x16xi1>, vector<2x16xi32>
      %cst_62 = arith.constant dense<2147483647> : vector<2xi32>
      %176 = vector.multi_reduction <minsi>, %175, %cst_62 [1] : vector<2x16xi32> to vector<2xi32>
      %177 = vector.shape_cast %176 : vector<2xi32> to vector<2x1xi32>
      %178 = vector.broadcast %177 : vector<2x1xi32> to vector<2x16xi32>
      %179 = arith.cmpi eq, %80, %178 : vector<2x16xi32>
      %c32_i32_63 = arith.constant 32 : i32
      %180 = vector.broadcast %c32_i32_63 : i32 to vector<2x16xi32>
      %181 = arith.select %179, %148, %180 : vector<2x16xi1>, vector<2x16xi32>
      %cst_64 = arith.constant dense<2147483647> : vector<2xi32>
      %182 = vector.multi_reduction <minsi>, %181, %cst_64 [1] : vector<2x16xi32> to vector<2xi32>
      %183 = vector.shape_cast %182 : vector<2xi32> to vector<2x1xi32>
      %cst_65 = arith.constant 0.000000e+00 : f32
      %184 = vector.broadcast %cst_65 : f32 to vector<2x16xf32>
      %185 = arith.select %179, %149, %184 : vector<2x16xi1>, vector<2x16xf32>
      %cst_66 = arith.constant dense<0.000000e+00> : vector<2xf32>
      %186 = vector.multi_reduction <add>, %185, %cst_66 [1] : vector<2x16xf32> to vector<2xf32>
      %187 = vector.shape_cast %186 : vector<2xf32> to vector<2x1xf32>
      %cst_67 = arith.constant 0xFF800000 : f32
      %188 = vector.broadcast %cst_67 : f32 to vector<2x16xf32>
      %189 = arith.select %179, %188, %169 : vector<2x16xi1>, vector<2x16xf32>
      %cst_68 = arith.constant dense<0xFF800000> : vector<2xf32>
      %190 = vector.multi_reduction <maximumf>, %189, %cst_68 [1] : vector<2x16xf32> to vector<2xf32>
      %191 = vector.shape_cast %190 : vector<2xf32> to vector<2x1xf32>
      %192 = vector.broadcast %191 : vector<2x1xf32> to vector<2x16xf32>
      %193 = arith.cmpf oeq, %189, %192 : vector<2x16xf32>
      %c16_i32_69 = arith.constant 16 : i32
      %194 = vector.broadcast %c16_i32_69 : i32 to vector<2x16xi32>
      %195 = arith.select %193, %80, %194 : vector<2x16xi1>, vector<2x16xi32>
      %cst_70 = arith.constant dense<2147483647> : vector<2xi32>
      %196 = vector.multi_reduction <minsi>, %195, %cst_70 [1] : vector<2x16xi32> to vector<2xi32>
      %197 = vector.shape_cast %196 : vector<2xi32> to vector<2x1xi32>
      %198 = vector.broadcast %197 : vector<2x1xi32> to vector<2x16xi32>
      %199 = arith.cmpi eq, %80, %198 : vector<2x16xi32>
      %c32_i32_71 = arith.constant 32 : i32
      %200 = vector.broadcast %c32_i32_71 : i32 to vector<2x16xi32>
      %201 = arith.select %199, %148, %200 : vector<2x16xi1>, vector<2x16xi32>
      %cst_72 = arith.constant dense<2147483647> : vector<2xi32>
      %202 = vector.multi_reduction <minsi>, %201, %cst_72 [1] : vector<2x16xi32> to vector<2xi32>
      %203 = vector.shape_cast %202 : vector<2xi32> to vector<2x1xi32>
      %cst_73 = arith.constant 0.000000e+00 : f32
      %204 = vector.broadcast %cst_73 : f32 to vector<2x16xf32>
      %205 = arith.select %199, %149, %204 : vector<2x16xi1>, vector<2x16xf32>
      %cst_74 = arith.constant dense<0.000000e+00> : vector<2xf32>
      %206 = vector.multi_reduction <add>, %205, %cst_74 [1] : vector<2x16xf32> to vector<2xf32>
      %207 = vector.shape_cast %206 : vector<2xf32> to vector<2x1xf32>
      %cst_75 = arith.constant 0xFF800000 : f32
      %208 = vector.broadcast %cst_75 : f32 to vector<2x16xf32>
      %209 = arith.select %199, %208, %189 : vector<2x16xi1>, vector<2x16xf32>
      %cst_76 = arith.constant dense<0xFF800000> : vector<2xf32>
      %210 = vector.multi_reduction <maximumf>, %209, %cst_76 [1] : vector<2x16xf32> to vector<2xf32>
      %211 = vector.shape_cast %210 : vector<2xf32> to vector<2x1xf32>
      %212 = vector.broadcast %211 : vector<2x1xf32> to vector<2x16xf32>
      %213 = arith.cmpf oeq, %209, %212 : vector<2x16xf32>
      %c16_i32_77 = arith.constant 16 : i32
      %214 = vector.broadcast %c16_i32_77 : i32 to vector<2x16xi32>
      %215 = arith.select %213, %80, %214 : vector<2x16xi1>, vector<2x16xi32>
      %cst_78 = arith.constant dense<2147483647> : vector<2xi32>
      %216 = vector.multi_reduction <minsi>, %215, %cst_78 [1] : vector<2x16xi32> to vector<2xi32>
      %217 = vector.shape_cast %216 : vector<2xi32> to vector<2x1xi32>
      %218 = vector.broadcast %217 : vector<2x1xi32> to vector<2x16xi32>
      %219 = arith.cmpi eq, %80, %218 : vector<2x16xi32>
      %c32_i32_79 = arith.constant 32 : i32
      %220 = vector.broadcast %c32_i32_79 : i32 to vector<2x16xi32>
      %221 = arith.select %219, %148, %220 : vector<2x16xi1>, vector<2x16xi32>
      %cst_80 = arith.constant dense<2147483647> : vector<2xi32>
      %222 = vector.multi_reduction <minsi>, %221, %cst_80 [1] : vector<2x16xi32> to vector<2xi32>
      %223 = vector.shape_cast %222 : vector<2xi32> to vector<2x1xi32>
      %cst_81 = arith.constant 0.000000e+00 : f32
      %224 = vector.broadcast %cst_81 : f32 to vector<2x16xf32>
      %225 = arith.select %219, %149, %224 : vector<2x16xi1>, vector<2x16xf32>
      %cst_82 = arith.constant dense<0.000000e+00> : vector<2xf32>
      %226 = vector.multi_reduction <add>, %225, %cst_82 [1] : vector<2x16xf32> to vector<2xf32>
      %227 = vector.shape_cast %226 : vector<2xf32> to vector<2x1xf32>
      %228 = tpu.concatenate %151, %171, %191, %211 in 1 : vector<2x1xf32>, vector<2x1xf32>, vector<2x1xf32>, vector<2x1xf32> -> vector<2x4xf32>
      %229 = tpu.concatenate %163, %183, %203, %223 in 1 : vector<2x1xi32>, vector<2x1xi32>, vector<2x1xi32>, vector<2x1xi32> -> vector<2x4xi32>
      %230 = tpu.concatenate %167, %187, %207, %227 in 1 : vector<2x1xf32>, vector<2x1xf32>, vector<2x1xf32>, vector<2x1xf32> -> vector<2x4xf32>
      %231 = vector.shape_cast %129 : vector<2x1xi1> to vector<2x1xi1>
      %232 = vector.broadcast %231 : vector<2x1xi1> to vector<2x4xi1>
      %233 = arith.select %232, %130, %228 : vector<2x4xi1>, vector<2x4xf32>
      %c0_83 = arith.constant 0 : index
      %c0_84 = arith.constant 0 : index
      %234 = vector.load %arg6[%c0_83, %c0_84] : memref<2x4xf32, #tpu.memory_space<vmem>>, vector<2x4xf32>
      tpu.vector_store %arg6[%c0_83, %c0_84], %233 {strides = array<i32>} : memref<2x4xf32, #tpu.memory_space<vmem>>, vector<2x4xf32>,
      %c0_i32_85 = arith.constant 0 : i32
      %235 = vector.broadcast %c0_i32_85 : i32 to vector<2x1xi32>
      %236 = arith.cmpi eq, %126, %235 : vector<2x1xi32>
      %c0_86 = arith.constant 0 : index
      %c0_87 = arith.constant 0 : index
      %237 = vector.load %arg8[%c0_86, %c0_87] : memref<2x4xf32, #tpu.memory_space<vmem>>, vector<2x4xf32>
      %cst_88 = arith.constant 0.000000e+00 : f32
      %238 = vector.shape_cast %236 : vector<2x1xi1> to vector<2x1xi1>
      %239 = vector.broadcast %238 : vector<2x1xi1> to vector<2x4xi1>
      %240 = vector.broadcast %cst_88 : f32 to vector<2x4xf32>
      %241 = arith.select %239, %230, %240 : vector<2x4xi1>, vector<2x4xf32>
      %242 = arith.addf %237, %241 : vector<2x4xf32>
      %c0_89 = arith.constant 0 : index
      %c0_90 = arith.constant 0 : index
      %243 = vector.load %arg8[%c0_89, %c0_90] : memref<2x4xf32, #tpu.memory_space<vmem>>, vector<2x4xf32>
      tpu.vector_store %arg8[%c0_89, %c0_90], %242 {strides = array<i32>} : memref<2x4xf32, #tpu.memory_space<vmem>>, vector<2x4xf32>,
      %c0_91 = arith.constant 0 : index
      %c0_92 = arith.constant 0 : index
      %244 = vector.load %arg9[%c0_91, %c0_92] : memref<2x4xf32, #tpu.memory_space<vmem>>, vector<2x4xf32>
      %c0_93 = arith.constant 0 : index
      %c1_94 = arith.constant 1 : index
      %c0_95 = arith.constant 0 : index
      %245 = vector.load %arg4[%c0_93, %c1_94, %c0_95] : memref<2x8x1xi32, #tpu.memory_space<vmem>>, vector<2x1x1xi32>
      %246 = vector.shape_cast %245 : vector<2x1x1xi32> to vector<2x1xi32>
      %247 = vector.broadcast %246 : vector<2x1xi32> to vector<2x4xi32>
      %248 = arith.cmpi ne, %229, %247 : vector<2x4xi32>
      %249 = vector.broadcast %236 : vector<2x1xi1> to vector<2x4xi1>
      %250 = arith.andi %249, %248 : vector<2x4xi1>
      %cst_96 = arith.constant 1.000000e+00 : f32
      %cst_97 = arith.constant 0.000000e+00 : f32
      %251 = vector.broadcast %cst_96 : f32 to vector<2x4xf32>
      %252 = vector.broadcast %cst_97 : f32 to vector<2x4xf32>
      %253 = arith.select %250, %251, %252 : vector<2x4xi1>, vector<2x4xf32>
      %254 = arith.addf %244, %253 : vector<2x4xf32>
      %c0_98 = arith.constant 0 : index
      %c0_99 = arith.constant 0 : index
      %255 = vector.load %arg9[%c0_98, %c0_99] : memref<2x4xf32, #tpu.memory_space<vmem>>, vector<2x4xf32>
      tpu.vector_store %arg9[%c0_98, %c0_99], %254 {strides = array<i32>} : memref<2x4xf32, #tpu.memory_space<vmem>>, vector<2x4xf32>,
      %c0_100 = arith.constant 0 : index
      %c0_101 = arith.constant 0 : index
      %256 = vector.load %arg7[%c0_100, %c0_101] : memref<2x1xi32, #tpu.memory_space<vmem>>, vector<2x1xi32>
      tpu.vector_store %arg7[%c0_100, %c0_101], %126 {strides = array<i32>} : memref<2x1xi32, #tpu.memory_space<vmem>>, vector<2x1xi32>,
    } else {
    }
    %c8_i32_26 = arith.constant 8 : i32
    %92 = arith.muli %arg1, %c8_i32_26 : i32
    %c2_i32 = arith.constant 2 : i32
    %93 = arith.addi %92, %c2_i32 : i32
    %c8_i32_27 = arith.constant 8 : i32
    %94 = arith.cmpi slt, %93, %c8_i32_27 : i32
    %95 = arith.extui %94 : i1 to i32
    %c0_i32_28 = arith.constant 0 : i32
    %96 = arith.cmpi ne, %95, %c0_i32_28 : i32
    scf.if %96 {
      %c0_46 = arith.constant 0 : index
      %c2 = arith.constant 2 : index
      %c0_47 = arith.constant 0 : index
      %125 = vector.load %arg3[%c0_46, %c2, %c0_47] : memref<2x8x1xi32, #tpu.memory_space<vmem>>, vector<2x1x1xi32>
      %126 = vector.shape_cast %125 : vector<2x1x1xi32> to vector<2x1xi32>
      %c0_48 = arith.constant 0 : index
      %c0_49 = arith.constant 0 : index
      %127 = vector.load %arg7[%c0_48, %c0_49] : memref<2x1xi32, #tpu.memory_space<vmem>>, vector<2x1xi32>
      %c1_i32_50 = arith.constant 1 : i32
      %128 = vector.broadcast %c1_i32_50 : i32 to vector<2x1xi32>
      %129 = arith.cmpi eq, %127, %128 : vector<2x1xi32>
      %c0_51 = arith.constant 0 : index
      %c0_52 = arith.constant 0 : index
      %130 = vector.load %arg6[%c0_51, %c0_52] : memref<2x4xf32, #tpu.memory_space<vmem>>, vector<2x4xf32>
      %131 = vector.extract_strided_slice %78 {offsets = [0, 2, 0], sizes = [2, 1, 4], strides = [1, 1, 1]} : vector<2x8x4xf32> to vector<2x1x4xf32>
      %132 = vector.shape_cast %131 : vector<2x1x4xf32> to vector<2x4xf32>
      %133 = vector.extract_strided_slice %64 {offsets = [0, 2, 0], sizes = [2, 1, 4], strides = [1, 1, 1]} : vector<2x8x4xi32> to vector<2x1x4xi32>
      %134 = vector.shape_cast %133 : vector<2x1x4xi32> to vector<2x4xi32>
      %135 = vector.extract_strided_slice %130 {offsets = [0, 0], sizes = [2, 1], strides = [1, 1]} : vector<2x4xf32> to vector<2x1xf32>
      %136 = vector.broadcast %135 : vector<2x1xf32> to vector<2x4xf32>
      %137 = arith.addf %136, %132 : vector<2x4xf32>
      %138 = vector.extract_strided_slice %130 {offsets = [0, 1], sizes = [2, 1], strides = [1, 1]} : vector<2x4xf32> to vector<2x1xf32>
      %139 = vector.broadcast %138 : vector<2x1xf32> to vector<2x4xf32>
      %140 = arith.addf %139, %132 : vector<2x4xf32>
      %141 = vector.extract_strided_slice %130 {offsets = [0, 2], sizes = [2, 1], strides = [1, 1]} : vector<2x4xf32> to vector<2x1xf32>
      %142 = vector.broadcast %141 : vector<2x1xf32> to vector<2x4xf32>
      %143 = arith.addf %142, %132 : vector<2x4xf32>
      %144 = vector.extract_strided_slice %130 {offsets = [0, 3], sizes = [2, 1], strides = [1, 1]} : vector<2x4xf32> to vector<2x1xf32>
      %145 = vector.broadcast %144 : vector<2x1xf32> to vector<2x4xf32>
      %146 = arith.addf %145, %132 : vector<2x4xf32>
      %147 = tpu.concatenate %137, %140, %143, %146 in 1 : vector<2x4xf32>, vector<2x4xf32>, vector<2x4xf32>, vector<2x4xf32> -> vector<2x16xf32>
      %148 = tpu.concatenate %134, %134, %134, %134 in 1 : vector<2x4xi32>, vector<2x4xi32>, vector<2x4xi32>, vector<2x4xi32> -> vector<2x16xi32>
      %149 = tpu.concatenate %132, %132, %132, %132 in 1 : vector<2x4xf32>, vector<2x4xf32>, vector<2x4xf32>, vector<2x4xf32> -> vector<2x16xf32>
      %cst_53 = arith.constant dense<0xFF800000> : vector<2xf32>
      %150 = vector.multi_reduction <maximumf>, %147, %cst_53 [1] : vector<2x16xf32> to vector<2xf32>
      %151 = vector.shape_cast %150 : vector<2xf32> to vector<2x1xf32>
      %152 = vector.broadcast %151 : vector<2x1xf32> to vector<2x16xf32>
      %153 = arith.cmpf oeq, %147, %152 : vector<2x16xf32>
      %c16_i32 = arith.constant 16 : i32
      %154 = vector.broadcast %c16_i32 : i32 to vector<2x16xi32>
      %155 = arith.select %153, %80, %154 : vector<2x16xi1>, vector<2x16xi32>
      %cst_54 = arith.constant dense<2147483647> : vector<2xi32>
      %156 = vector.multi_reduction <minsi>, %155, %cst_54 [1] : vector<2x16xi32> to vector<2xi32>
      %157 = vector.shape_cast %156 : vector<2xi32> to vector<2x1xi32>
      %158 = vector.broadcast %157 : vector<2x1xi32> to vector<2x16xi32>
      %159 = arith.cmpi eq, %80, %158 : vector<2x16xi32>
      %c32_i32_55 = arith.constant 32 : i32
      %160 = vector.broadcast %c32_i32_55 : i32 to vector<2x16xi32>
      %161 = arith.select %159, %148, %160 : vector<2x16xi1>, vector<2x16xi32>
      %cst_56 = arith.constant dense<2147483647> : vector<2xi32>
      %162 = vector.multi_reduction <minsi>, %161, %cst_56 [1] : vector<2x16xi32> to vector<2xi32>
      %163 = vector.shape_cast %162 : vector<2xi32> to vector<2x1xi32>
      %cst_57 = arith.constant 0.000000e+00 : f32
      %164 = vector.broadcast %cst_57 : f32 to vector<2x16xf32>
      %165 = arith.select %159, %149, %164 : vector<2x16xi1>, vector<2x16xf32>
      %cst_58 = arith.constant dense<0.000000e+00> : vector<2xf32>
      %166 = vector.multi_reduction <add>, %165, %cst_58 [1] : vector<2x16xf32> to vector<2xf32>
      %167 = vector.shape_cast %166 : vector<2xf32> to vector<2x1xf32>
      %cst_59 = arith.constant 0xFF800000 : f32
      %168 = vector.broadcast %cst_59 : f32 to vector<2x16xf32>
      %169 = arith.select %159, %168, %147 : vector<2x16xi1>, vector<2x16xf32>
      %cst_60 = arith.constant dense<0xFF800000> : vector<2xf32>
      %170 = vector.multi_reduction <maximumf>, %169, %cst_60 [1] : vector<2x16xf32> to vector<2xf32>
      %171 = vector.shape_cast %170 : vector<2xf32> to vector<2x1xf32>
      %172 = vector.broadcast %171 : vector<2x1xf32> to vector<2x16xf32>
      %173 = arith.cmpf oeq, %169, %172 : vector<2x16xf32>
      %c16_i32_61 = arith.constant 16 : i32
      %174 = vector.broadcast %c16_i32_61 : i32 to vector<2x16xi32>
      %175 = arith.select %173, %80, %174 : vector<2x16xi1>, vector<2x16xi32>
      %cst_62 = arith.constant dense<2147483647> : vector<2xi32>
      %176 = vector.multi_reduction <minsi>, %175, %cst_62 [1] : vector<2x16xi32> to vector<2xi32>
      %177 = vector.shape_cast %176 : vector<2xi32> to vector<2x1xi32>
      %178 = vector.broadcast %177 : vector<2x1xi32> to vector<2x16xi32>
      %179 = arith.cmpi eq, %80, %178 : vector<2x16xi32>
      %c32_i32_63 = arith.constant 32 : i32
      %180 = vector.broadcast %c32_i32_63 : i32 to vector<2x16xi32>
      %181 = arith.select %179, %148, %180 : vector<2x16xi1>, vector<2x16xi32>
      %cst_64 = arith.constant dense<2147483647> : vector<2xi32>
      %182 = vector.multi_reduction <minsi>, %181, %cst_64 [1] : vector<2x16xi32> to vector<2xi32>
      %183 = vector.shape_cast %182 : vector<2xi32> to vector<2x1xi32>
      %cst_65 = arith.constant 0.000000e+00 : f32
      %184 = vector.broadcast %cst_65 : f32 to vector<2x16xf32>
      %185 = arith.select %179, %149, %184 : vector<2x16xi1>, vector<2x16xf32>
      %cst_66 = arith.constant dense<0.000000e+00> : vector<2xf32>
      %186 = vector.multi_reduction <add>, %185, %cst_66 [1] : vector<2x16xf32> to vector<2xf32>
      %187 = vector.shape_cast %186 : vector<2xf32> to vector<2x1xf32>
      %cst_67 = arith.constant 0xFF800000 : f32
      %188 = vector.broadcast %cst_67 : f32 to vector<2x16xf32>
      %189 = arith.select %179, %188, %169 : vector<2x16xi1>, vector<2x16xf32>
      %cst_68 = arith.constant dense<0xFF800000> : vector<2xf32>
      %190 = vector.multi_reduction <maximumf>, %189, %cst_68 [1] : vector<2x16xf32> to vector<2xf32>
      %191 = vector.shape_cast %190 : vector<2xf32> to vector<2x1xf32>
      %192 = vector.broadcast %191 : vector<2x1xf32> to vector<2x16xf32>
      %193 = arith.cmpf oeq, %189, %192 : vector<2x16xf32>
      %c16_i32_69 = arith.constant 16 : i32
      %194 = vector.broadcast %c16_i32_69 : i32 to vector<2x16xi32>
      %195 = arith.select %193, %80, %194 : vector<2x16xi1>, vector<2x16xi32>
      %cst_70 = arith.constant dense<2147483647> : vector<2xi32>
      %196 = vector.multi_reduction <minsi>, %195, %cst_70 [1] : vector<2x16xi32> to vector<2xi32>
      %197 = vector.shape_cast %196 : vector<2xi32> to vector<2x1xi32>
      %198 = vector.broadcast %197 : vector<2x1xi32> to vector<2x16xi32>
      %199 = arith.cmpi eq, %80, %198 : vector<2x16xi32>
      %c32_i32_71 = arith.constant 32 : i32
      %200 = vector.broadcast %c32_i32_71 : i32 to vector<2x16xi32>
      %201 = arith.select %199, %148, %200 : vector<2x16xi1>, vector<2x16xi32>
      %cst_72 = arith.constant dense<2147483647> : vector<2xi32>
      %202 = vector.multi_reduction <minsi>, %201, %cst_72 [1] : vector<2x16xi32> to vector<2xi32>
      %203 = vector.shape_cast %202 : vector<2xi32> to vector<2x1xi32>
      %cst_73 = arith.constant 0.000000e+00 : f32
      %204 = vector.broadcast %cst_73 : f32 to vector<2x16xf32>
      %205 = arith.select %199, %149, %204 : vector<2x16xi1>, vector<2x16xf32>
      %cst_74 = arith.constant dense<0.000000e+00> : vector<2xf32>
      %206 = vector.multi_reduction <add>, %205, %cst_74 [1] : vector<2x16xf32> to vector<2xf32>
      %207 = vector.shape_cast %206 : vector<2xf32> to vector<2x1xf32>
      %cst_75 = arith.constant 0xFF800000 : f32
      %208 = vector.broadcast %cst_75 : f32 to vector<2x16xf32>
      %209 = arith.select %199, %208, %189 : vector<2x16xi1>, vector<2x16xf32>
      %cst_76 = arith.constant dense<0xFF800000> : vector<2xf32>
      %210 = vector.multi_reduction <maximumf>, %209, %cst_76 [1] : vector<2x16xf32> to vector<2xf32>
      %211 = vector.shape_cast %210 : vector<2xf32> to vector<2x1xf32>
      %212 = vector.broadcast %211 : vector<2x1xf32> to vector<2x16xf32>
      %213 = arith.cmpf oeq, %209, %212 : vector<2x16xf32>
      %c16_i32_77 = arith.constant 16 : i32
      %214 = vector.broadcast %c16_i32_77 : i32 to vector<2x16xi32>
      %215 = arith.select %213, %80, %214 : vector<2x16xi1>, vector<2x16xi32>
      %cst_78 = arith.constant dense<2147483647> : vector<2xi32>
      %216 = vector.multi_reduction <minsi>, %215, %cst_78 [1] : vector<2x16xi32> to vector<2xi32>
      %217 = vector.shape_cast %216 : vector<2xi32> to vector<2x1xi32>
      %218 = vector.broadcast %217 : vector<2x1xi32> to vector<2x16xi32>
      %219 = arith.cmpi eq, %80, %218 : vector<2x16xi32>
      %c32_i32_79 = arith.constant 32 : i32
      %220 = vector.broadcast %c32_i32_79 : i32 to vector<2x16xi32>
      %221 = arith.select %219, %148, %220 : vector<2x16xi1>, vector<2x16xi32>
      %cst_80 = arith.constant dense<2147483647> : vector<2xi32>
      %222 = vector.multi_reduction <minsi>, %221, %cst_80 [1] : vector<2x16xi32> to vector<2xi32>
      %223 = vector.shape_cast %222 : vector<2xi32> to vector<2x1xi32>
      %cst_81 = arith.constant 0.000000e+00 : f32
      %224 = vector.broadcast %cst_81 : f32 to vector<2x16xf32>
      %225 = arith.select %219, %149, %224 : vector<2x16xi1>, vector<2x16xf32>
      %cst_82 = arith.constant dense<0.000000e+00> : vector<2xf32>
      %226 = vector.multi_reduction <add>, %225, %cst_82 [1] : vector<2x16xf32> to vector<2xf32>
      %227 = vector.shape_cast %226 : vector<2xf32> to vector<2x1xf32>
      %228 = tpu.concatenate %151, %171, %191, %211 in 1 : vector<2x1xf32>, vector<2x1xf32>, vector<2x1xf32>, vector<2x1xf32> -> vector<2x4xf32>
      %229 = tpu.concatenate %163, %183, %203, %223 in 1 : vector<2x1xi32>, vector<2x1xi32>, vector<2x1xi32>, vector<2x1xi32> -> vector<2x4xi32>
      %230 = tpu.concatenate %167, %187, %207, %227 in 1 : vector<2x1xf32>, vector<2x1xf32>, vector<2x1xf32>, vector<2x1xf32> -> vector<2x4xf32>
      %231 = vector.shape_cast %129 : vector<2x1xi1> to vector<2x1xi1>
      %232 = vector.broadcast %231 : vector<2x1xi1> to vector<2x4xi1>
      %233 = arith.select %232, %130, %228 : vector<2x4xi1>, vector<2x4xf32>
      %c0_83 = arith.constant 0 : index
      %c0_84 = arith.constant 0 : index
      %234 = vector.load %arg6[%c0_83, %c0_84] : memref<2x4xf32, #tpu.memory_space<vmem>>, vector<2x4xf32>
      tpu.vector_store %arg6[%c0_83, %c0_84], %233 {strides = array<i32>} : memref<2x4xf32, #tpu.memory_space<vmem>>, vector<2x4xf32>,
      %c0_i32_85 = arith.constant 0 : i32
      %235 = vector.broadcast %c0_i32_85 : i32 to vector<2x1xi32>
      %236 = arith.cmpi eq, %126, %235 : vector<2x1xi32>
      %c0_86 = arith.constant 0 : index
      %c0_87 = arith.constant 0 : index
      %237 = vector.load %arg8[%c0_86, %c0_87] : memref<2x4xf32, #tpu.memory_space<vmem>>, vector<2x4xf32>
      %cst_88 = arith.constant 0.000000e+00 : f32
      %238 = vector.shape_cast %236 : vector<2x1xi1> to vector<2x1xi1>
      %239 = vector.broadcast %238 : vector<2x1xi1> to vector<2x4xi1>
      %240 = vector.broadcast %cst_88 : f32 to vector<2x4xf32>
      %241 = arith.select %239, %230, %240 : vector<2x4xi1>, vector<2x4xf32>
      %242 = arith.addf %237, %241 : vector<2x4xf32>
      %c0_89 = arith.constant 0 : index
      %c0_90 = arith.constant 0 : index
      %243 = vector.load %arg8[%c0_89, %c0_90] : memref<2x4xf32, #tpu.memory_space<vmem>>, vector<2x4xf32>
      tpu.vector_store %arg8[%c0_89, %c0_90], %242 {strides = array<i32>} : memref<2x4xf32, #tpu.memory_space<vmem>>, vector<2x4xf32>,
      %c0_91 = arith.constant 0 : index
      %c0_92 = arith.constant 0 : index
      %244 = vector.load %arg9[%c0_91, %c0_92] : memref<2x4xf32, #tpu.memory_space<vmem>>, vector<2x4xf32>
      %c0_93 = arith.constant 0 : index
      %c2_94 = arith.constant 2 : index
      %c0_95 = arith.constant 0 : index
      %245 = vector.load %arg4[%c0_93, %c2_94, %c0_95] : memref<2x8x1xi32, #tpu.memory_space<vmem>>, vector<2x1x1xi32>
      %246 = vector.shape_cast %245 : vector<2x1x1xi32> to vector<2x1xi32>
      %247 = vector.broadcast %246 : vector<2x1xi32> to vector<2x4xi32>
      %248 = arith.cmpi ne, %229, %247 : vector<2x4xi32>
      %249 = vector.broadcast %236 : vector<2x1xi1> to vector<2x4xi1>
      %250 = arith.andi %249, %248 : vector<2x4xi1>
      %cst_96 = arith.constant 1.000000e+00 : f32
      %cst_97 = arith.constant 0.000000e+00 : f32
      %251 = vector.broadcast %cst_96 : f32 to vector<2x4xf32>
      %252 = vector.broadcast %cst_97 : f32 to vector<2x4xf32>
      %253 = arith.select %250, %251, %252 : vector<2x4xi1>, vector<2x4xf32>
      %254 = arith.addf %244, %253 : vector<2x4xf32>
      %c0_98 = arith.constant 0 : index
      %c0_99 = arith.constant 0 : index
      %255 = vector.load %arg9[%c0_98, %c0_99] : memref<2x4xf32, #tpu.memory_space<vmem>>, vector<2x4xf32>
      tpu.vector_store %arg9[%c0_98, %c0_99], %254 {strides = array<i32>} : memref<2x4xf32, #tpu.memory_space<vmem>>, vector<2x4xf32>,
      %c0_100 = arith.constant 0 : index
      %c0_101 = arith.constant 0 : index
      %256 = vector.load %arg7[%c0_100, %c0_101] : memref<2x1xi32, #tpu.memory_space<vmem>>, vector<2x1xi32>
      tpu.vector_store %arg7[%c0_100, %c0_101], %126 {strides = array<i32>} : memref<2x1xi32, #tpu.memory_space<vmem>>, vector<2x1xi32>,
    } else {
    }
    %c8_i32_29 = arith.constant 8 : i32
    %97 = arith.muli %arg1, %c8_i32_29 : i32
    %c3_i32 = arith.constant 3 : i32
    %98 = arith.addi %97, %c3_i32 : i32
    %c8_i32_30 = arith.constant 8 : i32
    %99 = arith.cmpi slt, %98, %c8_i32_30 : i32
    %100 = arith.extui %99 : i1 to i32
    %c0_i32_31 = arith.constant 0 : i32
    %101 = arith.cmpi ne, %100, %c0_i32_31 : i32
    scf.if %101 {
      %c0_46 = arith.constant 0 : index
      %c3 = arith.constant 3 : index
      %c0_47 = arith.constant 0 : index
      %125 = vector.load %arg3[%c0_46, %c3, %c0_47] : memref<2x8x1xi32, #tpu.memory_space<vmem>>, vector<2x1x1xi32>
      %126 = vector.shape_cast %125 : vector<2x1x1xi32> to vector<2x1xi32>
      %c0_48 = arith.constant 0 : index
      %c0_49 = arith.constant 0 : index
      %127 = vector.load %arg7[%c0_48, %c0_49] : memref<2x1xi32, #tpu.memory_space<vmem>>, vector<2x1xi32>
      %c1_i32_50 = arith.constant 1 : i32
      %128 = vector.broadcast %c1_i32_50 : i32 to vector<2x1xi32>
      %129 = arith.cmpi eq, %127, %128 : vector<2x1xi32>
      %c0_51 = arith.constant 0 : index
      %c0_52 = arith.constant 0 : index
      %130 = vector.load %arg6[%c0_51, %c0_52] : memref<2x4xf32, #tpu.memory_space<vmem>>, vector<2x4xf32>
      %131 = vector.extract_strided_slice %78 {offsets = [0, 3, 0], sizes = [2, 1, 4], strides = [1, 1, 1]} : vector<2x8x4xf32> to vector<2x1x4xf32>
      %132 = vector.shape_cast %131 : vector<2x1x4xf32> to vector<2x4xf32>
      %133 = vector.extract_strided_slice %64 {offsets = [0, 3, 0], sizes = [2, 1, 4], strides = [1, 1, 1]} : vector<2x8x4xi32> to vector<2x1x4xi32>
      %134 = vector.shape_cast %133 : vector<2x1x4xi32> to vector<2x4xi32>
      %135 = vector.extract_strided_slice %130 {offsets = [0, 0], sizes = [2, 1], strides = [1, 1]} : vector<2x4xf32> to vector<2x1xf32>
      %136 = vector.broadcast %135 : vector<2x1xf32> to vector<2x4xf32>
      %137 = arith.addf %136, %132 : vector<2x4xf32>
      %138 = vector.extract_strided_slice %130 {offsets = [0, 1], sizes = [2, 1], strides = [1, 1]} : vector<2x4xf32> to vector<2x1xf32>
      %139 = vector.broadcast %138 : vector<2x1xf32> to vector<2x4xf32>
      %140 = arith.addf %139, %132 : vector<2x4xf32>
      %141 = vector.extract_strided_slice %130 {offsets = [0, 2], sizes = [2, 1], strides = [1, 1]} : vector<2x4xf32> to vector<2x1xf32>
      %142 = vector.broadcast %141 : vector<2x1xf32> to vector<2x4xf32>
      %143 = arith.addf %142, %132 : vector<2x4xf32>
      %144 = vector.extract_strided_slice %130 {offsets = [0, 3], sizes = [2, 1], strides = [1, 1]} : vector<2x4xf32> to vector<2x1xf32>
      %145 = vector.broadcast %144 : vector<2x1xf32> to vector<2x4xf32>
      %146 = arith.addf %145, %132 : vector<2x4xf32>
      %147 = tpu.concatenate %137, %140, %143, %146 in 1 : vector<2x4xf32>, vector<2x4xf32>, vector<2x4xf32>, vector<2x4xf32> -> vector<2x16xf32>
      %148 = tpu.concatenate %134, %134, %134, %134 in 1 : vector<2x4xi32>, vector<2x4xi32>, vector<2x4xi32>, vector<2x4xi32> -> vector<2x16xi32>
      %149 = tpu.concatenate %132, %132, %132, %132 in 1 : vector<2x4xf32>, vector<2x4xf32>, vector<2x4xf32>, vector<2x4xf32> -> vector<2x16xf32>
      %cst_53 = arith.constant dense<0xFF800000> : vector<2xf32>
      %150 = vector.multi_reduction <maximumf>, %147, %cst_53 [1] : vector<2x16xf32> to vector<2xf32>
      %151 = vector.shape_cast %150 : vector<2xf32> to vector<2x1xf32>
      %152 = vector.broadcast %151 : vector<2x1xf32> to vector<2x16xf32>
      %153 = arith.cmpf oeq, %147, %152 : vector<2x16xf32>
      %c16_i32 = arith.constant 16 : i32
      %154 = vector.broadcast %c16_i32 : i32 to vector<2x16xi32>
      %155 = arith.select %153, %80, %154 : vector<2x16xi1>, vector<2x16xi32>
      %cst_54 = arith.constant dense<2147483647> : vector<2xi32>
      %156 = vector.multi_reduction <minsi>, %155, %cst_54 [1] : vector<2x16xi32> to vector<2xi32>
      %157 = vector.shape_cast %156 : vector<2xi32> to vector<2x1xi32>
      %158 = vector.broadcast %157 : vector<2x1xi32> to vector<2x16xi32>
      %159 = arith.cmpi eq, %80, %158 : vector<2x16xi32>
      %c32_i32_55 = arith.constant 32 : i32
      %160 = vector.broadcast %c32_i32_55 : i32 to vector<2x16xi32>
      %161 = arith.select %159, %148, %160 : vector<2x16xi1>, vector<2x16xi32>
      %cst_56 = arith.constant dense<2147483647> : vector<2xi32>
      %162 = vector.multi_reduction <minsi>, %161, %cst_56 [1] : vector<2x16xi32> to vector<2xi32>
      %163 = vector.shape_cast %162 : vector<2xi32> to vector<2x1xi32>
      %cst_57 = arith.constant 0.000000e+00 : f32
      %164 = vector.broadcast %cst_57 : f32 to vector<2x16xf32>
      %165 = arith.select %159, %149, %164 : vector<2x16xi1>, vector<2x16xf32>
      %cst_58 = arith.constant dense<0.000000e+00> : vector<2xf32>
      %166 = vector.multi_reduction <add>, %165, %cst_58 [1] : vector<2x16xf32> to vector<2xf32>
      %167 = vector.shape_cast %166 : vector<2xf32> to vector<2x1xf32>
      %cst_59 = arith.constant 0xFF800000 : f32
      %168 = vector.broadcast %cst_59 : f32 to vector<2x16xf32>
      %169 = arith.select %159, %168, %147 : vector<2x16xi1>, vector<2x16xf32>
      %cst_60 = arith.constant dense<0xFF800000> : vector<2xf32>
      %170 = vector.multi_reduction <maximumf>, %169, %cst_60 [1] : vector<2x16xf32> to vector<2xf32>
      %171 = vector.shape_cast %170 : vector<2xf32> to vector<2x1xf32>
      %172 = vector.broadcast %171 : vector<2x1xf32> to vector<2x16xf32>
      %173 = arith.cmpf oeq, %169, %172 : vector<2x16xf32>
      %c16_i32_61 = arith.constant 16 : i32
      %174 = vector.broadcast %c16_i32_61 : i32 to vector<2x16xi32>
      %175 = arith.select %173, %80, %174 : vector<2x16xi1>, vector<2x16xi32>
      %cst_62 = arith.constant dense<2147483647> : vector<2xi32>
      %176 = vector.multi_reduction <minsi>, %175, %cst_62 [1] : vector<2x16xi32> to vector<2xi32>
      %177 = vector.shape_cast %176 : vector<2xi32> to vector<2x1xi32>
      %178 = vector.broadcast %177 : vector<2x1xi32> to vector<2x16xi32>
      %179 = arith.cmpi eq, %80, %178 : vector<2x16xi32>
      %c32_i32_63 = arith.constant 32 : i32
      %180 = vector.broadcast %c32_i32_63 : i32 to vector<2x16xi32>
      %181 = arith.select %179, %148, %180 : vector<2x16xi1>, vector<2x16xi32>
      %cst_64 = arith.constant dense<2147483647> : vector<2xi32>
      %182 = vector.multi_reduction <minsi>, %181, %cst_64 [1] : vector<2x16xi32> to vector<2xi32>
      %183 = vector.shape_cast %182 : vector<2xi32> to vector<2x1xi32>
      %cst_65 = arith.constant 0.000000e+00 : f32
      %184 = vector.broadcast %cst_65 : f32 to vector<2x16xf32>
      %185 = arith.select %179, %149, %184 : vector<2x16xi1>, vector<2x16xf32>
      %cst_66 = arith.constant dense<0.000000e+00> : vector<2xf32>
      %186 = vector.multi_reduction <add>, %185, %cst_66 [1] : vector<2x16xf32> to vector<2xf32>
      %187 = vector.shape_cast %186 : vector<2xf32> to vector<2x1xf32>
      %cst_67 = arith.constant 0xFF800000 : f32
      %188 = vector.broadcast %cst_67 : f32 to vector<2x16xf32>
      %189 = arith.select %179, %188, %169 : vector<2x16xi1>, vector<2x16xf32>
      %cst_68 = arith.constant dense<0xFF800000> : vector<2xf32>
      %190 = vector.multi_reduction <maximumf>, %189, %cst_68 [1] : vector<2x16xf32> to vector<2xf32>
      %191 = vector.shape_cast %190 : vector<2xf32> to vector<2x1xf32>
      %192 = vector.broadcast %191 : vector<2x1xf32> to vector<2x16xf32>
      %193 = arith.cmpf oeq, %189, %192 : vector<2x16xf32>
      %c16_i32_69 = arith.constant 16 : i32
      %194 = vector.broadcast %c16_i32_69 : i32 to vector<2x16xi32>
      %195 = arith.select %193, %80, %194 : vector<2x16xi1>, vector<2x16xi32>
      %cst_70 = arith.constant dense<2147483647> : vector<2xi32>
      %196 = vector.multi_reduction <minsi>, %195, %cst_70 [1] : vector<2x16xi32> to vector<2xi32>
      %197 = vector.shape_cast %196 : vector<2xi32> to vector<2x1xi32>
      %198 = vector.broadcast %197 : vector<2x1xi32> to vector<2x16xi32>
      %199 = arith.cmpi eq, %80, %198 : vector<2x16xi32>
      %c32_i32_71 = arith.constant 32 : i32
      %200 = vector.broadcast %c32_i32_71 : i32 to vector<2x16xi32>
      %201 = arith.select %199, %148, %200 : vector<2x16xi1>, vector<2x16xi32>
      %cst_72 = arith.constant dense<2147483647> : vector<2xi32>
      %202 = vector.multi_reduction <minsi>, %201, %cst_72 [1] : vector<2x16xi32> to vector<2xi32>
      %203 = vector.shape_cast %202 : vector<2xi32> to vector<2x1xi32>
      %cst_73 = arith.constant 0.000000e+00 : f32
      %204 = vector.broadcast %cst_73 : f32 to vector<2x16xf32>
      %205 = arith.select %199, %149, %204 : vector<2x16xi1>, vector<2x16xf32>
      %cst_74 = arith.constant dense<0.000000e+00> : vector<2xf32>
      %206 = vector.multi_reduction <add>, %205, %cst_74 [1] : vector<2x16xf32> to vector<2xf32>
      %207 = vector.shape_cast %206 : vector<2xf32> to vector<2x1xf32>
      %cst_75 = arith.constant 0xFF800000 : f32
      %208 = vector.broadcast %cst_75 : f32 to vector<2x16xf32>
      %209 = arith.select %199, %208, %189 : vector<2x16xi1>, vector<2x16xf32>
      %cst_76 = arith.constant dense<0xFF800000> : vector<2xf32>
      %210 = vector.multi_reduction <maximumf>, %209, %cst_76 [1] : vector<2x16xf32> to vector<2xf32>
      %211 = vector.shape_cast %210 : vector<2xf32> to vector<2x1xf32>
      %212 = vector.broadcast %211 : vector<2x1xf32> to vector<2x16xf32>
      %213 = arith.cmpf oeq, %209, %212 : vector<2x16xf32>
      %c16_i32_77 = arith.constant 16 : i32
      %214 = vector.broadcast %c16_i32_77 : i32 to vector<2x16xi32>
      %215 = arith.select %213, %80, %214 : vector<2x16xi1>, vector<2x16xi32>
      %cst_78 = arith.constant dense<2147483647> : vector<2xi32>
      %216 = vector.multi_reduction <minsi>, %215, %cst_78 [1] : vector<2x16xi32> to vector<2xi32>
      %217 = vector.shape_cast %216 : vector<2xi32> to vector<2x1xi32>
      %218 = vector.broadcast %217 : vector<2x1xi32> to vector<2x16xi32>
      %219 = arith.cmpi eq, %80, %218 : vector<2x16xi32>
      %c32_i32_79 = arith.constant 32 : i32
      %220 = vector.broadcast %c32_i32_79 : i32 to vector<2x16xi32>
      %221 = arith.select %219, %148, %220 : vector<2x16xi1>, vector<2x16xi32>
      %cst_80 = arith.constant dense<2147483647> : vector<2xi32>
      %222 = vector.multi_reduction <minsi>, %221, %cst_80 [1] : vector<2x16xi32> to vector<2xi32>
      %223 = vector.shape_cast %222 : vector<2xi32> to vector<2x1xi32>
      %cst_81 = arith.constant 0.000000e+00 : f32
      %224 = vector.broadcast %cst_81 : f32 to vector<2x16xf32>
      %225 = arith.select %219, %149, %224 : vector<2x16xi1>, vector<2x16xf32>
      %cst_82 = arith.constant dense<0.000000e+00> : vector<2xf32>
      %226 = vector.multi_reduction <add>, %225, %cst_82 [1] : vector<2x16xf32> to vector<2xf32>
      %227 = vector.shape_cast %226 : vector<2xf32> to vector<2x1xf32>
      %228 = tpu.concatenate %151, %171, %191, %211 in 1 : vector<2x1xf32>, vector<2x1xf32>, vector<2x1xf32>, vector<2x1xf32> -> vector<2x4xf32>
      %229 = tpu.concatenate %163, %183, %203, %223 in 1 : vector<2x1xi32>, vector<2x1xi32>, vector<2x1xi32>, vector<2x1xi32> -> vector<2x4xi32>
      %230 = tpu.concatenate %167, %187, %207, %227 in 1 : vector<2x1xf32>, vector<2x1xf32>, vector<2x1xf32>, vector<2x1xf32> -> vector<2x4xf32>
      %231 = vector.shape_cast %129 : vector<2x1xi1> to vector<2x1xi1>
      %232 = vector.broadcast %231 : vector<2x1xi1> to vector<2x4xi1>
      %233 = arith.select %232, %130, %228 : vector<2x4xi1>, vector<2x4xf32>
      %c0_83 = arith.constant 0 : index
      %c0_84 = arith.constant 0 : index
      %234 = vector.load %arg6[%c0_83, %c0_84] : memref<2x4xf32, #tpu.memory_space<vmem>>, vector<2x4xf32>
      tpu.vector_store %arg6[%c0_83, %c0_84], %233 {strides = array<i32>} : memref<2x4xf32, #tpu.memory_space<vmem>>, vector<2x4xf32>,
      %c0_i32_85 = arith.constant 0 : i32
      %235 = vector.broadcast %c0_i32_85 : i32 to vector<2x1xi32>
      %236 = arith.cmpi eq, %126, %235 : vector<2x1xi32>
      %c0_86 = arith.constant 0 : index
      %c0_87 = arith.constant 0 : index
      %237 = vector.load %arg8[%c0_86, %c0_87] : memref<2x4xf32, #tpu.memory_space<vmem>>, vector<2x4xf32>
      %cst_88 = arith.constant 0.000000e+00 : f32
      %238 = vector.shape_cast %236 : vector<2x1xi1> to vector<2x1xi1>
      %239 = vector.broadcast %238 : vector<2x1xi1> to vector<2x4xi1>
      %240 = vector.broadcast %cst_88 : f32 to vector<2x4xf32>
      %241 = arith.select %239, %230, %240 : vector<2x4xi1>, vector<2x4xf32>
      %242 = arith.addf %237, %241 : vector<2x4xf32>
      %c0_89 = arith.constant 0 : index
      %c0_90 = arith.constant 0 : index
      %243 = vector.load %arg8[%c0_89, %c0_90] : memref<2x4xf32, #tpu.memory_space<vmem>>, vector<2x4xf32>
      tpu.vector_store %arg8[%c0_89, %c0_90], %242 {strides = array<i32>} : memref<2x4xf32, #tpu.memory_space<vmem>>, vector<2x4xf32>,
      %c0_91 = arith.constant 0 : index
      %c0_92 = arith.constant 0 : index
      %244 = vector.load %arg9[%c0_91, %c0_92] : memref<2x4xf32, #tpu.memory_space<vmem>>, vector<2x4xf32>
      %c0_93 = arith.constant 0 : index
      %c3_94 = arith.constant 3 : index
      %c0_95 = arith.constant 0 : index
      %245 = vector.load %arg4[%c0_93, %c3_94, %c0_95] : memref<2x8x1xi32, #tpu.memory_space<vmem>>, vector<2x1x1xi32>
      %246 = vector.shape_cast %245 : vector<2x1x1xi32> to vector<2x1xi32>
      %247 = vector.broadcast %246 : vector<2x1xi32> to vector<2x4xi32>
      %248 = arith.cmpi ne, %229, %247 : vector<2x4xi32>
      %249 = vector.broadcast %236 : vector<2x1xi1> to vector<2x4xi1>
      %250 = arith.andi %249, %248 : vector<2x4xi1>
      %cst_96 = arith.constant 1.000000e+00 : f32
      %cst_97 = arith.constant 0.000000e+00 : f32
      %251 = vector.broadcast %cst_96 : f32 to vector<2x4xf32>
      %252 = vector.broadcast %cst_97 : f32 to vector<2x4xf32>
      %253 = arith.select %250, %251, %252 : vector<2x4xi1>, vector<2x4xf32>
      %254 = arith.addf %244, %253 : vector<2x4xf32>
      %c0_98 = arith.constant 0 : index
      %c0_99 = arith.constant 0 : index
      %255 = vector.load %arg9[%c0_98, %c0_99] : memref<2x4xf32, #tpu.memory_space<vmem>>, vector<2x4xf32>
      tpu.vector_store %arg9[%c0_98, %c0_99], %254 {strides = array<i32>} : memref<2x4xf32, #tpu.memory_space<vmem>>, vector<2x4xf32>,
      %c0_100 = arith.constant 0 : index
      %c0_101 = arith.constant 0 : index
      %256 = vector.load %arg7[%c0_100, %c0_101] : memref<2x1xi32, #tpu.memory_space<vmem>>, vector<2x1xi32>
      tpu.vector_store %arg7[%c0_100, %c0_101], %126 {strides = array<i32>} : memref<2x1xi32, #tpu.memory_space<vmem>>, vector<2x1xi32>,
    } else {
    }
    %c8_i32_32 = arith.constant 8 : i32
    %102 = arith.muli %arg1, %c8_i32_32 : i32
    %c4_i32 = arith.constant 4 : i32
    %103 = arith.addi %102, %c4_i32 : i32
    %c8_i32_33 = arith.constant 8 : i32
    %104 = arith.cmpi slt, %103, %c8_i32_33 : i32
    %105 = arith.extui %104 : i1 to i32
    %c0_i32_34 = arith.constant 0 : i32
    %106 = arith.cmpi ne, %105, %c0_i32_34 : i32
    scf.if %106 {
      %c0_46 = arith.constant 0 : index
      %c4 = arith.constant 4 : index
      %c0_47 = arith.constant 0 : index
      %125 = vector.load %arg3[%c0_46, %c4, %c0_47] : memref<2x8x1xi32, #tpu.memory_space<vmem>>, vector<2x1x1xi32>
      %126 = vector.shape_cast %125 : vector<2x1x1xi32> to vector<2x1xi32>
      %c0_48 = arith.constant 0 : index
      %c0_49 = arith.constant 0 : index
      %127 = vector.load %arg7[%c0_48, %c0_49] : memref<2x1xi32, #tpu.memory_space<vmem>>, vector<2x1xi32>
      %c1_i32_50 = arith.constant 1 : i32
      %128 = vector.broadcast %c1_i32_50 : i32 to vector<2x1xi32>
      %129 = arith.cmpi eq, %127, %128 : vector<2x1xi32>
      %c0_51 = arith.constant 0 : index
      %c0_52 = arith.constant 0 : index
      %130 = vector.load %arg6[%c0_51, %c0_52] : memref<2x4xf32, #tpu.memory_space<vmem>>, vector<2x4xf32>
      %131 = vector.extract_strided_slice %78 {offsets = [0, 4, 0], sizes = [2, 1, 4], strides = [1, 1, 1]} : vector<2x8x4xf32> to vector<2x1x4xf32>
      %132 = vector.shape_cast %131 : vector<2x1x4xf32> to vector<2x4xf32>
      %133 = vector.extract_strided_slice %64 {offsets = [0, 4, 0], sizes = [2, 1, 4], strides = [1, 1, 1]} : vector<2x8x4xi32> to vector<2x1x4xi32>
      %134 = vector.shape_cast %133 : vector<2x1x4xi32> to vector<2x4xi32>
      %135 = vector.extract_strided_slice %130 {offsets = [0, 0], sizes = [2, 1], strides = [1, 1]} : vector<2x4xf32> to vector<2x1xf32>
      %136 = vector.broadcast %135 : vector<2x1xf32> to vector<2x4xf32>
      %137 = arith.addf %136, %132 : vector<2x4xf32>
      %138 = vector.extract_strided_slice %130 {offsets = [0, 1], sizes = [2, 1], strides = [1, 1]} : vector<2x4xf32> to vector<2x1xf32>
      %139 = vector.broadcast %138 : vector<2x1xf32> to vector<2x4xf32>
      %140 = arith.addf %139, %132 : vector<2x4xf32>
      %141 = vector.extract_strided_slice %130 {offsets = [0, 2], sizes = [2, 1], strides = [1, 1]} : vector<2x4xf32> to vector<2x1xf32>
      %142 = vector.broadcast %141 : vector<2x1xf32> to vector<2x4xf32>
      %143 = arith.addf %142, %132 : vector<2x4xf32>
      %144 = vector.extract_strided_slice %130 {offsets = [0, 3], sizes = [2, 1], strides = [1, 1]} : vector<2x4xf32> to vector<2x1xf32>
      %145 = vector.broadcast %144 : vector<2x1xf32> to vector<2x4xf32>
      %146 = arith.addf %145, %132 : vector<2x4xf32>
      %147 = tpu.concatenate %137, %140, %143, %146 in 1 : vector<2x4xf32>, vector<2x4xf32>, vector<2x4xf32>, vector<2x4xf32> -> vector<2x16xf32>
      %148 = tpu.concatenate %134, %134, %134, %134 in 1 : vector<2x4xi32>, vector<2x4xi32>, vector<2x4xi32>, vector<2x4xi32> -> vector<2x16xi32>
      %149 = tpu.concatenate %132, %132, %132, %132 in 1 : vector<2x4xf32>, vector<2x4xf32>, vector<2x4xf32>, vector<2x4xf32> -> vector<2x16xf32>
      %cst_53 = arith.constant dense<0xFF800000> : vector<2xf32>
      %150 = vector.multi_reduction <maximumf>, %147, %cst_53 [1] : vector<2x16xf32> to vector<2xf32>
      %151 = vector.shape_cast %150 : vector<2xf32> to vector<2x1xf32>
      %152 = vector.broadcast %151 : vector<2x1xf32> to vector<2x16xf32>
      %153 = arith.cmpf oeq, %147, %152 : vector<2x16xf32>
      %c16_i32 = arith.constant 16 : i32
      %154 = vector.broadcast %c16_i32 : i32 to vector<2x16xi32>
      %155 = arith.select %153, %80, %154 : vector<2x16xi1>, vector<2x16xi32>
      %cst_54 = arith.constant dense<2147483647> : vector<2xi32>
      %156 = vector.multi_reduction <minsi>, %155, %cst_54 [1] : vector<2x16xi32> to vector<2xi32>
      %157 = vector.shape_cast %156 : vector<2xi32> to vector<2x1xi32>
      %158 = vector.broadcast %157 : vector<2x1xi32> to vector<2x16xi32>
      %159 = arith.cmpi eq, %80, %158 : vector<2x16xi32>
      %c32_i32_55 = arith.constant 32 : i32
      %160 = vector.broadcast %c32_i32_55 : i32 to vector<2x16xi32>
      %161 = arith.select %159, %148, %160 : vector<2x16xi1>, vector<2x16xi32>
      %cst_56 = arith.constant dense<2147483647> : vector<2xi32>
      %162 = vector.multi_reduction <minsi>, %161, %cst_56 [1] : vector<2x16xi32> to vector<2xi32>
      %163 = vector.shape_cast %162 : vector<2xi32> to vector<2x1xi32>
      %cst_57 = arith.constant 0.000000e+00 : f32
      %164 = vector.broadcast %cst_57 : f32 to vector<2x16xf32>
      %165 = arith.select %159, %149, %164 : vector<2x16xi1>, vector<2x16xf32>
      %cst_58 = arith.constant dense<0.000000e+00> : vector<2xf32>
      %166 = vector.multi_reduction <add>, %165, %cst_58 [1] : vector<2x16xf32> to vector<2xf32>
      %167 = vector.shape_cast %166 : vector<2xf32> to vector<2x1xf32>
      %cst_59 = arith.constant 0xFF800000 : f32
      %168 = vector.broadcast %cst_59 : f32 to vector<2x16xf32>
      %169 = arith.select %159, %168, %147 : vector<2x16xi1>, vector<2x16xf32>
      %cst_60 = arith.constant dense<0xFF800000> : vector<2xf32>
      %170 = vector.multi_reduction <maximumf>, %169, %cst_60 [1] : vector<2x16xf32> to vector<2xf32>
      %171 = vector.shape_cast %170 : vector<2xf32> to vector<2x1xf32>
      %172 = vector.broadcast %171 : vector<2x1xf32> to vector<2x16xf32>
      %173 = arith.cmpf oeq, %169, %172 : vector<2x16xf32>
      %c16_i32_61 = arith.constant 16 : i32
      %174 = vector.broadcast %c16_i32_61 : i32 to vector<2x16xi32>
      %175 = arith.select %173, %80, %174 : vector<2x16xi1>, vector<2x16xi32>
      %cst_62 = arith.constant dense<2147483647> : vector<2xi32>
      %176 = vector.multi_reduction <minsi>, %175, %cst_62 [1] : vector<2x16xi32> to vector<2xi32>
      %177 = vector.shape_cast %176 : vector<2xi32> to vector<2x1xi32>
      %178 = vector.broadcast %177 : vector<2x1xi32> to vector<2x16xi32>
      %179 = arith.cmpi eq, %80, %178 : vector<2x16xi32>
      %c32_i32_63 = arith.constant 32 : i32
      %180 = vector.broadcast %c32_i32_63 : i32 to vector<2x16xi32>
      %181 = arith.select %179, %148, %180 : vector<2x16xi1>, vector<2x16xi32>
      %cst_64 = arith.constant dense<2147483647> : vector<2xi32>
      %182 = vector.multi_reduction <minsi>, %181, %cst_64 [1] : vector<2x16xi32> to vector<2xi32>
      %183 = vector.shape_cast %182 : vector<2xi32> to vector<2x1xi32>
      %cst_65 = arith.constant 0.000000e+00 : f32
      %184 = vector.broadcast %cst_65 : f32 to vector<2x16xf32>
      %185 = arith.select %179, %149, %184 : vector<2x16xi1>, vector<2x16xf32>
      %cst_66 = arith.constant dense<0.000000e+00> : vector<2xf32>
      %186 = vector.multi_reduction <add>, %185, %cst_66 [1] : vector<2x16xf32> to vector<2xf32>
      %187 = vector.shape_cast %186 : vector<2xf32> to vector<2x1xf32>
      %cst_67 = arith.constant 0xFF800000 : f32
      %188 = vector.broadcast %cst_67 : f32 to vector<2x16xf32>
      %189 = arith.select %179, %188, %169 : vector<2x16xi1>, vector<2x16xf32>
      %cst_68 = arith.constant dense<0xFF800000> : vector<2xf32>
      %190 = vector.multi_reduction <maximumf>, %189, %cst_68 [1] : vector<2x16xf32> to vector<2xf32>
      %191 = vector.shape_cast %190 : vector<2xf32> to vector<2x1xf32>
      %192 = vector.broadcast %191 : vector<2x1xf32> to vector<2x16xf32>
      %193 = arith.cmpf oeq, %189, %192 : vector<2x16xf32>
      %c16_i32_69 = arith.constant 16 : i32
      %194 = vector.broadcast %c16_i32_69 : i32 to vector<2x16xi32>
      %195 = arith.select %193, %80, %194 : vector<2x16xi1>, vector<2x16xi32>
      %cst_70 = arith.constant dense<2147483647> : vector<2xi32>
      %196 = vector.multi_reduction <minsi>, %195, %cst_70 [1] : vector<2x16xi32> to vector<2xi32>
      %197 = vector.shape_cast %196 : vector<2xi32> to vector<2x1xi32>
      %198 = vector.broadcast %197 : vector<2x1xi32> to vector<2x16xi32>
      %199 = arith.cmpi eq, %80, %198 : vector<2x16xi32>
      %c32_i32_71 = arith.constant 32 : i32
      %200 = vector.broadcast %c32_i32_71 : i32 to vector<2x16xi32>
      %201 = arith.select %199, %148, %200 : vector<2x16xi1>, vector<2x16xi32>
      %cst_72 = arith.constant dense<2147483647> : vector<2xi32>
      %202 = vector.multi_reduction <minsi>, %201, %cst_72 [1] : vector<2x16xi32> to vector<2xi32>
      %203 = vector.shape_cast %202 : vector<2xi32> to vector<2x1xi32>
      %cst_73 = arith.constant 0.000000e+00 : f32
      %204 = vector.broadcast %cst_73 : f32 to vector<2x16xf32>
      %205 = arith.select %199, %149, %204 : vector<2x16xi1>, vector<2x16xf32>
      %cst_74 = arith.constant dense<0.000000e+00> : vector<2xf32>
      %206 = vector.multi_reduction <add>, %205, %cst_74 [1] : vector<2x16xf32> to vector<2xf32>
      %207 = vector.shape_cast %206 : vector<2xf32> to vector<2x1xf32>
      %cst_75 = arith.constant 0xFF800000 : f32
      %208 = vector.broadcast %cst_75 : f32 to vector<2x16xf32>
      %209 = arith.select %199, %208, %189 : vector<2x16xi1>, vector<2x16xf32>
      %cst_76 = arith.constant dense<0xFF800000> : vector<2xf32>
      %210 = vector.multi_reduction <maximumf>, %209, %cst_76 [1] : vector<2x16xf32> to vector<2xf32>
      %211 = vector.shape_cast %210 : vector<2xf32> to vector<2x1xf32>
      %212 = vector.broadcast %211 : vector<2x1xf32> to vector<2x16xf32>
      %213 = arith.cmpf oeq, %209, %212 : vector<2x16xf32>
      %c16_i32_77 = arith.constant 16 : i32
      %214 = vector.broadcast %c16_i32_77 : i32 to vector<2x16xi32>
      %215 = arith.select %213, %80, %214 : vector<2x16xi1>, vector<2x16xi32>
      %cst_78 = arith.constant dense<2147483647> : vector<2xi32>
      %216 = vector.multi_reduction <minsi>, %215, %cst_78 [1] : vector<2x16xi32> to vector<2xi32>
      %217 = vector.shape_cast %216 : vector<2xi32> to vector<2x1xi32>
      %218 = vector.broadcast %217 : vector<2x1xi32> to vector<2x16xi32>
      %219 = arith.cmpi eq, %80, %218 : vector<2x16xi32>
      %c32_i32_79 = arith.constant 32 : i32
      %220 = vector.broadcast %c32_i32_79 : i32 to vector<2x16xi32>
      %221 = arith.select %219, %148, %220 : vector<2x16xi1>, vector<2x16xi32>
      %cst_80 = arith.constant dense<2147483647> : vector<2xi32>
      %222 = vector.multi_reduction <minsi>, %221, %cst_80 [1] : vector<2x16xi32> to vector<2xi32>
      %223 = vector.shape_cast %222 : vector<2xi32> to vector<2x1xi32>
      %cst_81 = arith.constant 0.000000e+00 : f32
      %224 = vector.broadcast %cst_81 : f32 to vector<2x16xf32>
      %225 = arith.select %219, %149, %224 : vector<2x16xi1>, vector<2x16xf32>
      %cst_82 = arith.constant dense<0.000000e+00> : vector<2xf32>
      %226 = vector.multi_reduction <add>, %225, %cst_82 [1] : vector<2x16xf32> to vector<2xf32>
      %227 = vector.shape_cast %226 : vector<2xf32> to vector<2x1xf32>
      %228 = tpu.concatenate %151, %171, %191, %211 in 1 : vector<2x1xf32>, vector<2x1xf32>, vector<2x1xf32>, vector<2x1xf32> -> vector<2x4xf32>
      %229 = tpu.concatenate %163, %183, %203, %223 in 1 : vector<2x1xi32>, vector<2x1xi32>, vector<2x1xi32>, vector<2x1xi32> -> vector<2x4xi32>
      %230 = tpu.concatenate %167, %187, %207, %227 in 1 : vector<2x1xf32>, vector<2x1xf32>, vector<2x1xf32>, vector<2x1xf32> -> vector<2x4xf32>
      %231 = vector.shape_cast %129 : vector<2x1xi1> to vector<2x1xi1>
      %232 = vector.broadcast %231 : vector<2x1xi1> to vector<2x4xi1>
      %233 = arith.select %232, %130, %228 : vector<2x4xi1>, vector<2x4xf32>
      %c0_83 = arith.constant 0 : index
      %c0_84 = arith.constant 0 : index
      %234 = vector.load %arg6[%c0_83, %c0_84] : memref<2x4xf32, #tpu.memory_space<vmem>>, vector<2x4xf32>
      tpu.vector_store %arg6[%c0_83, %c0_84], %233 {strides = array<i32>} : memref<2x4xf32, #tpu.memory_space<vmem>>, vector<2x4xf32>,
      %c0_i32_85 = arith.constant 0 : i32
      %235 = vector.broadcast %c0_i32_85 : i32 to vector<2x1xi32>
      %236 = arith.cmpi eq, %126, %235 : vector<2x1xi32>
      %c0_86 = arith.constant 0 : index
      %c0_87 = arith.constant 0 : index
      %237 = vector.load %arg8[%c0_86, %c0_87] : memref<2x4xf32, #tpu.memory_space<vmem>>, vector<2x4xf32>
      %cst_88 = arith.constant 0.000000e+00 : f32
      %238 = vector.shape_cast %236 : vector<2x1xi1> to vector<2x1xi1>
      %239 = vector.broadcast %238 : vector<2x1xi1> to vector<2x4xi1>
      %240 = vector.broadcast %cst_88 : f32 to vector<2x4xf32>
      %241 = arith.select %239, %230, %240 : vector<2x4xi1>, vector<2x4xf32>
      %242 = arith.addf %237, %241 : vector<2x4xf32>
      %c0_89 = arith.constant 0 : index
      %c0_90 = arith.constant 0 : index
      %243 = vector.load %arg8[%c0_89, %c0_90] : memref<2x4xf32, #tpu.memory_space<vmem>>, vector<2x4xf32>
      tpu.vector_store %arg8[%c0_89, %c0_90], %242 {strides = array<i32>} : memref<2x4xf32, #tpu.memory_space<vmem>>, vector<2x4xf32>,
      %c0_91 = arith.constant 0 : index
      %c0_92 = arith.constant 0 : index
      %244 = vector.load %arg9[%c0_91, %c0_92] : memref<2x4xf32, #tpu.memory_space<vmem>>, vector<2x4xf32>
      %c0_93 = arith.constant 0 : index
      %c4_94 = arith.constant 4 : index
      %c0_95 = arith.constant 0 : index
      %245 = vector.load %arg4[%c0_93, %c4_94, %c0_95] : memref<2x8x1xi32, #tpu.memory_space<vmem>>, vector<2x1x1xi32>
      %246 = vector.shape_cast %245 : vector<2x1x1xi32> to vector<2x1xi32>
      %247 = vector.broadcast %246 : vector<2x1xi32> to vector<2x4xi32>
      %248 = arith.cmpi ne, %229, %247 : vector<2x4xi32>
      %249 = vector.broadcast %236 : vector<2x1xi1> to vector<2x4xi1>
      %250 = arith.andi %249, %248 : vector<2x4xi1>
      %cst_96 = arith.constant 1.000000e+00 : f32
      %cst_97 = arith.constant 0.000000e+00 : f32
      %251 = vector.broadcast %cst_96 : f32 to vector<2x4xf32>
      %252 = vector.broadcast %cst_97 : f32 to vector<2x4xf32>
      %253 = arith.select %250, %251, %252 : vector<2x4xi1>, vector<2x4xf32>
      %254 = arith.addf %244, %253 : vector<2x4xf32>
      %c0_98 = arith.constant 0 : index
      %c0_99 = arith.constant 0 : index
      %255 = vector.load %arg9[%c0_98, %c0_99] : memref<2x4xf32, #tpu.memory_space<vmem>>, vector<2x4xf32>
      tpu.vector_store %arg9[%c0_98, %c0_99], %254 {strides = array<i32>} : memref<2x4xf32, #tpu.memory_space<vmem>>, vector<2x4xf32>,
      %c0_100 = arith.constant 0 : index
      %c0_101 = arith.constant 0 : index
      %256 = vector.load %arg7[%c0_100, %c0_101] : memref<2x1xi32, #tpu.memory_space<vmem>>, vector<2x1xi32>
      tpu.vector_store %arg7[%c0_100, %c0_101], %126 {strides = array<i32>} : memref<2x1xi32, #tpu.memory_space<vmem>>, vector<2x1xi32>,
    } else {
    }
    %c8_i32_35 = arith.constant 8 : i32
    %107 = arith.muli %arg1, %c8_i32_35 : i32
    %c5_i32 = arith.constant 5 : i32
    %108 = arith.addi %107, %c5_i32 : i32
    %c8_i32_36 = arith.constant 8 : i32
    %109 = arith.cmpi slt, %108, %c8_i32_36 : i32
    %110 = arith.extui %109 : i1 to i32
    %c0_i32_37 = arith.constant 0 : i32
    %111 = arith.cmpi ne, %110, %c0_i32_37 : i32
    scf.if %111 {
      %c0_46 = arith.constant 0 : index
      %c5 = arith.constant 5 : index
      %c0_47 = arith.constant 0 : index
      %125 = vector.load %arg3[%c0_46, %c5, %c0_47] : memref<2x8x1xi32, #tpu.memory_space<vmem>>, vector<2x1x1xi32>
      %126 = vector.shape_cast %125 : vector<2x1x1xi32> to vector<2x1xi32>
      %c0_48 = arith.constant 0 : index
      %c0_49 = arith.constant 0 : index
      %127 = vector.load %arg7[%c0_48, %c0_49] : memref<2x1xi32, #tpu.memory_space<vmem>>, vector<2x1xi32>
      %c1_i32_50 = arith.constant 1 : i32
      %128 = vector.broadcast %c1_i32_50 : i32 to vector<2x1xi32>
      %129 = arith.cmpi eq, %127, %128 : vector<2x1xi32>
      %c0_51 = arith.constant 0 : index
      %c0_52 = arith.constant 0 : index
      %130 = vector.load %arg6[%c0_51, %c0_52] : memref<2x4xf32, #tpu.memory_space<vmem>>, vector<2x4xf32>
      %131 = vector.extract_strided_slice %78 {offsets = [0, 5, 0], sizes = [2, 1, 4], strides = [1, 1, 1]} : vector<2x8x4xf32> to vector<2x1x4xf32>
      %132 = vector.shape_cast %131 : vector<2x1x4xf32> to vector<2x4xf32>
      %133 = vector.extract_strided_slice %64 {offsets = [0, 5, 0], sizes = [2, 1, 4], strides = [1, 1, 1]} : vector<2x8x4xi32> to vector<2x1x4xi32>
      %134 = vector.shape_cast %133 : vector<2x1x4xi32> to vector<2x4xi32>
      %135 = vector.extract_strided_slice %130 {offsets = [0, 0], sizes = [2, 1], strides = [1, 1]} : vector<2x4xf32> to vector<2x1xf32>
      %136 = vector.broadcast %135 : vector<2x1xf32> to vector<2x4xf32>
      %137 = arith.addf %136, %132 : vector<2x4xf32>
      %138 = vector.extract_strided_slice %130 {offsets = [0, 1], sizes = [2, 1], strides = [1, 1]} : vector<2x4xf32> to vector<2x1xf32>
      %139 = vector.broadcast %138 : vector<2x1xf32> to vector<2x4xf32>
      %140 = arith.addf %139, %132 : vector<2x4xf32>
      %141 = vector.extract_strided_slice %130 {offsets = [0, 2], sizes = [2, 1], strides = [1, 1]} : vector<2x4xf32> to vector<2x1xf32>
      %142 = vector.broadcast %141 : vector<2x1xf32> to vector<2x4xf32>
      %143 = arith.addf %142, %132 : vector<2x4xf32>
      %144 = vector.extract_strided_slice %130 {offsets = [0, 3], sizes = [2, 1], strides = [1, 1]} : vector<2x4xf32> to vector<2x1xf32>
      %145 = vector.broadcast %144 : vector<2x1xf32> to vector<2x4xf32>
      %146 = arith.addf %145, %132 : vector<2x4xf32>
      %147 = tpu.concatenate %137, %140, %143, %146 in 1 : vector<2x4xf32>, vector<2x4xf32>, vector<2x4xf32>, vector<2x4xf32> -> vector<2x16xf32>
      %148 = tpu.concatenate %134, %134, %134, %134 in 1 : vector<2x4xi32>, vector<2x4xi32>, vector<2x4xi32>, vector<2x4xi32> -> vector<2x16xi32>
      %149 = tpu.concatenate %132, %132, %132, %132 in 1 : vector<2x4xf32>, vector<2x4xf32>, vector<2x4xf32>, vector<2x4xf32> -> vector<2x16xf32>
      %cst_53 = arith.constant dense<0xFF800000> : vector<2xf32>
      %150 = vector.multi_reduction <maximumf>, %147, %cst_53 [1] : vector<2x16xf32> to vector<2xf32>
      %151 = vector.shape_cast %150 : vector<2xf32> to vector<2x1xf32>
      %152 = vector.broadcast %151 : vector<2x1xf32> to vector<2x16xf32>
      %153 = arith.cmpf oeq, %147, %152 : vector<2x16xf32>
      %c16_i32 = arith.constant 16 : i32
      %154 = vector.broadcast %c16_i32 : i32 to vector<2x16xi32>
      %155 = arith.select %153, %80, %154 : vector<2x16xi1>, vector<2x16xi32>
      %cst_54 = arith.constant dense<2147483647> : vector<2xi32>
      %156 = vector.multi_reduction <minsi>, %155, %cst_54 [1] : vector<2x16xi32> to vector<2xi32>
      %157 = vector.shape_cast %156 : vector<2xi32> to vector<2x1xi32>
      %158 = vector.broadcast %157 : vector<2x1xi32> to vector<2x16xi32>
      %159 = arith.cmpi eq, %80, %158 : vector<2x16xi32>
      %c32_i32_55 = arith.constant 32 : i32
      %160 = vector.broadcast %c32_i32_55 : i32 to vector<2x16xi32>
      %161 = arith.select %159, %148, %160 : vector<2x16xi1>, vector<2x16xi32>
      %cst_56 = arith.constant dense<2147483647> : vector<2xi32>
      %162 = vector.multi_reduction <minsi>, %161, %cst_56 [1] : vector<2x16xi32> to vector<2xi32>
      %163 = vector.shape_cast %162 : vector<2xi32> to vector<2x1xi32>
      %cst_57 = arith.constant 0.000000e+00 : f32
      %164 = vector.broadcast %cst_57 : f32 to vector<2x16xf32>
      %165 = arith.select %159, %149, %164 : vector<2x16xi1>, vector<2x16xf32>
      %cst_58 = arith.constant dense<0.000000e+00> : vector<2xf32>
      %166 = vector.multi_reduction <add>, %165, %cst_58 [1] : vector<2x16xf32> to vector<2xf32>
      %167 = vector.shape_cast %166 : vector<2xf32> to vector<2x1xf32>
      %cst_59 = arith.constant 0xFF800000 : f32
      %168 = vector.broadcast %cst_59 : f32 to vector<2x16xf32>
      %169 = arith.select %159, %168, %147 : vector<2x16xi1>, vector<2x16xf32>
      %cst_60 = arith.constant dense<0xFF800000> : vector<2xf32>
      %170 = vector.multi_reduction <maximumf>, %169, %cst_60 [1] : vector<2x16xf32> to vector<2xf32>
      %171 = vector.shape_cast %170 : vector<2xf32> to vector<2x1xf32>
      %172 = vector.broadcast %171 : vector<2x1xf32> to vector<2x16xf32>
      %173 = arith.cmpf oeq, %169, %172 : vector<2x16xf32>
      %c16_i32_61 = arith.constant 16 : i32
      %174 = vector.broadcast %c16_i32_61 : i32 to vector<2x16xi32>
      %175 = arith.select %173, %80, %174 : vector<2x16xi1>, vector<2x16xi32>
      %cst_62 = arith.constant dense<2147483647> : vector<2xi32>
      %176 = vector.multi_reduction <minsi>, %175, %cst_62 [1] : vector<2x16xi32> to vector<2xi32>
      %177 = vector.shape_cast %176 : vector<2xi32> to vector<2x1xi32>
      %178 = vector.broadcast %177 : vector<2x1xi32> to vector<2x16xi32>
      %179 = arith.cmpi eq, %80, %178 : vector<2x16xi32>
      %c32_i32_63 = arith.constant 32 : i32
      %180 = vector.broadcast %c32_i32_63 : i32 to vector<2x16xi32>
      %181 = arith.select %179, %148, %180 : vector<2x16xi1>, vector<2x16xi32>
      %cst_64 = arith.constant dense<2147483647> : vector<2xi32>
      %182 = vector.multi_reduction <minsi>, %181, %cst_64 [1] : vector<2x16xi32> to vector<2xi32>
      %183 = vector.shape_cast %182 : vector<2xi32> to vector<2x1xi32>
      %cst_65 = arith.constant 0.000000e+00 : f32
      %184 = vector.broadcast %cst_65 : f32 to vector<2x16xf32>
      %185 = arith.select %179, %149, %184 : vector<2x16xi1>, vector<2x16xf32>
      %cst_66 = arith.constant dense<0.000000e+00> : vector<2xf32>
      %186 = vector.multi_reduction <add>, %185, %cst_66 [1] : vector<2x16xf32> to vector<2xf32>
      %187 = vector.shape_cast %186 : vector<2xf32> to vector<2x1xf32>
      %cst_67 = arith.constant 0xFF800000 : f32
      %188 = vector.broadcast %cst_67 : f32 to vector<2x16xf32>
      %189 = arith.select %179, %188, %169 : vector<2x16xi1>, vector<2x16xf32>
      %cst_68 = arith.constant dense<0xFF800000> : vector<2xf32>
      %190 = vector.multi_reduction <maximumf>, %189, %cst_68 [1] : vector<2x16xf32> to vector<2xf32>
      %191 = vector.shape_cast %190 : vector<2xf32> to vector<2x1xf32>
      %192 = vector.broadcast %191 : vector<2x1xf32> to vector<2x16xf32>
      %193 = arith.cmpf oeq, %189, %192 : vector<2x16xf32>
      %c16_i32_69 = arith.constant 16 : i32
      %194 = vector.broadcast %c16_i32_69 : i32 to vector<2x16xi32>
      %195 = arith.select %193, %80, %194 : vector<2x16xi1>, vector<2x16xi32>
      %cst_70 = arith.constant dense<2147483647> : vector<2xi32>
      %196 = vector.multi_reduction <minsi>, %195, %cst_70 [1] : vector<2x16xi32> to vector<2xi32>
      %197 = vector.shape_cast %196 : vector<2xi32> to vector<2x1xi32>
      %198 = vector.broadcast %197 : vector<2x1xi32> to vector<2x16xi32>
      %199 = arith.cmpi eq, %80, %198 : vector<2x16xi32>
      %c32_i32_71 = arith.constant 32 : i32
      %200 = vector.broadcast %c32_i32_71 : i32 to vector<2x16xi32>
      %201 = arith.select %199, %148, %200 : vector<2x16xi1>, vector<2x16xi32>
      %cst_72 = arith.constant dense<2147483647> : vector<2xi32>
      %202 = vector.multi_reduction <minsi>, %201, %cst_72 [1] : vector<2x16xi32> to vector<2xi32>
      %203 = vector.shape_cast %202 : vector<2xi32> to vector<2x1xi32>
      %cst_73 = arith.constant 0.000000e+00 : f32
      %204 = vector.broadcast %cst_73 : f32 to vector<2x16xf32>
      %205 = arith.select %199, %149, %204 : vector<2x16xi1>, vector<2x16xf32>
      %cst_74 = arith.constant dense<0.000000e+00> : vector<2xf32>
      %206 = vector.multi_reduction <add>, %205, %cst_74 [1] : vector<2x16xf32> to vector<2xf32>
      %207 = vector.shape_cast %206 : vector<2xf32> to vector<2x1xf32>
      %cst_75 = arith.constant 0xFF800000 : f32
      %208 = vector.broadcast %cst_75 : f32 to vector<2x16xf32>
      %209 = arith.select %199, %208, %189 : vector<2x16xi1>, vector<2x16xf32>
      %cst_76 = arith.constant dense<0xFF800000> : vector<2xf32>
      %210 = vector.multi_reduction <maximumf>, %209, %cst_76 [1] : vector<2x16xf32> to vector<2xf32>
      %211 = vector.shape_cast %210 : vector<2xf32> to vector<2x1xf32>
      %212 = vector.broadcast %211 : vector<2x1xf32> to vector<2x16xf32>
      %213 = arith.cmpf oeq, %209, %212 : vector<2x16xf32>
      %c16_i32_77 = arith.constant 16 : i32
      %214 = vector.broadcast %c16_i32_77 : i32 to vector<2x16xi32>
      %215 = arith.select %213, %80, %214 : vector<2x16xi1>, vector<2x16xi32>
      %cst_78 = arith.constant dense<2147483647> : vector<2xi32>
      %216 = vector.multi_reduction <minsi>, %215, %cst_78 [1] : vector<2x16xi32> to vector<2xi32>
      %217 = vector.shape_cast %216 : vector<2xi32> to vector<2x1xi32>
      %218 = vector.broadcast %217 : vector<2x1xi32> to vector<2x16xi32>
      %219 = arith.cmpi eq, %80, %218 : vector<2x16xi32>
      %c32_i32_79 = arith.constant 32 : i32
      %220 = vector.broadcast %c32_i32_79 : i32 to vector<2x16xi32>
      %221 = arith.select %219, %148, %220 : vector<2x16xi1>, vector<2x16xi32>
      %cst_80 = arith.constant dense<2147483647> : vector<2xi32>
      %222 = vector.multi_reduction <minsi>, %221, %cst_80 [1] : vector<2x16xi32> to vector<2xi32>
      %223 = vector.shape_cast %222 : vector<2xi32> to vector<2x1xi32>
      %cst_81 = arith.constant 0.000000e+00 : f32
      %224 = vector.broadcast %cst_81 : f32 to vector<2x16xf32>
      %225 = arith.select %219, %149, %224 : vector<2x16xi1>, vector<2x16xf32>
      %cst_82 = arith.constant dense<0.000000e+00> : vector<2xf32>
      %226 = vector.multi_reduction <add>, %225, %cst_82 [1] : vector<2x16xf32> to vector<2xf32>
      %227 = vector.shape_cast %226 : vector<2xf32> to vector<2x1xf32>
      %228 = tpu.concatenate %151, %171, %191, %211 in 1 : vector<2x1xf32>, vector<2x1xf32>, vector<2x1xf32>, vector<2x1xf32> -> vector<2x4xf32>
      %229 = tpu.concatenate %163, %183, %203, %223 in 1 : vector<2x1xi32>, vector<2x1xi32>, vector<2x1xi32>, vector<2x1xi32> -> vector<2x4xi32>
      %230 = tpu.concatenate %167, %187, %207, %227 in 1 : vector<2x1xf32>, vector<2x1xf32>, vector<2x1xf32>, vector<2x1xf32> -> vector<2x4xf32>
      %231 = vector.shape_cast %129 : vector<2x1xi1> to vector<2x1xi1>
      %232 = vector.broadcast %231 : vector<2x1xi1> to vector<2x4xi1>
      %233 = arith.select %232, %130, %228 : vector<2x4xi1>, vector<2x4xf32>
      %c0_83 = arith.constant 0 : index
      %c0_84 = arith.constant 0 : index
      %234 = vector.load %arg6[%c0_83, %c0_84] : memref<2x4xf32, #tpu.memory_space<vmem>>, vector<2x4xf32>
      tpu.vector_store %arg6[%c0_83, %c0_84], %233 {strides = array<i32>} : memref<2x4xf32, #tpu.memory_space<vmem>>, vector<2x4xf32>,
      %c0_i32_85 = arith.constant 0 : i32
      %235 = vector.broadcast %c0_i32_85 : i32 to vector<2x1xi32>
      %236 = arith.cmpi eq, %126, %235 : vector<2x1xi32>
      %c0_86 = arith.constant 0 : index
      %c0_87 = arith.constant 0 : index
      %237 = vector.load %arg8[%c0_86, %c0_87] : memref<2x4xf32, #tpu.memory_space<vmem>>, vector<2x4xf32>
      %cst_88 = arith.constant 0.000000e+00 : f32
      %238 = vector.shape_cast %236 : vector<2x1xi1> to vector<2x1xi1>
      %239 = vector.broadcast %238 : vector<2x1xi1> to vector<2x4xi1>
      %240 = vector.broadcast %cst_88 : f32 to vector<2x4xf32>
      %241 = arith.select %239, %230, %240 : vector<2x4xi1>, vector<2x4xf32>
      %242 = arith.addf %237, %241 : vector<2x4xf32>
      %c0_89 = arith.constant 0 : index
      %c0_90 = arith.constant 0 : index
      %243 = vector.load %arg8[%c0_89, %c0_90] : memref<2x4xf32, #tpu.memory_space<vmem>>, vector<2x4xf32>
      tpu.vector_store %arg8[%c0_89, %c0_90], %242 {strides = array<i32>} : memref<2x4xf32, #tpu.memory_space<vmem>>, vector<2x4xf32>,
      %c0_91 = arith.constant 0 : index
      %c0_92 = arith.constant 0 : index
      %244 = vector.load %arg9[%c0_91, %c0_92] : memref<2x4xf32, #tpu.memory_space<vmem>>, vector<2x4xf32>
      %c0_93 = arith.constant 0 : index
      %c5_94 = arith.constant 5 : index
      %c0_95 = arith.constant 0 : index
      %245 = vector.load %arg4[%c0_93, %c5_94, %c0_95] : memref<2x8x1xi32, #tpu.memory_space<vmem>>, vector<2x1x1xi32>
      %246 = vector.shape_cast %245 : vector<2x1x1xi32> to vector<2x1xi32>
      %247 = vector.broadcast %246 : vector<2x1xi32> to vector<2x4xi32>
      %248 = arith.cmpi ne, %229, %247 : vector<2x4xi32>
      %249 = vector.broadcast %236 : vector<2x1xi1> to vector<2x4xi1>
      %250 = arith.andi %249, %248 : vector<2x4xi1>
      %cst_96 = arith.constant 1.000000e+00 : f32
      %cst_97 = arith.constant 0.000000e+00 : f32
      %251 = vector.broadcast %cst_96 : f32 to vector<2x4xf32>
      %252 = vector.broadcast %cst_97 : f32 to vector<2x4xf32>
      %253 = arith.select %250, %251, %252 : vector<2x4xi1>, vector<2x4xf32>
      %254 = arith.addf %244, %253 : vector<2x4xf32>
      %c0_98 = arith.constant 0 : index
      %c0_99 = arith.constant 0 : index
      %255 = vector.load %arg9[%c0_98, %c0_99] : memref<2x4xf32, #tpu.memory_space<vmem>>, vector<2x4xf32>
      tpu.vector_store %arg9[%c0_98, %c0_99], %254 {strides = array<i32>} : memref<2x4xf32, #tpu.memory_space<vmem>>, vector<2x4xf32>,
      %c0_100 = arith.constant 0 : index
      %c0_101 = arith.constant 0 : index
      %256 = vector.load %arg7[%c0_100, %c0_101] : memref<2x1xi32, #tpu.memory_space<vmem>>, vector<2x1xi32>
      tpu.vector_store %arg7[%c0_100, %c0_101], %126 {strides = array<i32>} : memref<2x1xi32, #tpu.memory_space<vmem>>, vector<2x1xi32>,
    } else {
    }
    %c8_i32_38 = arith.constant 8 : i32
    %112 = arith.muli %arg1, %c8_i32_38 : i32
    %c6_i32 = arith.constant 6 : i32
    %113 = arith.addi %112, %c6_i32 : i32
    %c8_i32_39 = arith.constant 8 : i32
    %114 = arith.cmpi slt, %113, %c8_i32_39 : i32
    %115 = arith.extui %114 : i1 to i32
    %c0_i32_40 = arith.constant 0 : i32
    %116 = arith.cmpi ne, %115, %c0_i32_40 : i32
    scf.if %116 {
      %c0_46 = arith.constant 0 : index
      %c6 = arith.constant 6 : index
      %c0_47 = arith.constant 0 : index
      %125 = vector.load %arg3[%c0_46, %c6, %c0_47] : memref<2x8x1xi32, #tpu.memory_space<vmem>>, vector<2x1x1xi32>
      %126 = vector.shape_cast %125 : vector<2x1x1xi32> to vector<2x1xi32>
      %c0_48 = arith.constant 0 : index
      %c0_49 = arith.constant 0 : index
      %127 = vector.load %arg7[%c0_48, %c0_49] : memref<2x1xi32, #tpu.memory_space<vmem>>, vector<2x1xi32>
      %c1_i32_50 = arith.constant 1 : i32
      %128 = vector.broadcast %c1_i32_50 : i32 to vector<2x1xi32>
      %129 = arith.cmpi eq, %127, %128 : vector<2x1xi32>
      %c0_51 = arith.constant 0 : index
      %c0_52 = arith.constant 0 : index
      %130 = vector.load %arg6[%c0_51, %c0_52] : memref<2x4xf32, #tpu.memory_space<vmem>>, vector<2x4xf32>
      %131 = vector.extract_strided_slice %78 {offsets = [0, 6, 0], sizes = [2, 1, 4], strides = [1, 1, 1]} : vector<2x8x4xf32> to vector<2x1x4xf32>
      %132 = vector.shape_cast %131 : vector<2x1x4xf32> to vector<2x4xf32>
      %133 = vector.extract_strided_slice %64 {offsets = [0, 6, 0], sizes = [2, 1, 4], strides = [1, 1, 1]} : vector<2x8x4xi32> to vector<2x1x4xi32>
      %134 = vector.shape_cast %133 : vector<2x1x4xi32> to vector<2x4xi32>
      %135 = vector.extract_strided_slice %130 {offsets = [0, 0], sizes = [2, 1], strides = [1, 1]} : vector<2x4xf32> to vector<2x1xf32>
      %136 = vector.broadcast %135 : vector<2x1xf32> to vector<2x4xf32>
      %137 = arith.addf %136, %132 : vector<2x4xf32>
      %138 = vector.extract_strided_slice %130 {offsets = [0, 1], sizes = [2, 1], strides = [1, 1]} : vector<2x4xf32> to vector<2x1xf32>
      %139 = vector.broadcast %138 : vector<2x1xf32> to vector<2x4xf32>
      %140 = arith.addf %139, %132 : vector<2x4xf32>
      %141 = vector.extract_strided_slice %130 {offsets = [0, 2], sizes = [2, 1], strides = [1, 1]} : vector<2x4xf32> to vector<2x1xf32>
      %142 = vector.broadcast %141 : vector<2x1xf32> to vector<2x4xf32>
      %143 = arith.addf %142, %132 : vector<2x4xf32>
      %144 = vector.extract_strided_slice %130 {offsets = [0, 3], sizes = [2, 1], strides = [1, 1]} : vector<2x4xf32> to vector<2x1xf32>
      %145 = vector.broadcast %144 : vector<2x1xf32> to vector<2x4xf32>
      %146 = arith.addf %145, %132 : vector<2x4xf32>
      %147 = tpu.concatenate %137, %140, %143, %146 in 1 : vector<2x4xf32>, vector<2x4xf32>, vector<2x4xf32>, vector<2x4xf32> -> vector<2x16xf32>
      %148 = tpu.concatenate %134, %134, %134, %134 in 1 : vector<2x4xi32>, vector<2x4xi32>, vector<2x4xi32>, vector<2x4xi32> -> vector<2x16xi32>
      %149 = tpu.concatenate %132, %132, %132, %132 in 1 : vector<2x4xf32>, vector<2x4xf32>, vector<2x4xf32>, vector<2x4xf32> -> vector<2x16xf32>
      %cst_53 = arith.constant dense<0xFF800000> : vector<2xf32>
      %150 = vector.multi_reduction <maximumf>, %147, %cst_53 [1] : vector<2x16xf32> to vector<2xf32>
      %151 = vector.shape_cast %150 : vector<2xf32> to vector<2x1xf32>
      %152 = vector.broadcast %151 : vector<2x1xf32> to vector<2x16xf32>
      %153 = arith.cmpf oeq, %147, %152 : vector<2x16xf32>
      %c16_i32 = arith.constant 16 : i32
      %154 = vector.broadcast %c16_i32 : i32 to vector<2x16xi32>
      %155 = arith.select %153, %80, %154 : vector<2x16xi1>, vector<2x16xi32>
      %cst_54 = arith.constant dense<2147483647> : vector<2xi32>
      %156 = vector.multi_reduction <minsi>, %155, %cst_54 [1] : vector<2x16xi32> to vector<2xi32>
      %157 = vector.shape_cast %156 : vector<2xi32> to vector<2x1xi32>
      %158 = vector.broadcast %157 : vector<2x1xi32> to vector<2x16xi32>
      %159 = arith.cmpi eq, %80, %158 : vector<2x16xi32>
      %c32_i32_55 = arith.constant 32 : i32
      %160 = vector.broadcast %c32_i32_55 : i32 to vector<2x16xi32>
      %161 = arith.select %159, %148, %160 : vector<2x16xi1>, vector<2x16xi32>
      %cst_56 = arith.constant dense<2147483647> : vector<2xi32>
      %162 = vector.multi_reduction <minsi>, %161, %cst_56 [1] : vector<2x16xi32> to vector<2xi32>
      %163 = vector.shape_cast %162 : vector<2xi32> to vector<2x1xi32>
      %cst_57 = arith.constant 0.000000e+00 : f32
      %164 = vector.broadcast %cst_57 : f32 to vector<2x16xf32>
      %165 = arith.select %159, %149, %164 : vector<2x16xi1>, vector<2x16xf32>
      %cst_58 = arith.constant dense<0.000000e+00> : vector<2xf32>
      %166 = vector.multi_reduction <add>, %165, %cst_58 [1] : vector<2x16xf32> to vector<2xf32>
      %167 = vector.shape_cast %166 : vector<2xf32> to vector<2x1xf32>
      %cst_59 = arith.constant 0xFF800000 : f32
      %168 = vector.broadcast %cst_59 : f32 to vector<2x16xf32>
      %169 = arith.select %159, %168, %147 : vector<2x16xi1>, vector<2x16xf32>
      %cst_60 = arith.constant dense<0xFF800000> : vector<2xf32>
      %170 = vector.multi_reduction <maximumf>, %169, %cst_60 [1] : vector<2x16xf32> to vector<2xf32>
      %171 = vector.shape_cast %170 : vector<2xf32> to vector<2x1xf32>
      %172 = vector.broadcast %171 : vector<2x1xf32> to vector<2x16xf32>
      %173 = arith.cmpf oeq, %169, %172 : vector<2x16xf32>
      %c16_i32_61 = arith.constant 16 : i32
      %174 = vector.broadcast %c16_i32_61 : i32 to vector<2x16xi32>
      %175 = arith.select %173, %80, %174 : vector<2x16xi1>, vector<2x16xi32>
      %cst_62 = arith.constant dense<2147483647> : vector<2xi32>
      %176 = vector.multi_reduction <minsi>, %175, %cst_62 [1] : vector<2x16xi32> to vector<2xi32>
      %177 = vector.shape_cast %176 : vector<2xi32> to vector<2x1xi32>
      %178 = vector.broadcast %177 : vector<2x1xi32> to vector<2x16xi32>
      %179 = arith.cmpi eq, %80, %178 : vector<2x16xi32>
      %c32_i32_63 = arith.constant 32 : i32
      %180 = vector.broadcast %c32_i32_63 : i32 to vector<2x16xi32>
      %181 = arith.select %179, %148, %180 : vector<2x16xi1>, vector<2x16xi32>
      %cst_64 = arith.constant dense<2147483647> : vector<2xi32>
      %182 = vector.multi_reduction <minsi>, %181, %cst_64 [1] : vector<2x16xi32> to vector<2xi32>
      %183 = vector.shape_cast %182 : vector<2xi32> to vector<2x1xi32>
      %cst_65 = arith.constant 0.000000e+00 : f32
      %184 = vector.broadcast %cst_65 : f32 to vector<2x16xf32>
      %185 = arith.select %179, %149, %184 : vector<2x16xi1>, vector<2x16xf32>
      %cst_66 = arith.constant dense<0.000000e+00> : vector<2xf32>
      %186 = vector.multi_reduction <add>, %185, %cst_66 [1] : vector<2x16xf32> to vector<2xf32>
      %187 = vector.shape_cast %186 : vector<2xf32> to vector<2x1xf32>
      %cst_67 = arith.constant 0xFF800000 : f32
      %188 = vector.broadcast %cst_67 : f32 to vector<2x16xf32>
      %189 = arith.select %179, %188, %169 : vector<2x16xi1>, vector<2x16xf32>
      %cst_68 = arith.constant dense<0xFF800000> : vector<2xf32>
      %190 = vector.multi_reduction <maximumf>, %189, %cst_68 [1] : vector<2x16xf32> to vector<2xf32>
      %191 = vector.shape_cast %190 : vector<2xf32> to vector<2x1xf32>
      %192 = vector.broadcast %191 : vector<2x1xf32> to vector<2x16xf32>
      %193 = arith.cmpf oeq, %189, %192 : vector<2x16xf32>
      %c16_i32_69 = arith.constant 16 : i32
      %194 = vector.broadcast %c16_i32_69 : i32 to vector<2x16xi32>
      %195 = arith.select %193, %80, %194 : vector<2x16xi1>, vector<2x16xi32>
      %cst_70 = arith.constant dense<2147483647> : vector<2xi32>
      %196 = vector.multi_reduction <minsi>, %195, %cst_70 [1] : vector<2x16xi32> to vector<2xi32>
      %197 = vector.shape_cast %196 : vector<2xi32> to vector<2x1xi32>
      %198 = vector.broadcast %197 : vector<2x1xi32> to vector<2x16xi32>
      %199 = arith.cmpi eq, %80, %198 : vector<2x16xi32>
      %c32_i32_71 = arith.constant 32 : i32
      %200 = vector.broadcast %c32_i32_71 : i32 to vector<2x16xi32>
      %201 = arith.select %199, %148, %200 : vector<2x16xi1>, vector<2x16xi32>
      %cst_72 = arith.constant dense<2147483647> : vector<2xi32>
      %202 = vector.multi_reduction <minsi>, %201, %cst_72 [1] : vector<2x16xi32> to vector<2xi32>
      %203 = vector.shape_cast %202 : vector<2xi32> to vector<2x1xi32>
      %cst_73 = arith.constant 0.000000e+00 : f32
      %204 = vector.broadcast %cst_73 : f32 to vector<2x16xf32>
      %205 = arith.select %199, %149, %204 : vector<2x16xi1>, vector<2x16xf32>
      %cst_74 = arith.constant dense<0.000000e+00> : vector<2xf32>
      %206 = vector.multi_reduction <add>, %205, %cst_74 [1] : vector<2x16xf32> to vector<2xf32>
      %207 = vector.shape_cast %206 : vector<2xf32> to vector<2x1xf32>
      %cst_75 = arith.constant 0xFF800000 : f32
      %208 = vector.broadcast %cst_75 : f32 to vector<2x16xf32>
      %209 = arith.select %199, %208, %189 : vector<2x16xi1>, vector<2x16xf32>
      %cst_76 = arith.constant dense<0xFF800000> : vector<2xf32>
      %210 = vector.multi_reduction <maximumf>, %209, %cst_76 [1] : vector<2x16xf32> to vector<2xf32>
      %211 = vector.shape_cast %210 : vector<2xf32> to vector<2x1xf32>
      %212 = vector.broadcast %211 : vector<2x1xf32> to vector<2x16xf32>
      %213 = arith.cmpf oeq, %209, %212 : vector<2x16xf32>
      %c16_i32_77 = arith.constant 16 : i32
      %214 = vector.broadcast %c16_i32_77 : i32 to vector<2x16xi32>
      %215 = arith.select %213, %80, %214 : vector<2x16xi1>, vector<2x16xi32>
      %cst_78 = arith.constant dense<2147483647> : vector<2xi32>
      %216 = vector.multi_reduction <minsi>, %215, %cst_78 [1] : vector<2x16xi32> to vector<2xi32>
      %217 = vector.shape_cast %216 : vector<2xi32> to vector<2x1xi32>
      %218 = vector.broadcast %217 : vector<2x1xi32> to vector<2x16xi32>
      %219 = arith.cmpi eq, %80, %218 : vector<2x16xi32>
      %c32_i32_79 = arith.constant 32 : i32
      %220 = vector.broadcast %c32_i32_79 : i32 to vector<2x16xi32>
      %221 = arith.select %219, %148, %220 : vector<2x16xi1>, vector<2x16xi32>
      %cst_80 = arith.constant dense<2147483647> : vector<2xi32>
      %222 = vector.multi_reduction <minsi>, %221, %cst_80 [1] : vector<2x16xi32> to vector<2xi32>
      %223 = vector.shape_cast %222 : vector<2xi32> to vector<2x1xi32>
      %cst_81 = arith.constant 0.000000e+00 : f32
      %224 = vector.broadcast %cst_81 : f32 to vector<2x16xf32>
      %225 = arith.select %219, %149, %224 : vector<2x16xi1>, vector<2x16xf32>
      %cst_82 = arith.constant dense<0.000000e+00> : vector<2xf32>
      %226 = vector.multi_reduction <add>, %225, %cst_82 [1] : vector<2x16xf32> to vector<2xf32>
      %227 = vector.shape_cast %226 : vector<2xf32> to vector<2x1xf32>
      %228 = tpu.concatenate %151, %171, %191, %211 in 1 : vector<2x1xf32>, vector<2x1xf32>, vector<2x1xf32>, vector<2x1xf32> -> vector<2x4xf32>
      %229 = tpu.concatenate %163, %183, %203, %223 in 1 : vector<2x1xi32>, vector<2x1xi32>, vector<2x1xi32>, vector<2x1xi32> -> vector<2x4xi32>
      %230 = tpu.concatenate %167, %187, %207, %227 in 1 : vector<2x1xf32>, vector<2x1xf32>, vector<2x1xf32>, vector<2x1xf32> -> vector<2x4xf32>
      %231 = vector.shape_cast %129 : vector<2x1xi1> to vector<2x1xi1>
      %232 = vector.broadcast %231 : vector<2x1xi1> to vector<2x4xi1>
      %233 = arith.select %232, %130, %228 : vector<2x4xi1>, vector<2x4xf32>
      %c0_83 = arith.constant 0 : index
      %c0_84 = arith.constant 0 : index
      %234 = vector.load %arg6[%c0_83, %c0_84] : memref<2x4xf32, #tpu.memory_space<vmem>>, vector<2x4xf32>
      tpu.vector_store %arg6[%c0_83, %c0_84], %233 {strides = array<i32>} : memref<2x4xf32, #tpu.memory_space<vmem>>, vector<2x4xf32>,
      %c0_i32_85 = arith.constant 0 : i32
      %235 = vector.broadcast %c0_i32_85 : i32 to vector<2x1xi32>
      %236 = arith.cmpi eq, %126, %235 : vector<2x1xi32>
      %c0_86 = arith.constant 0 : index
      %c0_87 = arith.constant 0 : index
      %237 = vector.load %arg8[%c0_86, %c0_87] : memref<2x4xf32, #tpu.memory_space<vmem>>, vector<2x4xf32>
      %cst_88 = arith.constant 0.000000e+00 : f32
      %238 = vector.shape_cast %236 : vector<2x1xi1> to vector<2x1xi1>
      %239 = vector.broadcast %238 : vector<2x1xi1> to vector<2x4xi1>
      %240 = vector.broadcast %cst_88 : f32 to vector<2x4xf32>
      %241 = arith.select %239, %230, %240 : vector<2x4xi1>, vector<2x4xf32>
      %242 = arith.addf %237, %241 : vector<2x4xf32>
      %c0_89 = arith.constant 0 : index
      %c0_90 = arith.constant 0 : index
      %243 = vector.load %arg8[%c0_89, %c0_90] : memref<2x4xf32, #tpu.memory_space<vmem>>, vector<2x4xf32>
      tpu.vector_store %arg8[%c0_89, %c0_90], %242 {strides = array<i32>} : memref<2x4xf32, #tpu.memory_space<vmem>>, vector<2x4xf32>,
      %c0_91 = arith.constant 0 : index
      %c0_92 = arith.constant 0 : index
      %244 = vector.load %arg9[%c0_91, %c0_92] : memref<2x4xf32, #tpu.memory_space<vmem>>, vector<2x4xf32>
      %c0_93 = arith.constant 0 : index
      %c6_94 = arith.constant 6 : index
      %c0_95 = arith.constant 0 : index
      %245 = vector.load %arg4[%c0_93, %c6_94, %c0_95] : memref<2x8x1xi32, #tpu.memory_space<vmem>>, vector<2x1x1xi32>
      %246 = vector.shape_cast %245 : vector<2x1x1xi32> to vector<2x1xi32>
      %247 = vector.broadcast %246 : vector<2x1xi32> to vector<2x4xi32>
      %248 = arith.cmpi ne, %229, %247 : vector<2x4xi32>
      %249 = vector.broadcast %236 : vector<2x1xi1> to vector<2x4xi1>
      %250 = arith.andi %249, %248 : vector<2x4xi1>
      %cst_96 = arith.constant 1.000000e+00 : f32
      %cst_97 = arith.constant 0.000000e+00 : f32
      %251 = vector.broadcast %cst_96 : f32 to vector<2x4xf32>
      %252 = vector.broadcast %cst_97 : f32 to vector<2x4xf32>
      %253 = arith.select %250, %251, %252 : vector<2x4xi1>, vector<2x4xf32>
      %254 = arith.addf %244, %253 : vector<2x4xf32>
      %c0_98 = arith.constant 0 : index
      %c0_99 = arith.constant 0 : index
      %255 = vector.load %arg9[%c0_98, %c0_99] : memref<2x4xf32, #tpu.memory_space<vmem>>, vector<2x4xf32>
      tpu.vector_store %arg9[%c0_98, %c0_99], %254 {strides = array<i32>} : memref<2x4xf32, #tpu.memory_space<vmem>>, vector<2x4xf32>,
      %c0_100 = arith.constant 0 : index
      %c0_101 = arith.constant 0 : index
      %256 = vector.load %arg7[%c0_100, %c0_101] : memref<2x1xi32, #tpu.memory_space<vmem>>, vector<2x1xi32>
      tpu.vector_store %arg7[%c0_100, %c0_101], %126 {strides = array<i32>} : memref<2x1xi32, #tpu.memory_space<vmem>>, vector<2x1xi32>,
    } else {
    }
    %c8_i32_41 = arith.constant 8 : i32
    %117 = arith.muli %arg1, %c8_i32_41 : i32
    %c7_i32 = arith.constant 7 : i32
    %118 = arith.addi %117, %c7_i32 : i32
    %c8_i32_42 = arith.constant 8 : i32
    %119 = arith.cmpi slt, %118, %c8_i32_42 : i32
    %120 = arith.extui %119 : i1 to i32
    %c0_i32_43 = arith.constant 0 : i32
    %121 = arith.cmpi ne, %120, %c0_i32_43 : i32
    scf.if %121 {
      %c0_46 = arith.constant 0 : index
      %c7 = arith.constant 7 : index
      %c0_47 = arith.constant 0 : index
      %125 = vector.load %arg3[%c0_46, %c7, %c0_47] : memref<2x8x1xi32, #tpu.memory_space<vmem>>, vector<2x1x1xi32>
      %126 = vector.shape_cast %125 : vector<2x1x1xi32> to vector<2x1xi32>
      %c0_48 = arith.constant 0 : index
      %c0_49 = arith.constant 0 : index
      %127 = vector.load %arg7[%c0_48, %c0_49] : memref<2x1xi32, #tpu.memory_space<vmem>>, vector<2x1xi32>
      %c1_i32_50 = arith.constant 1 : i32
      %128 = vector.broadcast %c1_i32_50 : i32 to vector<2x1xi32>
      %129 = arith.cmpi eq, %127, %128 : vector<2x1xi32>
      %c0_51 = arith.constant 0 : index
      %c0_52 = arith.constant 0 : index
      %130 = vector.load %arg6[%c0_51, %c0_52] : memref<2x4xf32, #tpu.memory_space<vmem>>, vector<2x4xf32>
      %131 = vector.extract_strided_slice %78 {offsets = [0, 7, 0], sizes = [2, 1, 4], strides = [1, 1, 1]} : vector<2x8x4xf32> to vector<2x1x4xf32>
      %132 = vector.shape_cast %131 : vector<2x1x4xf32> to vector<2x4xf32>
      %133 = vector.extract_strided_slice %64 {offsets = [0, 7, 0], sizes = [2, 1, 4], strides = [1, 1, 1]} : vector<2x8x4xi32> to vector<2x1x4xi32>
      %134 = vector.shape_cast %133 : vector<2x1x4xi32> to vector<2x4xi32>
      %135 = vector.extract_strided_slice %130 {offsets = [0, 0], sizes = [2, 1], strides = [1, 1]} : vector<2x4xf32> to vector<2x1xf32>
      %136 = vector.broadcast %135 : vector<2x1xf32> to vector<2x4xf32>
      %137 = arith.addf %136, %132 : vector<2x4xf32>
      %138 = vector.extract_strided_slice %130 {offsets = [0, 1], sizes = [2, 1], strides = [1, 1]} : vector<2x4xf32> to vector<2x1xf32>
      %139 = vector.broadcast %138 : vector<2x1xf32> to vector<2x4xf32>
      %140 = arith.addf %139, %132 : vector<2x4xf32>
      %141 = vector.extract_strided_slice %130 {offsets = [0, 2], sizes = [2, 1], strides = [1, 1]} : vector<2x4xf32> to vector<2x1xf32>
      %142 = vector.broadcast %141 : vector<2x1xf32> to vector<2x4xf32>
      %143 = arith.addf %142, %132 : vector<2x4xf32>
      %144 = vector.extract_strided_slice %130 {offsets = [0, 3], sizes = [2, 1], strides = [1, 1]} : vector<2x4xf32> to vector<2x1xf32>
      %145 = vector.broadcast %144 : vector<2x1xf32> to vector<2x4xf32>
      %146 = arith.addf %145, %132 : vector<2x4xf32>
      %147 = tpu.concatenate %137, %140, %143, %146 in 1 : vector<2x4xf32>, vector<2x4xf32>, vector<2x4xf32>, vector<2x4xf32> -> vector<2x16xf32>
      %148 = tpu.concatenate %134, %134, %134, %134 in 1 : vector<2x4xi32>, vector<2x4xi32>, vector<2x4xi32>, vector<2x4xi32> -> vector<2x16xi32>
      %149 = tpu.concatenate %132, %132, %132, %132 in 1 : vector<2x4xf32>, vector<2x4xf32>, vector<2x4xf32>, vector<2x4xf32> -> vector<2x16xf32>
      %cst_53 = arith.constant dense<0xFF800000> : vector<2xf32>
      %150 = vector.multi_reduction <maximumf>, %147, %cst_53 [1] : vector<2x16xf32> to vector<2xf32>
      %151 = vector.shape_cast %150 : vector<2xf32> to vector<2x1xf32>
      %152 = vector.broadcast %151 : vector<2x1xf32> to vector<2x16xf32>
      %153 = arith.cmpf oeq, %147, %152 : vector<2x16xf32>
      %c16_i32 = arith.constant 16 : i32
      %154 = vector.broadcast %c16_i32 : i32 to vector<2x16xi32>
      %155 = arith.select %153, %80, %154 : vector<2x16xi1>, vector<2x16xi32>
      %cst_54 = arith.constant dense<2147483647> : vector<2xi32>
      %156 = vector.multi_reduction <minsi>, %155, %cst_54 [1] : vector<2x16xi32> to vector<2xi32>
      %157 = vector.shape_cast %156 : vector<2xi32> to vector<2x1xi32>
      %158 = vector.broadcast %157 : vector<2x1xi32> to vector<2x16xi32>
      %159 = arith.cmpi eq, %80, %158 : vector<2x16xi32>
      %c32_i32_55 = arith.constant 32 : i32
      %160 = vector.broadcast %c32_i32_55 : i32 to vector<2x16xi32>
      %161 = arith.select %159, %148, %160 : vector<2x16xi1>, vector<2x16xi32>
      %cst_56 = arith.constant dense<2147483647> : vector<2xi32>
      %162 = vector.multi_reduction <minsi>, %161, %cst_56 [1] : vector<2x16xi32> to vector<2xi32>
      %163 = vector.shape_cast %162 : vector<2xi32> to vector<2x1xi32>
      %cst_57 = arith.constant 0.000000e+00 : f32
      %164 = vector.broadcast %cst_57 : f32 to vector<2x16xf32>
      %165 = arith.select %159, %149, %164 : vector<2x16xi1>, vector<2x16xf32>
      %cst_58 = arith.constant dense<0.000000e+00> : vector<2xf32>
      %166 = vector.multi_reduction <add>, %165, %cst_58 [1] : vector<2x16xf32> to vector<2xf32>
      %167 = vector.shape_cast %166 : vector<2xf32> to vector<2x1xf32>
      %cst_59 = arith.constant 0xFF800000 : f32
      %168 = vector.broadcast %cst_59 : f32 to vector<2x16xf32>
      %169 = arith.select %159, %168, %147 : vector<2x16xi1>, vector<2x16xf32>
      %cst_60 = arith.constant dense<0xFF800000> : vector<2xf32>
      %170 = vector.multi_reduction <maximumf>, %169, %cst_60 [1] : vector<2x16xf32> to vector<2xf32>
      %171 = vector.shape_cast %170 : vector<2xf32> to vector<2x1xf32>
      %172 = vector.broadcast %171 : vector<2x1xf32> to vector<2x16xf32>
      %173 = arith.cmpf oeq, %169, %172 : vector<2x16xf32>
      %c16_i32_61 = arith.constant 16 : i32
      %174 = vector.broadcast %c16_i32_61 : i32 to vector<2x16xi32>
      %175 = arith.select %173, %80, %174 : vector<2x16xi1>, vector<2x16xi32>
      %cst_62 = arith.constant dense<2147483647> : vector<2xi32>
      %176 = vector.multi_reduction <minsi>, %175, %cst_62 [1] : vector<2x16xi32> to vector<2xi32>
      %177 = vector.shape_cast %176 : vector<2xi32> to vector<2x1xi32>
      %178 = vector.broadcast %177 : vector<2x1xi32> to vector<2x16xi32>
      %179 = arith.cmpi eq, %80, %178 : vector<2x16xi32>
      %c32_i32_63 = arith.constant 32 : i32
      %180 = vector.broadcast %c32_i32_63 : i32 to vector<2x16xi32>
      %181 = arith.select %179, %148, %180 : vector<2x16xi1>, vector<2x16xi32>
      %cst_64 = arith.constant dense<2147483647> : vector<2xi32>
      %182 = vector.multi_reduction <minsi>, %181, %cst_64 [1] : vector<2x16xi32> to vector<2xi32>
      %183 = vector.shape_cast %182 : vector<2xi32> to vector<2x1xi32>
      %cst_65 = arith.constant 0.000000e+00 : f32
      %184 = vector.broadcast %cst_65 : f32 to vector<2x16xf32>
      %185 = arith.select %179, %149, %184 : vector<2x16xi1>, vector<2x16xf32>
      %cst_66 = arith.constant dense<0.000000e+00> : vector<2xf32>
      %186 = vector.multi_reduction <add>, %185, %cst_66 [1] : vector<2x16xf32> to vector<2xf32>
      %187 = vector.shape_cast %186 : vector<2xf32> to vector<2x1xf32>
      %cst_67 = arith.constant 0xFF800000 : f32
      %188 = vector.broadcast %cst_67 : f32 to vector<2x16xf32>
      %189 = arith.select %179, %188, %169 : vector<2x16xi1>, vector<2x16xf32>
      %cst_68 = arith.constant dense<0xFF800000> : vector<2xf32>
      %190 = vector.multi_reduction <maximumf>, %189, %cst_68 [1] : vector<2x16xf32> to vector<2xf32>
      %191 = vector.shape_cast %190 : vector<2xf32> to vector<2x1xf32>
      %192 = vector.broadcast %191 : vector<2x1xf32> to vector<2x16xf32>
      %193 = arith.cmpf oeq, %189, %192 : vector<2x16xf32>
      %c16_i32_69 = arith.constant 16 : i32
      %194 = vector.broadcast %c16_i32_69 : i32 to vector<2x16xi32>
      %195 = arith.select %193, %80, %194 : vector<2x16xi1>, vector<2x16xi32>
      %cst_70 = arith.constant dense<2147483647> : vector<2xi32>
      %196 = vector.multi_reduction <minsi>, %195, %cst_70 [1] : vector<2x16xi32> to vector<2xi32>
      %197 = vector.shape_cast %196 : vector<2xi32> to vector<2x1xi32>
      %198 = vector.broadcast %197 : vector<2x1xi32> to vector<2x16xi32>
      %199 = arith.cmpi eq, %80, %198 : vector<2x16xi32>
      %c32_i32_71 = arith.constant 32 : i32
      %200 = vector.broadcast %c32_i32_71 : i32 to vector<2x16xi32>
      %201 = arith.select %199, %148, %200 : vector<2x16xi1>, vector<2x16xi32>
      %cst_72 = arith.constant dense<2147483647> : vector<2xi32>
      %202 = vector.multi_reduction <minsi>, %201, %cst_72 [1] : vector<2x16xi32> to vector<2xi32>
      %203 = vector.shape_cast %202 : vector<2xi32> to vector<2x1xi32>
      %cst_73 = arith.constant 0.000000e+00 : f32
      %204 = vector.broadcast %cst_73 : f32 to vector<2x16xf32>
      %205 = arith.select %199, %149, %204 : vector<2x16xi1>, vector<2x16xf32>
      %cst_74 = arith.constant dense<0.000000e+00> : vector<2xf32>
      %206 = vector.multi_reduction <add>, %205, %cst_74 [1] : vector<2x16xf32> to vector<2xf32>
      %207 = vector.shape_cast %206 : vector<2xf32> to vector<2x1xf32>
      %cst_75 = arith.constant 0xFF800000 : f32
      %208 = vector.broadcast %cst_75 : f32 to vector<2x16xf32>
      %209 = arith.select %199, %208, %189 : vector<2x16xi1>, vector<2x16xf32>
      %cst_76 = arith.constant dense<0xFF800000> : vector<2xf32>
      %210 = vector.multi_reduction <maximumf>, %209, %cst_76 [1] : vector<2x16xf32> to vector<2xf32>
      %211 = vector.shape_cast %210 : vector<2xf32> to vector<2x1xf32>
      %212 = vector.broadcast %211 : vector<2x1xf32> to vector<2x16xf32>
      %213 = arith.cmpf oeq, %209, %212 : vector<2x16xf32>
      %c16_i32_77 = arith.constant 16 : i32
      %214 = vector.broadcast %c16_i32_77 : i32 to vector<2x16xi32>
      %215 = arith.select %213, %80, %214 : vector<2x16xi1>, vector<2x16xi32>
      %cst_78 = arith.constant dense<2147483647> : vector<2xi32>
      %216 = vector.multi_reduction <minsi>, %215, %cst_78 [1] : vector<2x16xi32> to vector<2xi32>
      %217 = vector.shape_cast %216 : vector<2xi32> to vector<2x1xi32>
      %218 = vector.broadcast %217 : vector<2x1xi32> to vector<2x16xi32>
      %219 = arith.cmpi eq, %80, %218 : vector<2x16xi32>
      %c32_i32_79 = arith.constant 32 : i32
      %220 = vector.broadcast %c32_i32_79 : i32 to vector<2x16xi32>
      %221 = arith.select %219, %148, %220 : vector<2x16xi1>, vector<2x16xi32>
      %cst_80 = arith.constant dense<2147483647> : vector<2xi32>
      %222 = vector.multi_reduction <minsi>, %221, %cst_80 [1] : vector<2x16xi32> to vector<2xi32>
      %223 = vector.shape_cast %222 : vector<2xi32> to vector<2x1xi32>
      %cst_81 = arith.constant 0.000000e+00 : f32
      %224 = vector.broadcast %cst_81 : f32 to vector<2x16xf32>
      %225 = arith.select %219, %149, %224 : vector<2x16xi1>, vector<2x16xf32>
      %cst_82 = arith.constant dense<0.000000e+00> : vector<2xf32>
      %226 = vector.multi_reduction <add>, %225, %cst_82 [1] : vector<2x16xf32> to vector<2xf32>
      %227 = vector.shape_cast %226 : vector<2xf32> to vector<2x1xf32>
      %228 = tpu.concatenate %151, %171, %191, %211 in 1 : vector<2x1xf32>, vector<2x1xf32>, vector<2x1xf32>, vector<2x1xf32> -> vector<2x4xf32>
      %229 = tpu.concatenate %163, %183, %203, %223 in 1 : vector<2x1xi32>, vector<2x1xi32>, vector<2x1xi32>, vector<2x1xi32> -> vector<2x4xi32>
      %230 = tpu.concatenate %167, %187, %207, %227 in 1 : vector<2x1xf32>, vector<2x1xf32>, vector<2x1xf32>, vector<2x1xf32> -> vector<2x4xf32>
      %231 = vector.shape_cast %129 : vector<2x1xi1> to vector<2x1xi1>
      %232 = vector.broadcast %231 : vector<2x1xi1> to vector<2x4xi1>
      %233 = arith.select %232, %130, %228 : vector<2x4xi1>, vector<2x4xf32>
      %c0_83 = arith.constant 0 : index
      %c0_84 = arith.constant 0 : index
      %234 = vector.load %arg6[%c0_83, %c0_84] : memref<2x4xf32, #tpu.memory_space<vmem>>, vector<2x4xf32>
      tpu.vector_store %arg6[%c0_83, %c0_84], %233 {strides = array<i32>} : memref<2x4xf32, #tpu.memory_space<vmem>>, vector<2x4xf32>,
      %c0_i32_85 = arith.constant 0 : i32
      %235 = vector.broadcast %c0_i32_85 : i32 to vector<2x1xi32>
      %236 = arith.cmpi eq, %126, %235 : vector<2x1xi32>
      %c0_86 = arith.constant 0 : index
      %c0_87 = arith.constant 0 : index
      %237 = vector.load %arg8[%c0_86, %c0_87] : memref<2x4xf32, #tpu.memory_space<vmem>>, vector<2x4xf32>
      %cst_88 = arith.constant 0.000000e+00 : f32
      %238 = vector.shape_cast %236 : vector<2x1xi1> to vector<2x1xi1>
      %239 = vector.broadcast %238 : vector<2x1xi1> to vector<2x4xi1>
      %240 = vector.broadcast %cst_88 : f32 to vector<2x4xf32>
      %241 = arith.select %239, %230, %240 : vector<2x4xi1>, vector<2x4xf32>
      %242 = arith.addf %237, %241 : vector<2x4xf32>
      %c0_89 = arith.constant 0 : index
      %c0_90 = arith.constant 0 : index
      %243 = vector.load %arg8[%c0_89, %c0_90] : memref<2x4xf32, #tpu.memory_space<vmem>>, vector<2x4xf32>
      tpu.vector_store %arg8[%c0_89, %c0_90], %242 {strides = array<i32>} : memref<2x4xf32, #tpu.memory_space<vmem>>, vector<2x4xf32>,
      %c0_91 = arith.constant 0 : index
      %c0_92 = arith.constant 0 : index
      %244 = vector.load %arg9[%c0_91, %c0_92] : memref<2x4xf32, #tpu.memory_space<vmem>>, vector<2x4xf32>
      %c0_93 = arith.constant 0 : index
      %c7_94 = arith.constant 7 : index
      %c0_95 = arith.constant 0 : index
      %245 = vector.load %arg4[%c0_93, %c7_94, %c0_95] : memref<2x8x1xi32, #tpu.memory_space<vmem>>, vector<2x1x1xi32>
      %246 = vector.shape_cast %245 : vector<2x1x1xi32> to vector<2x1xi32>
      %247 = vector.broadcast %246 : vector<2x1xi32> to vector<2x4xi32>
      %248 = arith.cmpi ne, %229, %247 : vector<2x4xi32>
      %249 = vector.broadcast %236 : vector<2x1xi1> to vector<2x4xi1>
      %250 = arith.andi %249, %248 : vector<2x4xi1>
      %cst_96 = arith.constant 1.000000e+00 : f32
      %cst_97 = arith.constant 0.000000e+00 : f32
      %251 = vector.broadcast %cst_96 : f32 to vector<2x4xf32>
      %252 = vector.broadcast %cst_97 : f32 to vector<2x4xf32>
      %253 = arith.select %250, %251, %252 : vector<2x4xi1>, vector<2x4xf32>
      %254 = arith.addf %244, %253 : vector<2x4xf32>
      %c0_98 = arith.constant 0 : index
      %c0_99 = arith.constant 0 : index
      %255 = vector.load %arg9[%c0_98, %c0_99] : memref<2x4xf32, #tpu.memory_space<vmem>>, vector<2x4xf32>
      tpu.vector_store %arg9[%c0_98, %c0_99], %254 {strides = array<i32>} : memref<2x4xf32, #tpu.memory_space<vmem>>, vector<2x4xf32>,
      %c0_100 = arith.constant 0 : index
      %c0_101 = arith.constant 0 : index
      %256 = vector.load %arg7[%c0_100, %c0_101] : memref<2x1xi32, #tpu.memory_space<vmem>>, vector<2x1xi32>
      tpu.vector_store %arg7[%c0_100, %c0_101], %126 {strides = array<i32>} : memref<2x1xi32, #tpu.memory_space<vmem>>, vector<2x1xi32>,
    } else {
    }
    %c0_i32_44 = arith.constant 0 : i32
    %122 = arith.cmpi eq, %arg1, %c0_i32_44 : i32
    %123 = arith.extui %122 : i1 to i32
    %c0_i32_45 = arith.constant 0 : i32
    %124 = arith.cmpi ne, %123, %c0_i32_45 : i32
    scf.if %124 {
      %c0_46 = arith.constant 0 : index
      %c0_47 = arith.constant 0 : index
      %125 = vector.load %arg8[%c0_46, %c0_47] : memref<2x4xf32, #tpu.memory_space<vmem>>, vector<2x4xf32>
      %c0_48 = arith.constant 0 : index
      %c0_49 = arith.constant 0 : index
      %126 = vector.load %arg9[%c0_48, %c0_49] : memref<2x4xf32, #tpu.memory_space<vmem>>, vector<2x4xf32>
      %cst_50 = arith.constant dense<0xFF800000> : vector<2xf32>
      %127 = vector.multi_reduction <maximumf>, %125, %cst_50 [1] : vector<2x4xf32> to vector<2xf32>
      %128 = vector.shape_cast %127 : vector<2xf32> to vector<2x1xf32>
      %129 = vector.broadcast %128 : vector<2x1xf32> to vector<2x4xf32>
      %130 = arith.subf %125, %129 : vector<2x4xf32>
      %131 = math.exp %130 : vector<2x4xf32>
      %cst_51 = arith.constant dense<0.000000e+00> : vector<2xf32>
      %132 = vector.multi_reduction <add>, %131, %cst_51 [1] : vector<2x4xf32> to vector<2xf32>
      %133 = vector.shape_cast %132 : vector<2xf32> to vector<2x1xf32>
      %134 = math.log %133 : vector<2x1xf32>
      %135 = arith.addf %128, %134 : vector<2x1xf32>
      %136 = vector.broadcast %135 : vector<2x1xf32> to vector<2x4xf32>
      %137 = arith.subf %125, %136 : vector<2x4xf32>
      %138 = math.exp %137 : vector<2x4xf32>
      %cst_52 = arith.constant dense<0.000000e+00> : vector<2xf32>
      %139 = vector.multi_reduction <add>, %126, %cst_52 [1] : vector<2x4xf32> to vector<2xf32>
      %140 = vector.shape_cast %139 : vector<2xf32> to vector<2x1xf32>
      %cst_53 = arith.constant 4.000000e+00 : f32
      %141 = vector.broadcast %cst_53 : f32 to vector<2x1xf32>
      %142 = arith.divf %140, %141 : vector<2x1xf32>
      %143 = vector.broadcast %142 : vector<2x1xf32> to vector<2x4xf32>
      %144 = arith.subf %126, %143 : vector<2x4xf32>
      %145 = arith.mulf %138, %144 : vector<2x4xf32>
      %cst_54 = arith.constant dense<0.000000e+00> : vector<2xf32>
      %146 = vector.multi_reduction <add>, %145, %cst_54 [1] : vector<2x4xf32> to vector<2xf32>
      %147 = vector.shape_cast %146 : vector<2xf32> to vector<2x1xf32>
      %c0_55 = arith.constant 0 : index
      %c0_56 = arith.constant 0 : index
      %148 = vector.load %arg5[%c0_55, %c0_56] : memref<2x1xf32, #tpu.memory_space<vmem>>, vector<2x1xf32>
      tpu.vector_store %arg5[%c0_55, %c0_56], %147 {strides = array<i32>} : memref<2x1xf32, #tpu.memory_space<vmem>>, vector<2x1xf32>,
    } else {
    }
    return
  }
  func.func @transform_0(%arg0: i32, %arg1: i32) -> (i32, i32, i32) {
    %c0_i32 = arith.constant 0 : i32
    %c0_i32_0 = arith.constant 0 : i32
    return %arg0, %arg1, %c0_i32 : i32, i32, i32
  }
  func.func @transform_1(%arg0: i32, %arg1: i32) -> (i32, i32, i32) {
    %c0_i32 = arith.constant 0 : i32
    %c0_i32_0 = arith.constant 0 : i32
    return %arg0, %arg1, %c0_i32 : i32, i32, i32
  }
  func.func @transform_2(%arg0: i32, %arg1: i32) -> (i32, i32, i32) {
    %c0_i32 = arith.constant 0 : i32
    %c0_i32_0 = arith.constant 0 : i32
    return %arg0, %arg1, %c0_i32 : i32, i32, i32
  }
  func.func @transform_3(%arg0: i32, %arg1: i32) -> (i32, i32) {
    %c0_i32 = arith.constant 0 : i32
    %c0_i32_0 = arith.constant 0 : i32
    return %arg0, %c0_i32 : i32, i32
  }
}

</mosaic_0001>

<llo_original>
// kernel: _mwer_forward.1
$region0: #{_mwer_forward.1}
  #allocation0 [shape = 'u32[]', space=smem, size = 0x4, offset = 0x4, fixed_abs, tag = 'smem constant byte address 0x4 - core index']
  #allocation1 [shape = 'u32[144,128]{1,0:T(1,128)}', space=vmem, size = 0x12000, scoped, tag = 'internal scratch']
  #allocation2 [shape = 'f32[2,4]{1,0:T(2,128)}', space=vmem, size = 0x400, scoped, tag = 'scratch operand']
  #allocation3 [shape = 's32[2,1]{1,0:T(2,128)}', space=vmem, size = 0x400, scoped, tag = 'scratch operand']
  #allocation4 [shape = 'f32[2,4]{1,0:T(2,128)}', space=vmem, size = 0x400, scoped, tag = 'scratch operand']
  #allocation5 [shape = 'f32[2,4]{1,0:T(2,128)}', space=vmem, size = 0x400, scoped, tag = 'scratch operand']
  %s0 = inlined_call_operand.vmem [shape: f32[2,8,32], index: 0, kind: input, shape index: {}]
  %s1 = inlined_call_operand.vmem [shape: s32[2,8,1], index: 1, kind: input, shape index: {}]
  %s2 = inlined_call_operand.vmem [shape: s32[2,8,1], index: 2, kind: input, shape index: {}]
  %s3 = inlined_call_operand.vmem [shape: f32[2,1], index: 3, kind: output, shape index: {}]
  %s4 = sld [smem:[#allocation0]]
  $region62: #{_mwer_forward.1} parent=0
    _
  %s6 = ssub.s32 1, %s4
  %s7 = scalar_select 0, %s6, %s4
  // Predicated region
  $region2: #{_mwer_forward.1} parent=0 // pred_check
    _
  $region3: #{_mwer_forward.1} parent=0 // pred_check_branch
    %9 = sbr.rel (0) target = $region5
  $region4: #{_mwer_forward.1} parent=0 // pred_region
    _
  $region5: #{_mwer_forward.1} parent=0 // pred_fallthru
    _
  // Predicated region
  $region6: #{_mwer_forward.1} parent=0 // pred_check
    _
  $region7: #{_mwer_forward.1} parent=0 // pred_check_branch
    %11 = sbr.rel (0) target = $region9
  $region8: #{_mwer_forward.1} parent=0 // pred_region
    _
  $region9: #{_mwer_forward.1} parent=0 // pred_fallthru
    _
  // Predicated region
  $region10: #{_mwer_forward.1} parent=0 // pred_check
    _
  $region11: #{_mwer_forward.1} parent=0 // pred_check_branch
    %13 = sbr.rel (0) target = $region13
  $region12: #{_mwer_forward.1} parent=0 // pred_region
    _
  $region13: #{_mwer_forward.1} parent=0 // pred_fallthru
    _
  %v14 = vld [vmem:[%s0] sm:$0xff]
  %v15 = vld [vmem:[%s0 + $0x8] sm:$0xff]
  %v16 = vlaneseq
  %v17 = vand.u32 %v16, 127
  %20 = vrot.lane.b32.xlu0 %v14, 4
  %v21 = vpop.permute.xlu0 %20
  %22 = vrot.lane.b32.xlu0 %v15, 4
  %v23 = vpop.permute.xlu0 %22
  %vm26 = vcmask 31744
  %v27 = vsel %vm26, -inf, %v21
  %v28 = vsel %vm26, -inf, %v23
  %29 = vrot.lane.b32.xlu0 %v17, 4
  %v30 = vpop.permute.xlu0 %29
  %v31 = vsel %vm26, 32, %v30
  %vm32 = vcmask 293888
  %v33 = vsel %vm32, %v27, -inf
  %34 = vmax.xlane.f32.xlu0 %v33
  %v35 = vpop.xlane.xlu0 %34
  %v36 = vsel %vm32, %v28, -inf
  %37 = vmax.xlane.f32.xlu0 %v36
  %v38 = vpop.xlane.xlu0 %37
  %vm39 = vcmp.eq.f32.partialorder %v27, %v35
  %vm40 = vcmp.eq.f32.partialorder %v28, %v38
  %v41 = vsel %vm39, %v31, 32
  %v42 = vsel %vm40, %v31, 32
  %v43 = vsel %vm32, %v41, 2147483647
  %v44 = vand.u32 %v43, 65535
  %v45 = vshra.s32 %v43, 16
  %v46 = vcvt.s32.f32 %v44
  %v47 = vcvt.s32.f32 %v45
  %48 = vmin.xlane.f32.xlu0 %v47
  %v49 = vpop.xlane.xlu0 %48
  %vm50 = vcmp.eq.f32.partialorder %v47, %v49
  %v51 = vsel %vm50, %v46, inf
  %52 = vmin.xlane.f32.xlu0 %v51
  %v53 = vpop.xlane.xlu0 %52
  %v54 = vcvt.f32.s32 %v53
  %v55 = vcvt.f32.s32 %v49
  %v56 = vshll.u32 %v55, 16
  %v57 = vadd.s32 %v56, %v54
  %v58 = vsel %vm32, %v42, 2147483647
  %v59 = vand.u32 %v58, 65535
  %v60 = vshra.s32 %v58, 16
  %v61 = vcvt.s32.f32 %v59
  %v62 = vcvt.s32.f32 %v60
  %63 = vmin.xlane.f32.xlu0 %v62
  %v64 = vpop.xlane.xlu0 %63
  %vm65 = vcmp.eq.f32.partialorder %v62, %v64
  %v66 = vsel %vm65, %v61, inf
  %67 = vmin.xlane.f32.xlu0 %v66
  %v68 = vpop.xlane.xlu0 %67
  %v69 = vcvt.f32.s32 %v68
  %v70 = vcvt.f32.s32 %v64
  %v71 = vshll.u32 %v70, 16
  %v72 = vadd.s32 %v71, %v69
  %vm73 = vcmp.eq.s32.totalorder %v31, %v57
  %vm74 = vcmp.eq.s32.totalorder %v31, %v72
  %vm75 = vmand %vm39, %vm73
  %vm76 = vmand %vm40, %vm74
  %v77 = vsel %vm75, -inf, %v27
  %v78 = vsel %vm76, -inf, %v28
  %v79 = vsel %vm32, %v77, -inf
  %80 = vmax.xlane.f32.xlu0 %v79
  %v81 = vpop.xlane.xlu0 %80
  %v82 = vsel %vm32, %v78, -inf
  %83 = vmax.xlane.f32.xlu0 %v82
  %v84 = vpop.xlane.xlu0 %83
  %vm85 = vcmp.eq.f32.partialorder %v77, %v81
  %vm86 = vcmp.eq.f32.partialorder %v78, %v84
  %v87 = vsel %vm85, %v31, 32
  %v88 = vsel %vm86, %v31, 32
  %v89 = vsel %vm32, %v87, 2147483647
  %v90 = vand.u32 %v89, 65535
  %v91 = vshra.s32 %v89, 16
  %v92 = vcvt.s32.f32 %v90
  %v93 = vcvt.s32.f32 %v91
  %94 = vmin.xlane.f32.xlu0 %v93
  %v95 = vpop.xlane.xlu0 %94
  %vm96 = vcmp.eq.f32.partialorder %v93, %v95
  %v97 = vsel %vm96, %v92, inf
  %98 = vmin.xlane.f32.xlu0 %v97
  %v99 = vpop.xlane.xlu0 %98
  %v100 = vcvt.f32.s32 %v99
  %v101 = vcvt.f32.s32 %v95
  %v102 = vshll.u32 %v101, 16
  %v103 = vadd.s32 %v102, %v100
  %v104 = vsel %vm32, %v88, 2147483647
  %v105 = vand.u32 %v104, 65535
  %v106 = vshra.s32 %v104, 16
  %v107 = vcvt.s32.f32 %v105
  %v108 = vcvt.s32.f32 %v106
  %109 = vmin.xlane.f32.xlu0 %v108
  %v110 = vpop.xlane.xlu0 %109
  %vm111 = vcmp.eq.f32.partialorder %v108, %v110
  %v112 = vsel %vm111, %v107, inf
  %113 = vmin.xlane.f32.xlu0 %v112
  %v114 = vpop.xlane.xlu0 %113
  %v115 = vcvt.f32.s32 %v114
  %v116 = vcvt.f32.s32 %v110
  %v117 = vshll.u32 %v116, 16
  %v118 = vadd.s32 %v117, %v115
  %vm119 = vcmp.eq.s32.totalorder %v31, %v103
  %vm120 = vcmp.eq.s32.totalorder %v31, %v118
  %vm121 = vmand %vm85, %vm119
  %vm122 = vmand %vm86, %vm120
  %v123 = vsel %vm121, -inf, %v77
  %v124 = vsel %vm122, -inf, %v78
  %v125 = vsel %vm32, %v123, -inf
  %126 = vmax.xlane.f32.xlu0 %v125
  %v127 = vpop.xlane.xlu0 %126
  %v128 = vsel %vm32, %v124, -inf
  %129 = vmax.xlane.f32.xlu0 %v128
  %v130 = vpop.xlane.xlu0 %129
  %vm131 = vcmp.eq.f32.partialorder %v123, %v127
  %vm132 = vcmp.eq.f32.partialorder %v124, %v130
  %v133 = vsel %vm131, %v31, 32
  %v134 = vsel %vm132, %v31, 32
  %v135 = vsel %vm32, %v133, 2147483647
  %v136 = vand.u32 %v135, 65535
  %v137 = vshra.s32 %v135, 16
  %v138 = vcvt.s32.f32 %v136
  %v139 = vcvt.s32.f32 %v137
  %140 = vmin.xlane.f32.xlu0 %v139
  %v141 = vpop.xlane.xlu0 %140
  %vm142 = vcmp.eq.f32.partialorder %v139, %v141
  %v143 = vsel %vm142, %v138, inf
  %144 = vmin.xlane.f32.xlu0 %v143
  %v145 = vpop.xlane.xlu0 %144
  %v146 = vcvt.f32.s32 %v145
  %v147 = vcvt.f32.s32 %v141
  %v148 = vshll.u32 %v147, 16
  %v149 = vadd.s32 %v148, %v146
  %v150 = vsel %vm32, %v134, 2147483647
  %v151 = vand.u32 %v150, 65535
  %v152 = vshra.s32 %v150, 16
  %v153 = vcvt.s32.f32 %v151
  %v154 = vcvt.s32.f32 %v152
  %155 = vmin.xlane.f32.xlu0 %v154
  %v156 = vpop.xlane.xlu0 %155
  %vm157 = vcmp.eq.f32.partialorder %v154, %v156
  %v158 = vsel %vm157, %v153, inf
  %159 = vmin.xlane.f32.xlu0 %v158
  %v160 = vpop.xlane.xlu0 %159
  %v161 = vcvt.f32.s32 %v160
  %v162 = vcvt.f32.s32 %v156
  %v163 = vshll.u32 %v162, 16
  %v164 = vadd.s32 %v163, %v161
  %vm165 = vcmp.eq.s32.totalorder %v31, %v149
  %vm166 = vcmp.eq.s32.totalorder %v31, %v164
  %vm167 = vmand %vm131, %vm165
  %vm168 = vmand %vm132, %vm166
  %v169 = vsel %vm167, -inf, %v123
  %v170 = vsel %vm168, -inf, %v124
  %v171 = vsel %vm32, %v169, -inf
  %172 = vmax.xlane.f32.xlu0 %v171
  %v173 = vpop.xlane.xlu0 %172
  %v174 = vsel %vm32, %v170, -inf
  %175 = vmax.xlane.f32.xlu0 %v174
  %v176 = vpop.xlane.xlu0 %175
  %vm177 = vcmp.eq.f32.partialorder %v169, %v173
  %vm178 = vcmp.eq.f32.partialorder %v170, %v176
  %v179 = vsel %vm177, %v31, 32
  %v180 = vsel %vm178, %v31, 32
  %v181 = vsel %vm32, %v179, 2147483647
  %v182 = vand.u32 %v181, 65535
  %v183 = vshra.s32 %v181, 16
  %v184 = vcvt.s32.f32 %v182
  %v185 = vcvt.s32.f32 %v183
  %186 = vmin.xlane.f32.xlu0 %v185
  %v187 = vpop.xlane.xlu0 %186
  %vm188 = vcmp.eq.f32.partialorder %v185, %v187
  %v189 = vsel %vm188, %v184, inf
  %190 = vmin.xlane.f32.xlu0 %v189
  %v191 = vpop.xlane.xlu0 %190
  %v192 = vcvt.f32.s32 %v191
  %v193 = vcvt.f32.s32 %v187
  %v194 = vshll.u32 %v193, 16
  %v195 = vadd.s32 %v194, %v192
  %v196 = vsel %vm32, %v180, 2147483647
  %v197 = vand.u32 %v196, 65535
  %v198 = vshra.s32 %v196, 16
  %v199 = vcvt.s32.f32 %v197
  %v200 = vcvt.s32.f32 %v198
  %201 = vmin.xlane.f32.xlu0 %v200
  %v202 = vpop.xlane.xlu0 %201
  %vm203 = vcmp.eq.f32.partialorder %v200, %v202
  %v204 = vsel %vm203, %v199, inf
  %205 = vmin.xlane.f32.xlu0 %v204
  %v206 = vpop.xlane.xlu0 %205
  %v207 = vcvt.f32.s32 %v206
  %v208 = vcvt.f32.s32 %v202
  %v209 = vshll.u32 %v208, 16
  %v210 = vadd.s32 %v209, %v207
  %vm211 = vcmask 7168
  %v212 = vsel %vm211, %v35, %v81
  %v213 = vsel %vm211, %v38, %v84
  %vm214 = vcmask 15360
  %v215 = vsel %vm214, %v212, %v127
  %v216 = vsel %vm214, %v213, %v130
  %vm217 = vcmask 23552
  %v218 = vsel %vm217, %v215, %v173
  %v219 = vsel %vm217, %v216, %v176
  %v220 = vsel %vm211, %v57, %v103
  %v221 = vsel %vm211, %v72, %v118
  %v222 = vsel %vm214, %v220, %v149
  %v223 = vsel %vm214, %v221, %v164
  %v224 = vsel %vm217, %v222, %v195
  %v225 = vsel %vm217, %v223, %v210
  %v226 = vsub.f32 -inf, %v218
  %v227 = vsub.f32 -inf, %v219
  %v228 = vmul.f32 %v226, 1.442695
  %v229 = vpow.pop %v228
  %v230 = vmul.f32 %v227, 1.442695
  %v231 = vpow.pop %v230
  %v232 = vmul.f32 %v229, 0.0
  %v233 = vmul.f32 %v231, 0.0
  %235 = vset.pattern.permute.xlu0 0
  %236 = vperm.xlu0 %235, %v218
  %v237 = vpop.permute.xlu0 %236
  %240 = vset.pattern.permute.xlu0 0
  %241 = vperm.xlu0 %240, %v219
  %v242 = vpop.permute.xlu0 %241
  %v244 = vsub.f32 %v14, %v237
  %v245 = vsub.f32 %v15, %v242
  %v246 = vmul.f32 %v244, 1.442695
  %v247 = vpow.pop %v246
  %v248 = vmul.f32 %v245, 1.442695
  %v249 = vpow.pop %v248
  %vm250 = vcmask 261120
  %v251 = vsel %vm250, %v247, 0.0
  %252 = vadd.xlane.f32.xlu0 %v251
  %v253 = vpop.xlane.xlu0 %252
  %v254 = vsel %vm250, %v249, 0.0
  %255 = vadd.xlane.f32.xlu0 %v254
  %v256 = vpop.xlane.xlu0 %255
  %v257 = vadd.f32 %v232, %v253
  %v258 = vadd.f32 %v233, %v256
  %v259 = vlog2.pop %v257
  %v260 = vmul.f32 %v259, 0.6931472
  %v261 = vlog2.pop %v258
  %v262 = vmul.f32 %v261, 0.6931472
  %v263 = vadd.f32 %v218, %v260
  %v264 = vadd.f32 %v219, %v262
  %266 = vset.pattern.permute.xlu0 0
  %267 = vperm.xlu0 %266, %v263
  %v268 = vpop.permute.xlu0 %267
  %271 = vset.pattern.permute.xlu0 0
  %272 = vperm.xlu0 %271, %v264
  %v273 = vpop.permute.xlu0 %272
  %v275 = vsub.f32 %v218, %v268
  %v276 = vsub.f32 %v219, %v273
  %p277 = scmp.eq.s32.totalorder 0, 0
  // Predicated region
  $region14: #{_mwer_forward.1} parent=0 // pred_check
    %p278 = pneg %p277
  $region15: #{_mwer_forward.1} parent=0 // pred_check_branch
    %280 = sbr.rel (%p278) target = $region17
  $region16: #{_mwer_forward.1} parent=0 // pred_region
    %v281 = vld [vmem:[%s1] sm:$0x1]
    %v282 = vld [vmem:[%s1 + $0x8] sm:$0x1]
    %vm283 = vcmp.eq.s32.totalorder %v281, 1
    %vm284 = vcmp.eq.s32.totalorder %v282, 1
    %vm285 = vcmp.eq.s32.totalorder %v17, 0
    %v286 = vsel %vm283, 1, 0
    %v287 = vsel %vm284, 1, 0
    %288 = vset.pattern.permute.xlu0 0
    %289 = vperm.xlu0 %288, %v286
    %v290 = vpop.permute.xlu0 %289
    %291 = vset.pattern.permute.xlu0 0
    %292 = vperm.xlu0 %291, %v287
    %v293 = vpop.permute.xlu0 %292
    %vm294 = vcmp.eq.s32.totalorder %v290, 1
    %vm295 = vcmp.eq.s32.totalorder %v293, 1
    %vm296 = vmand %vm294, %vm285
    %vm297 = vmand %vm295, %vm285
    %v298 = vsel %vm296, 0.0, %v275
    %v299 = vsel %vm297, 0.0, %v276
    %vm300 = vcmp.gt.s32.totalorder %v17, 0
    %vm301 = vmand %vm294, %vm300
    %vm302 = vmand %vm295, %vm300
    %v303 = vsel %vm301, -inf, %v298
    %v304 = vsel %vm302, -inf, %v299
    %v307 = vrot.slane %v304, 7
    %vm308 = vcmask 1041409
    %v309 = vsel %vm308, %v307, %v303
    %vm311 = vcmask 25600
    %312 = vst.msk [vmem:[#allocation2] sm:$0x3] %vm311, %v309
    %vm313 = vcmp.eq.s32.totalorder %v281, 0
    %vm314 = vcmp.eq.s32.totalorder %v282, 0
    %v315 = vsel %vm313, 1, 0
    %v316 = vsel %vm314, 1, 0
    %317 = vset.pattern.permute.xlu0 0
    %318 = vperm.xlu0 %317, %v315
    %v319 = vpop.permute.xlu0 %318
    %320 = vset.pattern.permute.xlu0 0
    %321 = vperm.xlu0 %320, %v316
    %v322 = vpop.permute.xlu0 %321
    %vm323 = vcmp.eq.s32.totalorder %v319, 1
    %vm324 = vcmp.eq.s32.totalorder %v322, 1
    %v325 = vsel %vm323, %v275, 0.0
    %v326 = vsel %vm324, %v276, 0.0
    %v329 = vrot.slane %v326, 7
    %v330 = vsel %vm308, %v329, %v325
    %332 = vst.msk [vmem:[#allocation4] sm:$0x3] %vm311, %v330
    %v333 = vld [vmem:[%s2] sm:$0x1]
    %v334 = vld [vmem:[%s2 + $0x8] sm:$0x1]
    %335 = vset.pattern.permute.xlu0 0
    %336 = vperm.xlu0 %335, %v333
    %v337 = vpop.permute.xlu0 %336
    %338 = vset.pattern.permute.xlu0 0
    %339 = vperm.xlu0 %338, %v334
    %v340 = vpop.permute.xlu0 %339
    %vm341 = vcmp.ne.s32.totalorder %v224, %v337
    %vm342 = vcmp.ne.s32.totalorder %v225, %v340
    %vm343 = vmand %vm323, %vm341
    %vm344 = vmand %vm324, %vm342
    %v345 = vsel %vm343, 1.0, 0.0
    %v346 = vsel %vm344, 1.0, 0.0
    %v349 = vrot.slane %v346, 7
    %v350 = vsel %vm308, %v349, %v345
    %352 = vst.msk [vmem:[#allocation5] sm:$0x3] %vm311, %v350
    %v353 = vrot.slane %v282, 7
    %v354 = vsel %vm308, %v353, %v281
    %vm355 = vcmask 1024
    %356 = vst.msk [vmem:[#allocation3] sm:$0x3] %vm355, %v354
  $region17: #{_mwer_forward.1} parent=0 // pred_fallthru
    _
  %p357 = scmp.ne.s32.totalorder 0, 0
  // Predicated region
  $region18: #{_mwer_forward.1} parent=0 // pred_check
    %p358 = pneg %p357
  $region19: #{_mwer_forward.1} parent=0 // pred_check_branch
    %360 = sbr.rel (%p358) target = $region21
  $region20: #{_mwer_forward.1} parent=0 // pred_region
    %v361 = vld [vmem:[%s1] sm:$0x1]
    %v362 = vld [vmem:[%s1 + $0x8] sm:$0x1]
    %v363 = vld [vmem:[#allocation3] sm:$0x3]
    %vm364 = vcmp.eq.s32.totalorder %v363, 1
    %v365 = vld [vmem:[#allocation2] sm:$0x3]
    %367 = vset.pattern.permute.xlu0 0
    %368 = vperm.xlu0 %367, %v365
    %v369 = vpop.permute.xlu0 %368
    %v373 = vrot.slane %v276, 7
    %vm374 = vcmask 1041409
    %v375 = vsel %vm374, %v373, %v275
    %v377 = vadd.f32 %v369, %v375
    %378 = vset.pattern.permute.xlu0 1
    %379 = vperm.xlu0 %378, %v365
    %v380 = vpop.permute.xlu0 %379
    %v382 = vadd.f32 %v380, %v375
    %383 = vset.pattern.permute.xlu0 2
    %384 = vperm.xlu0 %383, %v365
    %v385 = vpop.permute.xlu0 %384
    %v387 = vadd.f32 %v385, %v375
    %388 = vset.pattern.permute.xlu0 3
    %389 = vperm.xlu0 %388, %v365
    %v390 = vpop.permute.xlu0 %389
    %v392 = vadd.f32 %v390, %v375
    %394 = vrot.lane.b32.xlu0 %v382, 4
    %v395 = vpop.permute.xlu0 %394
    %398 = vrot.lane.b32.xlu0 %v387, 8
    %v399 = vpop.permute.xlu0 %398
    %402 = vrot.lane.b32.xlu0 %v392, 12
    %v403 = vpop.permute.xlu0 %402
    %v405 = vsel %vm26, %v377, %v395
    %vm406 = vcmask 64512
    %v407 = vsel %vm406, %v405, %v399
    %vm408 = vcmask 97280
    %v409 = vsel %vm408, %v407, %v403
    %v410 = vrot.slane %v225, 7
    %v411 = vsel %vm374, %v410, %v224
    %412 = vrot.lane.b32.xlu0 %v411, 4
    %v413 = vpop.permute.xlu0 %412
    %414 = vrot.lane.b32.xlu0 %v411, 8
    %v415 = vpop.permute.xlu0 %414
    %416 = vrot.lane.b32.xlu0 %v411, 12
    %v417 = vpop.permute.xlu0 %416
    %v418 = vsel %vm26, %v411, %v413
    %v419 = vsel %vm406, %v418, %v415
    %v420 = vsel %vm408, %v419, %v417
    %421 = vrot.lane.b32.xlu0 %v375, 4
    %v422 = vpop.permute.xlu0 %421
    %424 = vrot.lane.b32.xlu0 %v375, 8
    %v425 = vpop.permute.xlu0 %424
    %427 = vrot.lane.b32.xlu0 %v375, 12
    %v428 = vpop.permute.xlu0 %427
    %v430 = vsel %vm26, %v375, %v422
    %v431 = vsel %vm406, %v430, %v425
    %v432 = vsel %vm408, %v431, %v428
    %vm433 = vcmask 123904
    %v434 = vsel %vm433, %v409, -inf
    %435 = vmax.xlane.f32.xlu0 %v434
    %v436 = vpop.xlane.xlu0 %435
    %vm437 = vcmp.eq.f32.partialorder %v409, %v436
    %v438 = vsel %vm437, %v17, 16
    %v439 = vsel %vm433, %v438, 2147483647
    %v440 = vand.u32 %v439, 65535
    %v441 = vshra.s32 %v439, 16
    %v442 = vcvt.s32.f32 %v440
    %v443 = vcvt.s32.f32 %v441
    %444 = vmin.xlane.f32.xlu0 %v443
    %v445 = vpop.xlane.xlu0 %444
    %vm446 = vcmp.eq.f32.partialorder %v443, %v445
    %v447 = vsel %vm446, %v442, inf
    %448 = vmin.xlane.f32.xlu0 %v447
    %v449 = vpop.xlane.xlu0 %448
    %v450 = vcvt.f32.s32 %v449
    %v451 = vcvt.f32.s32 %v445
    %v452 = vshll.u32 %v451, 16
    %v453 = vadd.s32 %v452, %v450
    %vm454 = vcmp.eq.s32.totalorder %v17, %v453
    %v455 = vsel %vm454, %v420, 32
    %v456 = vsel %vm433, %v455, 2147483647
    %v457 = vand.u32 %v456, 65535
    %v458 = vshra.s32 %v456, 16
    %v459 = vcvt.s32.f32 %v457
    %v460 = vcvt.s32.f32 %v458
    %461 = vmin.xlane.f32.xlu0 %v460
    %v462 = vpop.xlane.xlu0 %461
    %vm463 = vcmp.eq.f32.partialorder %v460, %v462
    %v464 = vsel %vm463, %v459, inf
    %465 = vmin.xlane.f32.xlu0 %v464
    %v466 = vpop.xlane.xlu0 %465
    %v467 = vcvt.f32.s32 %v466
    %v468 = vcvt.f32.s32 %v462
    %v469 = vshll.u32 %v468, 16
    %v470 = vadd.s32 %v469, %v467
    %v471 = vsel %vm454, %v432, 0.0
    %v472 = vsel %vm433, %v471, 0.0
    %473 = vadd.xlane.f32.xlu0 %v472
    %v474 = vpop.xlane.xlu0 %473
    %v475 = vsel %vm454, -inf, %v409
    %v476 = vsel %vm433, %v475, -inf
    %477 = vmax.xlane.f32.xlu0 %v476
    %v478 = vpop.xlane.xlu0 %477
    %vm479 = vcmp.eq.f32.partialorder %v475, %v478
    %v480 = vsel %vm479, %v17, 16
    %v481 = vsel %vm433, %v480, 2147483647
    %v482 = vand.u32 %v481, 65535
    %v483 = vshra.s32 %v481, 16
    %v484 = vcvt.s32.f32 %v482
    %v485 = vcvt.s32.f32 %v483
    %486 = vmin.xlane.f32.xlu0 %v485
    %v487 = vpop.xlane.xlu0 %486
    %vm488 = vcmp.eq.f32.partialorder %v485, %v487
    %v489 = vsel %vm488, %v484, inf
    %490 = vmin.xlane.f32.xlu0 %v489
    %v491 = vpop.xlane.xlu0 %490
    %v492 = vcvt.f32.s32 %v491
    %v493 = vcvt.f32.s32 %v487
    %v494 = vshll.u32 %v493, 16
    %v495 = vadd.s32 %v494, %v492
    %vm496 = vcmp.eq.s32.totalorder %v17, %v495
    %v497 = vsel %vm496, %v420, 32
    %v498 = vsel %vm433, %v497, 2147483647
    %v499 = vand.u32 %v498, 65535
    %v500 = vshra.s32 %v498, 16
    %v501 = vcvt.s32.f32 %v499
    %v502 = vcvt.s32.f32 %v500
    %503 = vmin.xlane.f32.xlu0 %v502
    %v504 = vpop.xlane.xlu0 %503
    %vm505 = vcmp.eq.f32.partialorder %v502, %v504
    %v506 = vsel %vm505, %v501, inf
    %507 = vmin.xlane.f32.xlu0 %v506
    %v508 = vpop.xlane.xlu0 %507
    %v509 = vcvt.f32.s32 %v508
    %v510 = vcvt.f32.s32 %v504
    %v511 = vshll.u32 %v510, 16
    %v512 = vadd.s32 %v511, %v509
    %v513 = vsel %vm496, %v432, 0.0
    %v514 = vsel %vm433, %v513, 0.0
    %515 = vadd.xlane.f32.xlu0 %v514
    %v516 = vpop.xlane.xlu0 %515
    %v517 = vsel %vm496, -inf, %v475
    %v518 = vsel %vm433, %v517, -inf
    %519 = vmax.xlane.f32.xlu0 %v518
    %v520 = vpop.xlane.xlu0 %519
    %vm521 = vcmp.eq.f32.partialorder %v517, %v520
    %v522 = vsel %vm521, %v17, 16
    %v523 = vsel %vm433, %v522, 2147483647
    %v524 = vand.u32 %v523, 65535
    %v525 = vshra.s32 %v523, 16
    %v526 = vcvt.s32.f32 %v524
    %v527 = vcvt.s32.f32 %v525
    %528 = vmin.xlane.f32.xlu0 %v527
    %v529 = vpop.xlane.xlu0 %528
    %vm530 = vcmp.eq.f32.partialorder %v527, %v529
    %v531 = vsel %vm530, %v526, inf
    %532 = vmin.xlane.f32.xlu0 %v531
    %v533 = vpop.xlane.xlu0 %532
    %v534 = vcvt.f32.s32 %v533
    %v535 = vcvt.f32.s32 %v529
    %v536 = vshll.u32 %v535, 16
    %v537 = vadd.s32 %v536, %v534
    %vm538 = vcmp.eq.s32.totalorder %v17, %v537
    %v539 = vsel %vm538, %v420, 32
    %v540 = vsel %vm433, %v539, 2147483647
    %v541 = vand.u32 %v540, 65535
    %v542 = vshra.s32 %v540, 16
    %v543 = vcvt.s32.f32 %v541
    %v544 = vcvt.s32.f32 %v542
    %545 = vmin.xlane.f32.xlu0 %v544
    %v546 = vpop.xlane.xlu0 %545
    %vm547 = vcmp.eq.f32.partialorder %v544, %v546
    %v548 = vsel %vm547, %v543, inf
    %549 = vmin.xlane.f32.xlu0 %v548
    %v550 = vpop.xlane.xlu0 %549
    %v551 = vcvt.f32.s32 %v550
    %v552 = vcvt.f32.s32 %v546
    %v553 = vshll.u32 %v552, 16
    %v554 = vadd.s32 %v553, %v551
    %v555 = vsel %vm538, %v432, 0.0
    %v556 = vsel %vm433, %v555, 0.0
    %557 = vadd.xlane.f32.xlu0 %v556
    %v558 = vpop.xlane.xlu0 %557
    %v559 = vsel %vm538, -inf, %v517
    %v560 = vsel %vm433, %v559, -inf
    %561 = vmax.xlane.f32.xlu0 %v560
    %v562 = vpop.xlane.xlu0 %561
    %vm563 = vcmp.eq.f32.partialorder %v559, %v562
    %v564 = vsel %vm563, %v17, 16
    %v565 = vsel %vm433, %v564, 2147483647
    %v566 = vand.u32 %v565, 65535
    %v567 = vshra.s32 %v565, 16
    %v568 = vcvt.s32.f32 %v566
    %v569 = vcvt.s32.f32 %v567
    %570 = vmin.xlane.f32.xlu0 %v569
    %v571 = vpop.xlane.xlu0 %570
    %vm572 = vcmp.eq.f32.partialorder %v569, %v571
    %v573 = vsel %vm572, %v568, inf
    %574 = vmin.xlane.f32.xlu0 %v573
    %v575 = vpop.xlane.xlu0 %574
    %v576 = vcvt.f32.s32 %v575
    %v577 = vcvt.f32.s32 %v571
    %v578 = vshll.u32 %v577, 16
    %v579 = vadd.s32 %v578, %v576
    %vm580 = vcmp.eq.s32.totalorder %v17, %v579
    %v581 = vsel %vm580, %v420, 32
    %v582 = vsel %vm433, %v581, 2147483647
    %v583 = vand.u32 %v582, 65535
    %v584 = vshra.s32 %v582, 16
    %v585 = vcvt.s32.f32 %v583
    %v586 = vcvt.s32.f32 %v584
    %587 = vmin.xlane.f32.xlu0 %v586
    %v588 = vpop.xlane.xlu0 %587
    %vm589 = vcmp.eq.f32.partialorder %v586, %v588
    %v590 = vsel %vm589, %v585, inf
    %591 = vmin.xlane.f32.xlu0 %v590
    %v592 = vpop.xlane.xlu0 %591
    %v593 = vcvt.f32.s32 %v592
    %v594 = vcvt.f32.s32 %v588
    %v595 = vshll.u32 %v594, 16
    %v596 = vadd.s32 %v595, %v593
    %v597 = vsel %vm580, %v432, 0.0
    %v598 = vsel %vm433, %v597, 0.0
    %599 = vadd.xlane.f32.xlu0 %v598
    %v600 = vpop.xlane.xlu0 %599
    %v601 = vsel %vm211, %v436, %v478
    %v602 = vsel %vm214, %v601, %v520
    %v603 = vsel %vm217, %v602, %v562
    %v604 = vsel %vm211, %v470, %v512
    %v605 = vsel %vm214, %v604, %v554
    %v606 = vsel %vm217, %v605, %v596
    %v607 = vsel %vm211, %v474, %v516
    %v608 = vsel %vm214, %v607, %v558
    %v609 = vsel %vm217, %v608, %v600
    %v610 = vsel %vm364, 1, 0
    %611 = vset.pattern.permute.xlu0 0
    %612 = vperm.xlu0 %611, %v610
    %v613 = vpop.permute.xlu0 %612
    %vm614 = vcmp.eq.s32.totalorder %v613, 1
    %v615 = vsel %vm614, %v365, %v603
    %vm616 = vcmask 25600
    %617 = vst.msk [vmem:[#allocation2] sm:$0x3] %vm616, %v615
    %vm618 = vcmp.eq.s32.totalorder %v361, 0
    %vm619 = vcmp.eq.s32.totalorder %v362, 0
    %v620 = vld [vmem:[#allocation4] sm:$0x3]
    %v621 = vsel %vm618, 1, 0
    %v622 = vsel %vm619, 1, 0
    %623 = vset.pattern.permute.xlu0 0
    %624 = vperm.xlu0 %623, %v621
    %v625 = vpop.permute.xlu0 %624
    %626 = vset.pattern.permute.xlu0 0
    %627 = vperm.xlu0 %626, %v622
    %v628 = vpop.permute.xlu0 %627
    %vm629 = vcmp.eq.s32.totalorder %v625, 1
    %vm630 = vcmp.eq.s32.totalorder %v628, 1
    %v632 = vrot.slane %v609, 1
    %v635 = vsel %vm629, %v609, 0.0
    %v636 = vsel %vm630, %v632, 0.0
    %v639 = vrot.slane %v636, 7
    %v640 = vsel %vm374, %v639, %v635
    %v642 = vadd.f32 %v620, %v640
    %643 = vst.msk [vmem:[#allocation4] sm:$0x3] %vm616, %v642
    %v644 = vld [vmem:[#allocation5] sm:$0x3]
    %v645 = vld [vmem:[%s2] sm:$0x1]
    %v646 = vld [vmem:[%s2 + $0x8] sm:$0x1]
    %647 = vset.pattern.permute.xlu0 0
    %648 = vperm.xlu0 %647, %v645
    %v649 = vpop.permute.xlu0 %648
    %650 = vset.pattern.permute.xlu0 0
    %651 = vperm.xlu0 %650, %v646
    %v652 = vpop.permute.xlu0 %651
    %v653 = vrot.slane %v652, 7
    %v654 = vsel %vm374, %v653, %v649
    %vm655 = vcmp.ne.s32.totalorder %v606, %v654
    %v656 = vsel %vm655, 1, 0
    %v657 = vrot.slane %v656, 1
    %vm658 = vcmp.ne.s32.totalorder %v656, 0
    %vm659 = vcmp.ne.s32.totalorder %v657, 0
    %vm660 = vmand %vm629, %vm658
    %vm661 = vmand %vm630, %vm659
    %v662 = vsel %vm660, 1.0, 0.0
    %v663 = vsel %vm661, 1.0, 0.0
    %v666 = vrot.slane %v663, 7
    %v667 = vsel %vm374, %v666, %v662
    %v669 = vadd.f32 %v644, %v667
    %670 = vst.msk [vmem:[#allocation5] sm:$0x3] %vm616, %v669
    %v671 = vrot.slane %v362, 7
    %v672 = vsel %vm374, %v671, %v361
    %vm673 = vcmask 1024
    %674 = vst.msk [vmem:[#allocation3] sm:$0x3] %vm673, %v672
  $region21: #{_mwer_forward.1} parent=0 // pred_fallthru
    _
  %s675 = smul.u32 0, 8
  %s676 = sadd.s32 %s675, 1
  %p677 = scmp.lt.s32.totalorder %s676, 8
  // Predicated region
  $region22: #{_mwer_forward.1} parent=0 // pred_check
    %p678 = pneg %p677
  $region23: #{_mwer_forward.1} parent=0 // pred_check_branch
    %680 = sbr.rel (%p678) target = $region25
  $region24: #{_mwer_forward.1} parent=0 // pred_region
    %v681 = vld [vmem:[%s1 + $0x1] sm:$0x1]
    %v682 = vld [vmem:[%s1 + $0x9] sm:$0x1]
    %v683 = vld [vmem:[#allocation3] sm:$0x3]
    %vm684 = vcmp.eq.s32.totalorder %v683, 1
    %v685 = vld [vmem:[#allocation2] sm:$0x3]
    %687 = vset.pattern.permute.xlu0 0
    %688 = vperm.xlu0 %687, %v685
    %v689 = vpop.permute.xlu0 %688
    %v693 = vrot.slane %v275, 1
    %vm694 = vcmask 1041409
    %v695 = vsel %vm694, %v276, %v693
    %v697 = vadd.f32 %v689, %v695
    %698 = vset.pattern.permute.xlu0 1
    %699 = vperm.xlu0 %698, %v685
    %v700 = vpop.permute.xlu0 %699
    %v702 = vadd.f32 %v700, %v695
    %703 = vset.pattern.permute.xlu0 2
    %704 = vperm.xlu0 %703, %v685
    %v705 = vpop.permute.xlu0 %704
    %v707 = vadd.f32 %v705, %v695
    %708 = vset.pattern.permute.xlu0 3
    %709 = vperm.xlu0 %708, %v685
    %v710 = vpop.permute.xlu0 %709
    %v712 = vadd.f32 %v710, %v695
    %714 = vrot.lane.b32.xlu0 %v702, 4
    %v715 = vpop.permute.xlu0 %714
    %718 = vrot.lane.b32.xlu0 %v707, 8
    %v719 = vpop.permute.xlu0 %718
    %722 = vrot.lane.b32.xlu0 %v712, 12
    %v723 = vpop.permute.xlu0 %722
    %v725 = vsel %vm26, %v697, %v715
    %vm726 = vcmask 64512
    %v727 = vsel %vm726, %v725, %v719
    %vm728 = vcmask 97280
    %v729 = vsel %vm728, %v727, %v723
    %v730 = vrot.slane %v225, 7
    %vm731 = vcmask 1042434
    %v732 = vsel %vm731, %v730, %v224
    %733 = vrot.lane.b32.xlu0 %v732, 4
    %v734 = vpop.permute.xlu0 %733
    %735 = vrot.lane.b32.xlu0 %v732, 8
    %v736 = vpop.permute.xlu0 %735
    %737 = vrot.lane.b32.xlu0 %v732, 12
    %v738 = vpop.permute.xlu0 %737
    %v739 = vsel %vm26, %v732, %v734
    %v740 = vsel %vm726, %v739, %v736
    %v741 = vsel %vm728, %v740, %v738
    %v742 = vrot.slane %v276, 7
    %v743 = vsel %vm731, %v742, %v275
    %745 = vrot.lane.b32.xlu0 %v743, 4
    %v746 = vpop.permute.xlu0 %745
    %748 = vrot.lane.b32.xlu0 %v743, 8
    %v749 = vpop.permute.xlu0 %748
    %751 = vrot.lane.b32.xlu0 %v743, 12
    %v752 = vpop.permute.xlu0 %751
    %v754 = vsel %vm26, %v743, %v746
    %v755 = vsel %vm726, %v754, %v749
    %v756 = vsel %vm728, %v755, %v752
    %vm757 = vcmask 123904
    %v758 = vsel %vm757, %v729, -inf
    %759 = vmax.xlane.f32.xlu0 %v758
    %v760 = vpop.xlane.xlu0 %759
    %vm761 = vcmp.eq.f32.partialorder %v729, %v760
    %v762 = vsel %vm761, %v17, 16
    %v763 = vsel %vm757, %v762, 2147483647
    %v764 = vand.u32 %v763, 65535
    %v765 = vshra.s32 %v763, 16
    %v766 = vcvt.s32.f32 %v764
    %v767 = vcvt.s32.f32 %v765
    %768 = vmin.xlane.f32.xlu0 %v767
    %v769 = vpop.xlane.xlu0 %768
    %vm770 = vcmp.eq.f32.partialorder %v767, %v769
    %v771 = vsel %vm770, %v766, inf
    %772 = vmin.xlane.f32.xlu0 %v771
    %v773 = vpop.xlane.xlu0 %772
    %v774 = vcvt.f32.s32 %v773
    %v775 = vcvt.f32.s32 %v769
    %v776 = vshll.u32 %v775, 16
    %v777 = vadd.s32 %v776, %v774
    %vm778 = vcmp.eq.s32.totalorder %v17, %v777
    %v779 = vrot.slane %v741, 1
    %v780 = vsel %vm778, %v779, 32
    %v781 = vsel %vm757, %v780, 2147483647
    %v782 = vand.u32 %v781, 65535
    %v783 = vshra.s32 %v781, 16
    %v784 = vcvt.s32.f32 %v782
    %v785 = vcvt.s32.f32 %v783
    %786 = vmin.xlane.f32.xlu0 %v785
    %v787 = vpop.xlane.xlu0 %786
    %vm788 = vcmp.eq.f32.partialorder %v785, %v787
    %v789 = vsel %vm788, %v784, inf
    %790 = vmin.xlane.f32.xlu0 %v789
    %v791 = vpop.xlane.xlu0 %790
    %v792 = vcvt.f32.s32 %v791
    %v793 = vcvt.f32.s32 %v787
    %v794 = vshll.u32 %v793, 16
    %v795 = vadd.s32 %v794, %v792
    %v797 = vrot.slane %v756, 1
    %v799 = vsel %vm778, %v797, 0.0
    %v800 = vsel %vm757, %v799, 0.0
    %801 = vadd.xlane.f32.xlu0 %v800
    %v802 = vpop.xlane.xlu0 %801
    %v803 = vsel %vm778, -inf, %v729
    %v804 = vsel %vm757, %v803, -inf
    %805 = vmax.xlane.f32.xlu0 %v804
    %v806 = vpop.xlane.xlu0 %805
    %vm807 = vcmp.eq.f32.partialorder %v803, %v806
    %v808 = vsel %vm807, %v17, 16
    %v809 = vsel %vm757, %v808, 2147483647
    %v810 = vand.u32 %v809, 65535
    %v811 = vshra.s32 %v809, 16
    %v812 = vcvt.s32.f32 %v810
    %v813 = vcvt.s32.f32 %v811
    %814 = vmin.xlane.f32.xlu0 %v813
    %v815 = vpop.xlane.xlu0 %814
    %vm816 = vcmp.eq.f32.partialorder %v813, %v815
    %v817 = vsel %vm816, %v812, inf
    %818 = vmin.xlane.f32.xlu0 %v817
    %v819 = vpop.xlane.xlu0 %818
    %v820 = vcvt.f32.s32 %v819
    %v821 = vcvt.f32.s32 %v815
    %v822 = vshll.u32 %v821, 16
    %v823 = vadd.s32 %v822, %v820
    %vm824 = vcmp.eq.s32.totalorder %v17, %v823
    %v825 = vsel %vm824, %v779, 32
    %v826 = vsel %vm757, %v825, 2147483647
    %v827 = vand.u32 %v826, 65535
    %v828 = vshra.s32 %v826, 16
    %v829 = vcvt.s32.f32 %v827
    %v830 = vcvt.s32.f32 %v828
    %831 = vmin.xlane.f32.xlu0 %v830
    %v832 = vpop.xlane.xlu0 %831
    %vm833 = vcmp.eq.f32.partialorder %v830, %v832
    %v834 = vsel %vm833, %v829, inf
    %835 = vmin.xlane.f32.xlu0 %v834
    %v836 = vpop.xlane.xlu0 %835
    %v837 = vcvt.f32.s32 %v836
    %v838 = vcvt.f32.s32 %v832
    %v839 = vshll.u32 %v838, 16
    %v840 = vadd.s32 %v839, %v837
    %v841 = vsel %vm824, %v797, 0.0
    %v842 = vsel %vm757, %v841, 0.0
    %843 = vadd.xlane.f32.xlu0 %v842
    %v844 = vpop.xlane.xlu0 %843
    %v845 = vsel %vm824, -inf, %v803
    %v846 = vsel %vm757, %v845, -inf
    %847 = vmax.xlane.f32.xlu0 %v846
    %v848 = vpop.xlane.xlu0 %847
    %vm849 = vcmp.eq.f32.partialorder %v845, %v848
    %v850 = vsel %vm849, %v17, 16
    %v851 = vsel %vm757, %v850, 2147483647
    %v852 = vand.u32 %v851, 65535
    %v853 = vshra.s32 %v851, 16
    %v854 = vcvt.s32.f32 %v852
    %v855 = vcvt.s32.f32 %v853
    %856 = vmin.xlane.f32.xlu0 %v855
    %v857 = vpop.xlane.xlu0 %856
    %vm858 = vcmp.eq.f32.partialorder %v855, %v857
    %v859 = vsel %vm858, %v854, inf
    %860 = vmin.xlane.f32.xlu0 %v859
    %v861 = vpop.xlane.xlu0 %860
    %v862 = vcvt.f32.s32 %v861
    %v863 = vcvt.f32.s32 %v857
    %v864 = vshll.u32 %v863, 16
    %v865 = vadd.s32 %v864, %v862
    %vm866 = vcmp.eq.s32.totalorder %v17, %v865
    %v867 = vsel %vm866, %v779, 32
    %v868 = vsel %vm757, %v867, 2147483647
    %v869 = vand.u32 %v868, 65535
    %v870 = vshra.s32 %v868, 16
    %v871 = vcvt.s32.f32 %v869
    %v872 = vcvt.s32.f32 %v870
    %873 = vmin.xlane.f32.xlu0 %v872
    %v874 = vpop.xlane.xlu0 %873
    %vm875 = vcmp.eq.f32.partialorder %v872, %v874
    %v876 = vsel %vm875, %v871, inf
    %877 = vmin.xlane.f32.xlu0 %v876
    %v878 = vpop.xlane.xlu0 %877
    %v879 = vcvt.f32.s32 %v878
    %v880 = vcvt.f32.s32 %v874
    %v881 = vshll.u32 %v880, 16
    %v882 = vadd.s32 %v881, %v879
    %v883 = vsel %vm866, %v797, 0.0
    %v884 = vsel %vm757, %v883, 0.0
    %885 = vadd.xlane.f32.xlu0 %v884
    %v886 = vpop.xlane.xlu0 %885
    %v887 = vsel %vm866, -inf, %v845
    %v888 = vsel %vm757, %v887, -inf
    %889 = vmax.xlane.f32.xlu0 %v888
    %v890 = vpop.xlane.xlu0 %889
    %vm891 = vcmp.eq.f32.partialorder %v887, %v890
    %v892 = vsel %vm891, %v17, 16
    %v893 = vsel %vm757, %v892, 2147483647
    %v894 = vand.u32 %v893, 65535
    %v895 = vshra.s32 %v893, 16
    %v896 = vcvt.s32.f32 %v894
    %v897 = vcvt.s32.f32 %v895
    %898 = vmin.xlane.f32.xlu0 %v897
    %v899 = vpop.xlane.xlu0 %898
    %vm900 = vcmp.eq.f32.partialorder %v897, %v899
    %v901 = vsel %vm900, %v896, inf
    %902 = vmin.xlane.f32.xlu0 %v901
    %v903 = vpop.xlane.xlu0 %902
    %v904 = vcvt.f32.s32 %v903
    %v905 = vcvt.f32.s32 %v899
    %v906 = vshll.u32 %v905, 16
    %v907 = vadd.s32 %v906, %v904
    %vm908 = vcmp.eq.s32.totalorder %v17, %v907
    %v909 = vsel %vm908, %v779, 32
    %v910 = vsel %vm757, %v909, 2147483647
    %v911 = vand.u32 %v910, 65535
    %v912 = vshra.s32 %v910, 16
    %v913 = vcvt.s32.f32 %v911
    %v914 = vcvt.s32.f32 %v912
    %915 = vmin.xlane.f32.xlu0 %v914
    %v916 = vpop.xlane.xlu0 %915
    %vm917 = vcmp.eq.f32.partialorder %v914, %v916
    %v918 = vsel %vm917, %v913, inf
    %919 = vmin.xlane.f32.xlu0 %v918
    %v920 = vpop.xlane.xlu0 %919
    %v921 = vcvt.f32.s32 %v920
    %v922 = vcvt.f32.s32 %v916
    %v923 = vshll.u32 %v922, 16
    %v924 = vadd.s32 %v923, %v921
    %v925 = vsel %vm908, %v797, 0.0
    %v926 = vsel %vm757, %v925, 0.0
    %927 = vadd.xlane.f32.xlu0 %v926
    %v928 = vpop.xlane.xlu0 %927
    %v929 = vsel %vm211, %v760, %v806
    %v930 = vsel %vm214, %v929, %v848
    %v931 = vsel %vm217, %v930, %v890
    %v932 = vsel %vm211, %v795, %v840
    %v933 = vsel %vm214, %v932, %v882
    %v934 = vsel %vm217, %v933, %v924
    %v935 = vsel %vm211, %v802, %v844
    %v936 = vsel %vm214, %v935, %v886
    %v937 = vsel %vm217, %v936, %v928
    %v938 = vsel %vm684, 1, 0
    %939 = vset.pattern.permute.xlu0 0
    %940 = vperm.xlu0 %939, %v938
    %v941 = vpop.permute.xlu0 %940
    %vm942 = vcmp.eq.s32.totalorder %v941, 1
    %v943 = vsel %vm942, %v685, %v931
    %vm944 = vcmask 25600
    %945 = vst.msk [vmem:[#allocation2] sm:$0x3] %vm944, %v943
    %vm946 = vcmp.eq.s32.totalorder %v681, 0
    %vm947 = vcmp.eq.s32.totalorder %v682, 0
    %v948 = vld [vmem:[#allocation4] sm:$0x3]
    %v949 = vsel %vm946, 1, 0
    %v950 = vsel %vm947, 1, 0
    %951 = vset.pattern.permute.xlu0 0
    %952 = vperm.xlu0 %951, %v949
    %v953 = vpop.permute.xlu0 %952
    %954 = vset.pattern.permute.xlu0 0
    %955 = vperm.xlu0 %954, %v950
    %v956 = vpop.permute.xlu0 %955
    %vm957 = vcmp.eq.s32.totalorder %v953, 1
    %vm958 = vcmp.eq.s32.totalorder %v956, 1
    %v960 = vrot.slane %v937, 1
    %v963 = vsel %vm957, %v937, 0.0
    %v964 = vsel %vm958, %v960, 0.0
    %v967 = vrot.slane %v964, 7
    %v968 = vsel %vm694, %v967, %v963
    %v970 = vadd.f32 %v948, %v968
    %971 = vst.msk [vmem:[#allocation4] sm:$0x3] %vm944, %v970
    %v972 = vld [vmem:[#allocation5] sm:$0x3]
    %v973 = vld [vmem:[%s2 + $0x1] sm:$0x1]
    %v974 = vld [vmem:[%s2 + $0x9] sm:$0x1]
    %975 = vset.pattern.permute.xlu0 0
    %976 = vperm.xlu0 %975, %v973
    %v977 = vpop.permute.xlu0 %976
    %978 = vset.pattern.permute.xlu0 0
    %979 = vperm.xlu0 %978, %v974
    %v980 = vpop.permute.xlu0 %979
    %v981 = vrot.slane %v980, 7
    %v982 = vsel %vm694, %v981, %v977
    %vm983 = vcmp.ne.s32.totalorder %v934, %v982
    %v984 = vsel %vm983, 1, 0
    %v985 = vrot.slane %v984, 1
    %vm986 = vcmp.ne.s32.totalorder %v984, 0
    %vm987 = vcmp.ne.s32.totalorder %v985, 0
    %vm988 = vmand %vm957, %vm986
    %vm989 = vmand %vm958, %vm987
    %v990 = vsel %vm988, 1.0, 0.0
    %v991 = vsel %vm989, 1.0, 0.0
    %v994 = vrot.slane %v991, 7
    %v995 = vsel %vm694, %v994, %v990
    %v997 = vadd.f32 %v972, %v995
    %998 = vst.msk [vmem:[#allocation5] sm:$0x3] %vm944, %v997
    %v999 = vrot.slane %v682, 7
    %v1000 = vsel %vm694, %v999, %v681
    %vm1001 = vcmask 1024
    %1002 = vst.msk [vmem:[#allocation3] sm:$0x3] %vm1001, %v1000
  $region25: #{_mwer_forward.1} parent=0 // pred_fallthru
    _
  %s1003 = sadd.s32 %s675, 2
  %p1004 = scmp.lt.s32.totalorder %s1003, 8
  // Predicated region
  $region26: #{_mwer_forward.1} parent=0 // pred_check
    %p1005 = pneg %p1004
  $region27: #{_mwer_forward.1} parent=0 // pred_check_branch
    %1007 = sbr.rel (%p1005) target = $region29
  $region28: #{_mwer_forward.1} parent=0 // pred_region
    %v1008 = vld [vmem:[%s1 + $0x2] sm:$0x1]
    %v1009 = vld [vmem:[%s1 + $0xa] sm:$0x1]
    %v1010 = vld [vmem:[#allocation3] sm:$0x3]
    %vm1011 = vcmp.eq.s32.totalorder %v1010, 1
    %v1012 = vld [vmem:[#allocation2] sm:$0x3]
    %1014 = vset.pattern.permute.xlu0 0
    %1015 = vperm.xlu0 %1014, %v1012
    %v1016 = vpop.permute.xlu0 %1015
    %v1020 = vrot.slane %v275, 2
    %v1021 = vrot.slane %v276, 1
    %vm1022 = vcmask 1041409
    %v1023 = vsel %vm1022, %v1021, %v1020
    %v1025 = vadd.f32 %v1016, %v1023
    %1026 = vset.pattern.permute.xlu0 1
    %1027 = vperm.xlu0 %1026, %v1012
    %v1028 = vpop.permute.xlu0 %1027
    %v1030 = vadd.f32 %v1028, %v1023
    %1031 = vset.pattern.permute.xlu0 2
    %1032 = vperm.xlu0 %1031, %v1012
    %v1033 = vpop.permute.xlu0 %1032
    %v1035 = vadd.f32 %v1033, %v1023
    %1036 = vset.pattern.permute.xlu0 3
    %1037 = vperm.xlu0 %1036, %v1012
    %v1038 = vpop.permute.xlu0 %1037
    %v1040 = vadd.f32 %v1038, %v1023
    %1042 = vrot.lane.b32.xlu0 %v1030, 4
    %v1043 = vpop.permute.xlu0 %1042
    %1046 = vrot.lane.b32.xlu0 %v1035, 8
    %v1047 = vpop.permute.xlu0 %1046
    %1050 = vrot.lane.b32.xlu0 %v1040, 12
    %v1051 = vpop.permute.xlu0 %1050
    %v1053 = vsel %vm26, %v1025, %v1043
    %vm1054 = vcmask 64512
    %v1055 = vsel %vm1054, %v1053, %v1047
    %vm1056 = vcmask 97280
    %v1057 = vsel %vm1056, %v1055, %v1051
    %v1058 = vrot.slane %v225, 7
    %vm1059 = vcmask 1043459
    %v1060 = vsel %vm1059, %v1058, %v224
    %1061 = vrot.lane.b32.xlu0 %v1060, 4
    %v1062 = vpop.permute.xlu0 %1061
    %1063 = vrot.lane.b32.xlu0 %v1060, 8
    %v1064 = vpop.permute.xlu0 %1063
    %1065 = vrot.lane.b32.xlu0 %v1060, 12
    %v1066 = vpop.permute.xlu0 %1065
    %v1067 = vsel %vm26, %v1060, %v1062
    %v1068 = vsel %vm1054, %v1067, %v1064
    %v1069 = vsel %vm1056, %v1068, %v1066
    %v1070 = vrot.slane %v276, 7
    %v1071 = vsel %vm1059, %v1070, %v275
    %1073 = vrot.lane.b32.xlu0 %v1071, 4
    %v1074 = vpop.permute.xlu0 %1073
    %1076 = vrot.lane.b32.xlu0 %v1071, 8
    %v1077 = vpop.permute.xlu0 %1076
    %1079 = vrot.lane.b32.xlu0 %v1071, 12
    %v1080 = vpop.permute.xlu0 %1079
    %v1082 = vsel %vm26, %v1071, %v1074
    %v1083 = vsel %vm1054, %v1082, %v1077
    %v1084 = vsel %vm1056, %v1083, %v1080
    %vm1085 = vcmask 123904
    %v1086 = vsel %vm1085, %v1057, -inf
    %1087 = vmax.xlane.f32.xlu0 %v1086
    %v1088 = vpop.xlane.xlu0 %1087
    %vm1089 = vcmp.eq.f32.partialorder %v1057, %v1088
    %v1090 = vsel %vm1089, %v17, 16
    %v1091 = vsel %vm1085, %v1090, 2147483647
    %v1092 = vand.u32 %v1091, 65535
    %v1093 = vshra.s32 %v1091, 16
    %v1094 = vcvt.s32.f32 %v1092
    %v1095 = vcvt.s32.f32 %v1093
    %1096 = vmin.xlane.f32.xlu0 %v1095
    %v1097 = vpop.xlane.xlu0 %1096
    %vm1098 = vcmp.eq.f32.partialorder %v1095, %v1097
    %v1099 = vsel %vm1098, %v1094, inf
    %1100 = vmin.xlane.f32.xlu0 %v1099
    %v1101 = vpop.xlane.xlu0 %1100
    %v1102 = vcvt.f32.s32 %v1101
    %v1103 = vcvt.f32.s32 %v1097
    %v1104 = vshll.u32 %v1103, 16
    %v1105 = vadd.s32 %v1104, %v1102
    %vm1106 = vcmp.eq.s32.totalorder %v17, %v1105
    %v1107 = vrot.slane %v1069, 2
    %v1108 = vsel %vm1106, %v1107, 32
    %v1109 = vsel %vm1085, %v1108, 2147483647
    %v1110 = vand.u32 %v1109, 65535
    %v1111 = vshra.s32 %v1109, 16
    %v1112 = vcvt.s32.f32 %v1110
    %v1113 = vcvt.s32.f32 %v1111
    %1114 = vmin.xlane.f32.xlu0 %v1113
    %v1115 = vpop.xlane.xlu0 %1114
    %vm1116 = vcmp.eq.f32.partialorder %v1113, %v1115
    %v1117 = vsel %vm1116, %v1112, inf
    %1118 = vmin.xlane.f32.xlu0 %v1117
    %v1119 = vpop.xlane.xlu0 %1118
    %v1120 = vcvt.f32.s32 %v1119
    %v1121 = vcvt.f32.s32 %v1115
    %v1122 = vshll.u32 %v1121, 16
    %v1123 = vadd.s32 %v1122, %v1120
    %v1125 = vrot.slane %v1084, 2
    %v1127 = vsel %vm1106, %v1125, 0.0
    %v1128 = vsel %vm1085, %v1127, 0.0
    %1129 = vadd.xlane.f32.xlu0 %v1128
    %v1130 = vpop.xlane.xlu0 %1129
    %v1131 = vsel %vm1106, -inf, %v1057
    %v1132 = vsel %vm1085, %v1131, -inf
    %1133 = vmax.xlane.f32.xlu0 %v1132
    %v1134 = vpop.xlane.xlu0 %1133
    %vm1135 = vcmp.eq.f32.partialorder %v1131, %v1134
    %v1136 = vsel %vm1135, %v17, 16
    %v1137 = vsel %vm1085, %v1136, 2147483647
    %v1138 = vand.u32 %v1137, 65535
    %v1139 = vshra.s32 %v1137, 16
    %v1140 = vcvt.s32.f32 %v1138
    %v1141 = vcvt.s32.f32 %v1139
    %1142 = vmin.xlane.f32.xlu0 %v1141
    %v1143 = vpop.xlane.xlu0 %1142
    %vm1144 = vcmp.eq.f32.partialorder %v1141, %v1143
    %v1145 = vsel %vm1144, %v1140, inf
    %1146 = vmin.xlane.f32.xlu0 %v1145
    %v1147 = vpop.xlane.xlu0 %1146
    %v1148 = vcvt.f32.s32 %v1147
    %v1149 = vcvt.f32.s32 %v1143
    %v1150 = vshll.u32 %v1149, 16
    %v1151 = vadd.s32 %v1150, %v1148
    %vm1152 = vcmp.eq.s32.totalorder %v17, %v1151
    %v1153 = vsel %vm1152, %v1107, 32
    %v1154 = vsel %vm1085, %v1153, 2147483647
    %v1155 = vand.u32 %v1154, 65535
    %v1156 = vshra.s32 %v1154, 16
    %v1157 = vcvt.s32.f32 %v1155
    %v1158 = vcvt.s32.f32 %v1156
    %1159 = vmin.xlane.f32.xlu0 %v1158
    %v1160 = vpop.xlane.xlu0 %1159
    %vm1161 = vcmp.eq.f32.partialorder %v1158, %v1160
    %v1162 = vsel %vm1161, %v1157, inf
    %1163 = vmin.xlane.f32.xlu0 %v1162
    %v1164 = vpop.xlane.xlu0 %1163
    %v1165 = vcvt.f32.s32 %v1164
    %v1166 = vcvt.f32.s32 %v1160
    %v1167 = vshll.u32 %v1166, 16
    %v1168 = vadd.s32 %v1167, %v1165
    %v1169 = vsel %vm1152, %v1125, 0.0
    %v1170 = vsel %vm1085, %v1169, 0.0
    %1171 = vadd.xlane.f32.xlu0 %v1170
    %v1172 = vpop.xlane.xlu0 %1171
    %v1173 = vsel %vm1152, -inf, %v1131
    %v1174 = vsel %vm1085, %v1173, -inf
    %1175 = vmax.xlane.f32.xlu0 %v1174
    %v1176 = vpop.xlane.xlu0 %1175
    %vm1177 = vcmp.eq.f32.partialorder %v1173, %v1176
    %v1178 = vsel %vm1177, %v17, 16
    %v1179 = vsel %vm1085, %v1178, 2147483647
    %v1180 = vand.u32 %v1179, 65535
    %v1181 = vshra.s32 %v1179, 16
    %v1182 = vcvt.s32.f32 %v1180
    %v1183 = vcvt.s32.f32 %v1181
    %1184 = vmin.xlane.f32.xlu0 %v1183
    %v1185 = vpop.xlane.xlu0 %1184
    %vm1186 = vcmp.eq.f32.partialorder %v1183, %v1185
    %v1187 = vsel %vm1186, %v1182, inf
    %1188 = vmin.xlane.f32.xlu0 %v1187
    %v1189 = vpop.xlane.xlu0 %1188
    %v1190 = vcvt.f32.s32 %v1189
    %v1191 = vcvt.f32.s32 %v1185
    %v1192 = vshll.u32 %v1191, 16
    %v1193 = vadd.s32 %v1192, %v1190
    %vm1194 = vcmp.eq.s32.totalorder %v17, %v1193
    %v1195 = vsel %vm1194, %v1107, 32
    %v1196 = vsel %vm1085, %v1195, 2147483647
    %v1197 = vand.u32 %v1196, 65535
    %v1198 = vshra.s32 %v1196, 16
    %v1199 = vcvt.s32.f32 %v1197
    %v1200 = vcvt.s32.f32 %v1198
    %1201 = vmin.xlane.f32.xlu0 %v1200
    %v1202 = vpop.xlane.xlu0 %1201
    %vm1203 = vcmp.eq.f32.partialorder %v1200, %v1202
    %v1204 = vsel %vm1203, %v1199, inf
    %1205 = vmin.xlane.f32.xlu0 %v1204
    %v1206 = vpop.xlane.xlu0 %1205
    %v1207 = vcvt.f32.s32 %v1206
    %v1208 = vcvt.f32.s32 %v1202
    %v1209 = vshll.u32 %v1208, 16
    %v1210 = vadd.s32 %v1209, %v1207
    %v1211 = vsel %vm1194, %v1125, 0.0
    %v1212 = vsel %vm1085, %v1211, 0.0
    %1213 = vadd.xlane.f32.xlu0 %v1212
    %v1214 = vpop.xlane.xlu0 %1213
    %v1215 = vsel %vm1194, -inf, %v1173
    %v1216 = vsel %vm1085, %v1215, -inf
    %1217 = vmax.xlane.f32.xlu0 %v1216
    %v1218 = vpop.xlane.xlu0 %1217
    %vm1219 = vcmp.eq.f32.partialorder %v1215, %v1218
    %v1220 = vsel %vm1219, %v17, 16
    %v1221 = vsel %vm1085, %v1220, 2147483647
    %v1222 = vand.u32 %v1221, 65535
    %v1223 = vshra.s32 %v1221, 16
    %v1224 = vcvt.s32.f32 %v1222
    %v1225 = vcvt.s32.f32 %v1223
    %1226 = vmin.xlane.f32.xlu0 %v1225
    %v1227 = vpop.xlane.xlu0 %1226
    %vm1228 = vcmp.eq.f32.partialorder %v1225, %v1227
    %v1229 = vsel %vm1228, %v1224, inf
    %1230 = vmin.xlane.f32.xlu0 %v1229
    %v1231 = vpop.xlane.xlu0 %1230
    %v1232 = vcvt.f32.s32 %v1231
    %v1233 = vcvt.f32.s32 %v1227
    %v1234 = vshll.u32 %v1233, 16
    %v1235 = vadd.s32 %v1234, %v1232
    %vm1236 = vcmp.eq.s32.totalorder %v17, %v1235
    %v1237 = vsel %vm1236, %v1107, 32
    %v1238 = vsel %vm1085, %v1237, 2147483647
    %v1239 = vand.u32 %v1238, 65535
    %v1240 = vshra.s32 %v1238, 16
    %v1241 = vcvt.s32.f32 %v1239
    %v1242 = vcvt.s32.f32 %v1240
    %1243 = vmin.xlane.f32.xlu0 %v1242
    %v1244 = vpop.xlane.xlu0 %1243
    %vm1245 = vcmp.eq.f32.partialorder %v1242, %v1244
    %v1246 = vsel %vm1245, %v1241, inf
    %1247 = vmin.xlane.f32.xlu0 %v1246
    %v1248 = vpop.xlane.xlu0 %1247
    %v1249 = vcvt.f32.s32 %v1248
    %v1250 = vcvt.f32.s32 %v1244
    %v1251 = vshll.u32 %v1250, 16
    %v1252 = vadd.s32 %v1251, %v1249
    %v1253 = vsel %vm1236, %v1125, 0.0
    %v1254 = vsel %vm1085, %v1253, 0.0
    %1255 = vadd.xlane.f32.xlu0 %v1254
    %v1256 = vpop.xlane.xlu0 %1255
    %v1257 = vsel %vm211, %v1088, %v1134
    %v1258 = vsel %vm214, %v1257, %v1176
    %v1259 = vsel %vm217, %v1258, %v1218
    %v1260 = vsel %vm211, %v1123, %v1168
    %v1261 = vsel %vm214, %v1260, %v1210
    %v1262 = vsel %vm217, %v1261, %v1252
    %v1263 = vsel %vm211, %v1130, %v1172
    %v1264 = vsel %vm214, %v1263, %v1214
    %v1265 = vsel %vm217, %v1264, %v1256
    %v1266 = vsel %vm1011, 1, 0
    %1267 = vset.pattern.permute.xlu0 0
    %1268 = vperm.xlu0 %1267, %v1266
    %v1269 = vpop.permute.xlu0 %1268
    %vm1270 = vcmp.eq.s32.totalorder %v1269, 1
    %v1271 = vsel %vm1270, %v1012, %v1259
    %vm1272 = vcmask 25600
    %1273 = vst.msk [vmem:[#allocation2] sm:$0x3] %vm1272, %v1271
    %vm1274 = vcmp.eq.s32.totalorder %v1008, 0
    %vm1275 = vcmp.eq.s32.totalorder %v1009, 0
    %v1276 = vld [vmem:[#allocation4] sm:$0x3]
    %v1277 = vsel %vm1274, 1, 0
    %v1278 = vsel %vm1275, 1, 0
    %1279 = vset.pattern.permute.xlu0 0
    %1280 = vperm.xlu0 %1279, %v1277
    %v1281 = vpop.permute.xlu0 %1280
    %1282 = vset.pattern.permute.xlu0 0
    %1283 = vperm.xlu0 %1282, %v1278
    %v1284 = vpop.permute.xlu0 %1283
    %vm1285 = vcmp.eq.s32.totalorder %v1281, 1
    %vm1286 = vcmp.eq.s32.totalorder %v1284, 1
    %v1288 = vrot.slane %v1265, 1
    %v1291 = vsel %vm1285, %v1265, 0.0
    %v1292 = vsel %vm1286, %v1288, 0.0
    %v1295 = vrot.slane %v1292, 7
    %v1296 = vsel %vm1022, %v1295, %v1291
    %v1298 = vadd.f32 %v1276, %v1296
    %1299 = vst.msk [vmem:[#allocation4] sm:$0x3] %vm1272, %v1298
    %v1300 = vld [vmem:[#allocation5] sm:$0x3]
    %v1301 = vld [vmem:[%s2 + $0x2] sm:$0x1]
    %v1302 = vld [vmem:[%s2 + $0xa] sm:$0x1]
    %1303 = vset.pattern.permute.xlu0 0
    %1304 = vperm.xlu0 %1303, %v1301
    %v1305 = vpop.permute.xlu0 %1304
    %1306 = vset.pattern.permute.xlu0 0
    %1307 = vperm.xlu0 %1306, %v1302
    %v1308 = vpop.permute.xlu0 %1307
    %v1309 = vrot.slane %v1308, 7
    %v1310 = vsel %vm1022, %v1309, %v1305
    %vm1311 = vcmp.ne.s32.totalorder %v1262, %v1310
    %v1312 = vsel %vm1311, 1, 0
    %v1313 = vrot.slane %v1312, 1
    %vm1314 = vcmp.ne.s32.totalorder %v1312, 0
    %vm1315 = vcmp.ne.s32.totalorder %v1313, 0
    %vm1316 = vmand %vm1285, %vm1314
    %vm1317 = vmand %vm1286, %vm1315
    %v1318 = vsel %vm1316, 1.0, 0.0
    %v1319 = vsel %vm1317, 1.0, 0.0
    %v1322 = vrot.slane %v1319, 7
    %v1323 = vsel %vm1022, %v1322, %v1318
    %v1325 = vadd.f32 %v1300, %v1323
    %1326 = vst.msk [vmem:[#allocation5] sm:$0x3] %vm1272, %v1325
    %v1327 = vrot.slane %v1009, 7
    %v1328 = vsel %vm1022, %v1327, %v1008
    %vm1329 = vcmask 1024
    %1330 = vst.msk [vmem:[#allocation3] sm:$0x3] %vm1329, %v1328
  $region29: #{_mwer_forward.1} parent=0 // pred_fallthru
    _
  %s1331 = sadd.s32 %s675, 3
  %p1332 = scmp.lt.s32.totalorder %s1331, 8
  // Predicated region
  $region30: #{_mwer_forward.1} parent=0 // pred_check
    %p1333 = pneg %p1332
  $region31: #{_mwer_forward.1} parent=0 // pred_check_branch
    %1335 = sbr.rel (%p1333) target = $region33
  $region32: #{_mwer_forward.1} parent=0 // pred_region
    %v1336 = vld [vmem:[%s1 + $0x3] sm:$0x1]
    %v1337 = vld [vmem:[%s1 + $0xb] sm:$0x1]
    %v1338 = vld [vmem:[#allocation3] sm:$0x3]
    %vm1339 = vcmp.eq.s32.totalorder %v1338, 1
    %v1340 = vld [vmem:[#allocation2] sm:$0x3]
    %1342 = vset.pattern.permute.xlu0 0
    %1343 = vperm.xlu0 %1342, %v1340
    %v1344 = vpop.permute.xlu0 %1343
    %v1348 = vrot.slane %v275, 3
    %v1349 = vrot.slane %v276, 2
    %vm1350 = vcmask 1041409
    %v1351 = vsel %vm1350, %v1349, %v1348
    %v1353 = vadd.f32 %v1344, %v1351
    %1354 = vset.pattern.permute.xlu0 1
    %1355 = vperm.xlu0 %1354, %v1340
    %v1356 = vpop.permute.xlu0 %1355
    %v1358 = vadd.f32 %v1356, %v1351
    %1359 = vset.pattern.permute.xlu0 2
    %1360 = vperm.xlu0 %1359, %v1340
    %v1361 = vpop.permute.xlu0 %1360
    %v1363 = vadd.f32 %v1361, %v1351
    %1364 = vset.pattern.permute.xlu0 3
    %1365 = vperm.xlu0 %1364, %v1340
    %v1366 = vpop.permute.xlu0 %1365
    %v1368 = vadd.f32 %v1366, %v1351
    %1370 = vrot.lane.b32.xlu0 %v1358, 4
    %v1371 = vpop.permute.xlu0 %1370
    %1374 = vrot.lane.b32.xlu0 %v1363, 8
    %v1375 = vpop.permute.xlu0 %1374
    %1378 = vrot.lane.b32.xlu0 %v1368, 12
    %v1379 = vpop.permute.xlu0 %1378
    %v1381 = vsel %vm26, %v1353, %v1371
    %vm1382 = vcmask 64512
    %v1383 = vsel %vm1382, %v1381, %v1375
    %vm1384 = vcmask 97280
    %v1385 = vsel %vm1384, %v1383, %v1379
    %v1386 = vrot.slane %v225, 7
    %vm1387 = vcmask 1044484
    %v1388 = vsel %vm1387, %v1386, %v224
    %1389 = vrot.lane.b32.xlu0 %v1388, 4
    %v1390 = vpop.permute.xlu0 %1389
    %1391 = vrot.lane.b32.xlu0 %v1388, 8
    %v1392 = vpop.permute.xlu0 %1391
    %1393 = vrot.lane.b32.xlu0 %v1388, 12
    %v1394 = vpop.permute.xlu0 %1393
    %v1395 = vsel %vm26, %v1388, %v1390
    %v1396 = vsel %vm1382, %v1395, %v1392
    %v1397 = vsel %vm1384, %v1396, %v1394
    %v1398 = vrot.slane %v276, 7
    %v1399 = vsel %vm1387, %v1398, %v275
    %1401 = vrot.lane.b32.xlu0 %v1399, 4
    %v1402 = vpop.permute.xlu0 %1401
    %1404 = vrot.lane.b32.xlu0 %v1399, 8
    %v1405 = vpop.permute.xlu0 %1404
    %1407 = vrot.lane.b32.xlu0 %v1399, 12
    %v1408 = vpop.permute.xlu0 %1407
    %v1410 = vsel %vm26, %v1399, %v1402
    %v1411 = vsel %vm1382, %v1410, %v1405
    %v1412 = vsel %vm1384, %v1411, %v1408
    %vm1413 = vcmask 123904
    %v1414 = vsel %vm1413, %v1385, -inf
    %1415 = vmax.xlane.f32.xlu0 %v1414
    %v1416 = vpop.xlane.xlu0 %1415
    %vm1417 = vcmp.eq.f32.partialorder %v1385, %v1416
    %v1418 = vsel %vm1417, %v17, 16
    %v1419 = vsel %vm1413, %v1418, 2147483647
    %v1420 = vand.u32 %v1419, 65535
    %v1421 = vshra.s32 %v1419, 16
    %v1422 = vcvt.s32.f32 %v1420
    %v1423 = vcvt.s32.f32 %v1421
    %1424 = vmin.xlane.f32.xlu0 %v1423
    %v1425 = vpop.xlane.xlu0 %1424
    %vm1426 = vcmp.eq.f32.partialorder %v1423, %v1425
    %v1427 = vsel %vm1426, %v1422, inf
    %1428 = vmin.xlane.f32.xlu0 %v1427
    %v1429 = vpop.xlane.xlu0 %1428
    %v1430 = vcvt.f32.s32 %v1429
    %v1431 = vcvt.f32.s32 %v1425
    %v1432 = vshll.u32 %v1431, 16
    %v1433 = vadd.s32 %v1432, %v1430
    %vm1434 = vcmp.eq.s32.totalorder %v17, %v1433
    %v1435 = vrot.slane %v1397, 3
    %v1436 = vsel %vm1434, %v1435, 32
    %v1437 = vsel %vm1413, %v1436, 2147483647
    %v1438 = vand.u32 %v1437, 65535
    %v1439 = vshra.s32 %v1437, 16
    %v1440 = vcvt.s32.f32 %v1438
    %v1441 = vcvt.s32.f32 %v1439
    %1442 = vmin.xlane.f32.xlu0 %v1441
    %v1443 = vpop.xlane.xlu0 %1442
    %vm1444 = vcmp.eq.f32.partialorder %v1441, %v1443
    %v1445 = vsel %vm1444, %v1440, inf
    %1446 = vmin.xlane.f32.xlu0 %v1445
    %v1447 = vpop.xlane.xlu0 %1446
    %v1448 = vcvt.f32.s32 %v1447
    %v1449 = vcvt.f32.s32 %v1443
    %v1450 = vshll.u32 %v1449, 16
    %v1451 = vadd.s32 %v1450, %v1448
    %v1453 = vrot.slane %v1412, 3
    %v1455 = vsel %vm1434, %v1453, 0.0
    %v1456 = vsel %vm1413, %v1455, 0.0
    %1457 = vadd.xlane.f32.xlu0 %v1456
    %v1458 = vpop.xlane.xlu0 %1457
    %v1459 = vsel %vm1434, -inf, %v1385
    %v1460 = vsel %vm1413, %v1459, -inf
    %1461 = vmax.xlane.f32.xlu0 %v1460
    %v1462 = vpop.xlane.xlu0 %1461
    %vm1463 = vcmp.eq.f32.partialorder %v1459, %v1462
    %v1464 = vsel %vm1463, %v17, 16
    %v1465 = vsel %vm1413, %v1464, 2147483647
    %v1466 = vand.u32 %v1465, 65535
    %v1467 = vshra.s32 %v1465, 16
    %v1468 = vcvt.s32.f32 %v1466
    %v1469 = vcvt.s32.f32 %v1467
    %1470 = vmin.xlane.f32.xlu0 %v1469
    %v1471 = vpop.xlane.xlu0 %1470
    %vm1472 = vcmp.eq.f32.partialorder %v1469, %v1471
    %v1473 = vsel %vm1472, %v1468, inf
    %1474 = vmin.xlane.f32.xlu0 %v1473
    %v1475 = vpop.xlane.xlu0 %1474
    %v1476 = vcvt.f32.s32 %v1475
    %v1477 = vcvt.f32.s32 %v1471
    %v1478 = vshll.u32 %v1477, 16
    %v1479 = vadd.s32 %v1478, %v1476
    %vm1480 = vcmp.eq.s32.totalorder %v17, %v1479
    %v1481 = vsel %vm1480, %v1435, 32
    %v1482 = vsel %vm1413, %v1481, 2147483647
    %v1483 = vand.u32 %v1482, 65535
    %v1484 = vshra.s32 %v1482, 16
    %v1485 = vcvt.s32.f32 %v1483
    %v1486 = vcvt.s32.f32 %v1484
    %1487 = vmin.xlane.f32.xlu0 %v1486
    %v1488 = vpop.xlane.xlu0 %1487
    %vm1489 = vcmp.eq.f32.partialorder %v1486, %v1488
    %v1490 = vsel %vm1489, %v1485, inf
    %1491 = vmin.xlane.f32.xlu0 %v1490
    %v1492 = vpop.xlane.xlu0 %1491
    %v1493 = vcvt.f32.s32 %v1492
    %v1494 = vcvt.f32.s32 %v1488
    %v1495 = vshll.u32 %v1494, 16
    %v1496 = vadd.s32 %v1495, %v1493
    %v1497 = vsel %vm1480, %v1453, 0.0
    %v1498 = vsel %vm1413, %v1497, 0.0
    %1499 = vadd.xlane.f32.xlu0 %v1498
    %v1500 = vpop.xlane.xlu0 %1499
    %v1501 = vsel %vm1480, -inf, %v1459
    %v1502 = vsel %vm1413, %v1501, -inf
    %1503 = vmax.xlane.f32.xlu0 %v1502
    %v1504 = vpop.xlane.xlu0 %1503
    %vm1505 = vcmp.eq.f32.partialorder %v1501, %v1504
    %v1506 = vsel %vm1505, %v17, 16
    %v1507 = vsel %vm1413, %v1506, 2147483647
    %v1508 = vand.u32 %v1507, 65535
    %v1509 = vshra.s32 %v1507, 16
    %v1510 = vcvt.s32.f32 %v1508
    %v1511 = vcvt.s32.f32 %v1509
    %1512 = vmin.xlane.f32.xlu0 %v1511
    %v1513 = vpop.xlane.xlu0 %1512
    %vm1514 = vcmp.eq.f32.partialorder %v1511, %v1513
    %v1515 = vsel %vm1514, %v1510, inf
    %1516 = vmin.xlane.f32.xlu0 %v1515
    %v1517 = vpop.xlane.xlu0 %1516
    %v1518 = vcvt.f32.s32 %v1517
    %v1519 = vcvt.f32.s32 %v1513
    %v1520 = vshll.u32 %v1519, 16
    %v1521 = vadd.s32 %v1520, %v1518
    %vm1522 = vcmp.eq.s32.totalorder %v17, %v1521
    %v1523 = vsel %vm1522, %v1435, 32
    %v1524 = vsel %vm1413, %v1523, 2147483647
    %v1525 = vand.u32 %v1524, 65535
    %v1526 = vshra.s32 %v1524, 16
    %v1527 = vcvt.s32.f32 %v1525
    %v1528 = vcvt.s32.f32 %v1526
    %1529 = vmin.xlane.f32.xlu0 %v1528
    %v1530 = vpop.xlane.xlu0 %1529
    %vm1531 = vcmp.eq.f32.partialorder %v1528, %v1530
    %v1532 = vsel %vm1531, %v1527, inf
    %1533 = vmin.xlane.f32.xlu0 %v1532
    %v1534 = vpop.xlane.xlu0 %1533
    %v1535 = vcvt.f32.s32 %v1534
    %v1536 = vcvt.f32.s32 %v1530
    %v1537 = vshll.u32 %v1536, 16
    %v1538 = vadd.s32 %v1537, %v1535
    %v1539 = vsel %vm1522, %v1453, 0.0
    %v1540 = vsel %vm1413, %v1539, 0.0
    %1541 = vadd.xlane.f32.xlu0 %v1540
    %v1542 = vpop.xlane.xlu0 %1541
    %v1543 = vsel %vm1522, -inf, %v1501
    %v1544 = vsel %vm1413, %v1543, -inf
    %1545 = vmax.xlane.f32.xlu0 %v1544
    %v1546 = vpop.xlane.xlu0 %1545
    %vm1547 = vcmp.eq.f32.partialorder %v1543, %v1546
    %v1548 = vsel %vm1547, %v17, 16
    %v1549 = vsel %vm1413, %v1548, 2147483647
    %v1550 = vand.u32 %v1549, 65535
    %v1551 = vshra.s32 %v1549, 16
    %v1552 = vcvt.s32.f32 %v1550
    %v1553 = vcvt.s32.f32 %v1551
    %1554 = vmin.xlane.f32.xlu0 %v1553
    %v1555 = vpop.xlane.xlu0 %1554
    %vm1556 = vcmp.eq.f32.partialorder %v1553, %v1555
    %v1557 = vsel %vm1556, %v1552, inf
    %1558 = vmin.xlane.f32.xlu0 %v1557
    %v1559 = vpop.xlane.xlu0 %1558
    %v1560 = vcvt.f32.s32 %v1559
    %v1561 = vcvt.f32.s32 %v1555
    %v1562 = vshll.u32 %v1561, 16
    %v1563 = vadd.s32 %v1562, %v1560
    %vm1564 = vcmp.eq.s32.totalorder %v17, %v1563
    %v1565 = vsel %vm1564, %v1435, 32
    %v1566 = vsel %vm1413, %v1565, 2147483647
    %v1567 = vand.u32 %v1566, 65535
    %v1568 = vshra.s32 %v1566, 16
    %v1569 = vcvt.s32.f32 %v1567
    %v1570 = vcvt.s32.f32 %v1568
    %1571 = vmin.xlane.f32.xlu0 %v1570
    %v1572 = vpop.xlane.xlu0 %1571
    %vm1573 = vcmp.eq.f32.partialorder %v1570, %v1572
    %v1574 = vsel %vm1573, %v1569, inf
    %1575 = vmin.xlane.f32.xlu0 %v1574
    %v1576 = vpop.xlane.xlu0 %1575
    %v1577 = vcvt.f32.s32 %v1576
    %v1578 = vcvt.f32.s32 %v1572
    %v1579 = vshll.u32 %v1578, 16
    %v1580 = vadd.s32 %v1579, %v1577
    %v1581 = vsel %vm1564, %v1453, 0.0
    %v1582 = vsel %vm1413, %v1581, 0.0
    %1583 = vadd.xlane.f32.xlu0 %v1582
    %v1584 = vpop.xlane.xlu0 %1583
    %v1585 = vsel %vm211, %v1416, %v1462
    %v1586 = vsel %vm214, %v1585, %v1504
    %v1587 = vsel %vm217, %v1586, %v1546
    %v1588 = vsel %vm211, %v1451, %v1496
    %v1589 = vsel %vm214, %v1588, %v1538
    %v1590 = vsel %vm217, %v1589, %v1580
    %v1591 = vsel %vm211, %v1458, %v1500
    %v1592 = vsel %vm214, %v1591, %v1542
    %v1593 = vsel %vm217, %v1592, %v1584
    %v1594 = vsel %vm1339, 1, 0
    %1595 = vset.pattern.permute.xlu0 0
    %1596 = vperm.xlu0 %1595, %v1594
    %v1597 = vpop.permute.xlu0 %1596
    %vm1598 = vcmp.eq.s32.totalorder %v1597, 1
    %v1599 = vsel %vm1598, %v1340, %v1587
    %vm1600 = vcmask 25600
    %1601 = vst.msk [vmem:[#allocation2] sm:$0x3] %vm1600, %v1599
    %vm1602 = vcmp.eq.s32.totalorder %v1336, 0
    %vm1603 = vcmp.eq.s32.totalorder %v1337, 0
    %v1604 = vld [vmem:[#allocation4] sm:$0x3]
    %v1605 = vsel %vm1602, 1, 0
    %v1606 = vsel %vm1603, 1, 0
    %1607 = vset.pattern.permute.xlu0 0
    %1608 = vperm.xlu0 %1607, %v1605
    %v1609 = vpop.permute.xlu0 %1608
    %1610 = vset.pattern.permute.xlu0 0
    %1611 = vperm.xlu0 %1610, %v1606
    %v1612 = vpop.permute.xlu0 %1611
    %vm1613 = vcmp.eq.s32.totalorder %v1609, 1
    %vm1614 = vcmp.eq.s32.totalorder %v1612, 1
    %v1616 = vrot.slane %v1593, 1
    %v1619 = vsel %vm1613, %v1593, 0.0
    %v1620 = vsel %vm1614, %v1616, 0.0
    %v1623 = vrot.slane %v1620, 7
    %v1624 = vsel %vm1350, %v1623, %v1619
    %v1626 = vadd.f32 %v1604, %v1624
    %1627 = vst.msk [vmem:[#allocation4] sm:$0x3] %vm1600, %v1626
    %v1628 = vld [vmem:[#allocation5] sm:$0x3]
    %v1629 = vld [vmem:[%s2 + $0x3] sm:$0x1]
    %v1630 = vld [vmem:[%s2 + $0xb] sm:$0x1]
    %1631 = vset.pattern.permute.xlu0 0
    %1632 = vperm.xlu0 %1631, %v1629
    %v1633 = vpop.permute.xlu0 %1632
    %1634 = vset.pattern.permute.xlu0 0
    %1635 = vperm.xlu0 %1634, %v1630
    %v1636 = vpop.permute.xlu0 %1635
    %v1637 = vrot.slane %v1636, 7
    %v1638 = vsel %vm1350, %v1637, %v1633
    %vm1639 = vcmp.ne.s32.totalorder %v1590, %v1638
    %v1640 = vsel %vm1639, 1, 0
    %v1641 = vrot.slane %v1640, 1
    %vm1642 = vcmp.ne.s32.totalorder %v1640, 0
    %vm1643 = vcmp.ne.s32.totalorder %v1641, 0
    %vm1644 = vmand %vm1613, %vm1642
    %vm1645 = vmand %vm1614, %vm1643
    %v1646 = vsel %vm1644, 1.0, 0.0
    %v1647 = vsel %vm1645, 1.0, 0.0
    %v1650 = vrot.slane %v1647, 7
    %v1651 = vsel %vm1350, %v1650, %v1646
    %v1653 = vadd.f32 %v1628, %v1651
    %1654 = vst.msk [vmem:[#allocation5] sm:$0x3] %vm1600, %v1653
    %v1655 = vrot.slane %v1337, 7
    %v1656 = vsel %vm1350, %v1655, %v1336
    %vm1657 = vcmask 1024
    %1658 = vst.msk [vmem:[#allocation3] sm:$0x3] %vm1657, %v1656
  $region33: #{_mwer_forward.1} parent=0 // pred_fallthru
    _
  %s1659 = sadd.s32 %s675, 4
  %p1660 = scmp.lt.s32.totalorder %s1659, 8
  // Predicated region
  $region34: #{_mwer_forward.1} parent=0 // pred_check
    %p1661 = pneg %p1660
  $region35: #{_mwer_forward.1} parent=0 // pred_check_branch
    %1663 = sbr.rel (%p1661) target = $region37
  $region36: #{_mwer_forward.1} parent=0 // pred_region
    %v1664 = vld [vmem:[%s1 + $0x4] sm:$0x1]
    %v1665 = vld [vmem:[%s1 + $0xc] sm:$0x1]
    %v1666 = vld [vmem:[#allocation3] sm:$0x3]
    %vm1667 = vcmp.eq.s32.totalorder %v1666, 1
    %v1668 = vld [vmem:[#allocation2] sm:$0x3]
    %1670 = vset.pattern.permute.xlu0 0
    %1671 = vperm.xlu0 %1670, %v1668
    %v1672 = vpop.permute.xlu0 %1671
    %v1676 = vrot.slane %v275, 4
    %v1677 = vrot.slane %v276, 3
    %vm1678 = vcmask 1041409
    %v1679 = vsel %vm1678, %v1677, %v1676
    %v1681 = vadd.f32 %v1672, %v1679
    %1682 = vset.pattern.permute.xlu0 1
    %1683 = vperm.xlu0 %1682, %v1668
    %v1684 = vpop.permute.xlu0 %1683
    %v1686 = vadd.f32 %v1684, %v1679
    %1687 = vset.pattern.permute.xlu0 2
    %1688 = vperm.xlu0 %1687, %v1668
    %v1689 = vpop.permute.xlu0 %1688
    %v1691 = vadd.f32 %v1689, %v1679
    %1692 = vset.pattern.permute.xlu0 3
    %1693 = vperm.xlu0 %1692, %v1668
    %v1694 = vpop.permute.xlu0 %1693
    %v1696 = vadd.f32 %v1694, %v1679
    %1698 = vrot.lane.b32.xlu0 %v1686, 4
    %v1699 = vpop.permute.xlu0 %1698
    %1702 = vrot.lane.b32.xlu0 %v1691, 8
    %v1703 = vpop.permute.xlu0 %1702
    %1706 = vrot.lane.b32.xlu0 %v1696, 12
    %v1707 = vpop.permute.xlu0 %1706
    %v1709 = vsel %vm26, %v1681, %v1699
    %vm1710 = vcmask 64512
    %v1711 = vsel %vm1710, %v1709, %v1703
    %vm1712 = vcmask 97280
    %v1713 = vsel %vm1712, %v1711, %v1707
    %v1714 = vrot.slane %v225, 7
    %vm1715 = vcmask 1045509
    %v1716 = vsel %vm1715, %v1714, %v224
    %1717 = vrot.lane.b32.xlu0 %v1716, 4
    %v1718 = vpop.permute.xlu0 %1717
    %1719 = vrot.lane.b32.xlu0 %v1716, 8
    %v1720 = vpop.permute.xlu0 %1719
    %1721 = vrot.lane.b32.xlu0 %v1716, 12
    %v1722 = vpop.permute.xlu0 %1721
    %v1723 = vsel %vm26, %v1716, %v1718
    %v1724 = vsel %vm1710, %v1723, %v1720
    %v1725 = vsel %vm1712, %v1724, %v1722
    %v1726 = vrot.slane %v276, 7
    %v1727 = vsel %vm1715, %v1726, %v275
    %1729 = vrot.lane.b32.xlu0 %v1727, 4
    %v1730 = vpop.permute.xlu0 %1729
    %1732 = vrot.lane.b32.xlu0 %v1727, 8
    %v1733 = vpop.permute.xlu0 %1732
    %1735 = vrot.lane.b32.xlu0 %v1727, 12
    %v1736 = vpop.permute.xlu0 %1735
    %v1738 = vsel %vm26, %v1727, %v1730
    %v1739 = vsel %vm1710, %v1738, %v1733
    %v1740 = vsel %vm1712, %v1739, %v1736
    %vm1741 = vcmask 123904
    %v1742 = vsel %vm1741, %v1713, -inf
    %1743 = vmax.xlane.f32.xlu0 %v1742
    %v1744 = vpop.xlane.xlu0 %1743
    %vm1745 = vcmp.eq.f32.partialorder %v1713, %v1744
    %v1746 = vsel %vm1745, %v17, 16
    %v1747 = vsel %vm1741, %v1746, 2147483647
    %v1748 = vand.u32 %v1747, 65535
    %v1749 = vshra.s32 %v1747, 16
    %v1750 = vcvt.s32.f32 %v1748
    %v1751 = vcvt.s32.f32 %v1749
    %1752 = vmin.xlane.f32.xlu0 %v1751
    %v1753 = vpop.xlane.xlu0 %1752
    %vm1754 = vcmp.eq.f32.partialorder %v1751, %v1753
    %v1755 = vsel %vm1754, %v1750, inf
    %1756 = vmin.xlane.f32.xlu0 %v1755
    %v1757 = vpop.xlane.xlu0 %1756
    %v1758 = vcvt.f32.s32 %v1757
    %v1759 = vcvt.f32.s32 %v1753
    %v1760 = vshll.u32 %v1759, 16
    %v1761 = vadd.s32 %v1760, %v1758
    %vm1762 = vcmp.eq.s32.totalorder %v17, %v1761
    %v1763 = vrot.slane %v1725, 4
    %v1764 = vsel %vm1762, %v1763, 32
    %v1765 = vsel %vm1741, %v1764, 2147483647
    %v1766 = vand.u32 %v1765, 65535
    %v1767 = vshra.s32 %v1765, 16
    %v1768 = vcvt.s32.f32 %v1766
    %v1769 = vcvt.s32.f32 %v1767
    %1770 = vmin.xlane.f32.xlu0 %v1769
    %v1771 = vpop.xlane.xlu0 %1770
    %vm1772 = vcmp.eq.f32.partialorder %v1769, %v1771
    %v1773 = vsel %vm1772, %v1768, inf
    %1774 = vmin.xlane.f32.xlu0 %v1773
    %v1775 = vpop.xlane.xlu0 %1774
    %v1776 = vcvt.f32.s32 %v1775
    %v1777 = vcvt.f32.s32 %v1771
    %v1778 = vshll.u32 %v1777, 16
    %v1779 = vadd.s32 %v1778, %v1776
    %v1781 = vrot.slane %v1740, 4
    %v1783 = vsel %vm1762, %v1781, 0.0
    %v1784 = vsel %vm1741, %v1783, 0.0
    %1785 = vadd.xlane.f32.xlu0 %v1784
    %v1786 = vpop.xlane.xlu0 %1785
    %v1787 = vsel %vm1762, -inf, %v1713
    %v1788 = vsel %vm1741, %v1787, -inf
    %1789 = vmax.xlane.f32.xlu0 %v1788
    %v1790 = vpop.xlane.xlu0 %1789
    %vm1791 = vcmp.eq.f32.partialorder %v1787, %v1790
    %v1792 = vsel %vm1791, %v17, 16
    %v1793 = vsel %vm1741, %v1792, 2147483647
    %v1794 = vand.u32 %v1793, 65535
    %v1795 = vshra.s32 %v1793, 16
    %v1796 = vcvt.s32.f32 %v1794
    %v1797 = vcvt.s32.f32 %v1795
    %1798 = vmin.xlane.f32.xlu0 %v1797
    %v1799 = vpop.xlane.xlu0 %1798
    %vm1800 = vcmp.eq.f32.partialorder %v1797, %v1799
    %v1801 = vsel %vm1800, %v1796, inf
    %1802 = vmin.xlane.f32.xlu0 %v1801
    %v1803 = vpop.xlane.xlu0 %1802
    %v1804 = vcvt.f32.s32 %v1803
    %v1805 = vcvt.f32.s32 %v1799
    %v1806 = vshll.u32 %v1805, 16
    %v1807 = vadd.s32 %v1806, %v1804
    %vm1808 = vcmp.eq.s32.totalorder %v17, %v1807
    %v1809 = vsel %vm1808, %v1763, 32
    %v1810 = vsel %vm1741, %v1809, 2147483647
    %v1811 = vand.u32 %v1810, 65535
    %v1812 = vshra.s32 %v1810, 16
    %v1813 = vcvt.s32.f32 %v1811
    %v1814 = vcvt.s32.f32 %v1812
    %1815 = vmin.xlane.f32.xlu0 %v1814
    %v1816 = vpop.xlane.xlu0 %1815
    %vm1817 = vcmp.eq.f32.partialorder %v1814, %v1816
    %v1818 = vsel %vm1817, %v1813, inf
    %1819 = vmin.xlane.f32.xlu0 %v1818
    %v1820 = vpop.xlane.xlu0 %1819
    %v1821 = vcvt.f32.s32 %v1820
    %v1822 = vcvt.f32.s32 %v1816
    %v1823 = vshll.u32 %v1822, 16
    %v1824 = vadd.s32 %v1823, %v1821
    %v1825 = vsel %vm1808, %v1781, 0.0
    %v1826 = vsel %vm1741, %v1825, 0.0
    %1827 = vadd.xlane.f32.xlu0 %v1826
    %v1828 = vpop.xlane.xlu0 %1827
    %v1829 = vsel %vm1808, -inf, %v1787
    %v1830 = vsel %vm1741, %v1829, -inf
    %1831 = vmax.xlane.f32.xlu0 %v1830
    %v1832 = vpop.xlane.xlu0 %1831
    %vm1833 = vcmp.eq.f32.partialorder %v1829, %v1832
    %v1834 = vsel %vm1833, %v17, 16
    %v1835 = vsel %vm1741, %v1834, 2147483647
    %v1836 = vand.u32 %v1835, 65535
    %v1837 = vshra.s32 %v1835, 16
    %v1838 = vcvt.s32.f32 %v1836
    %v1839 = vcvt.s32.f32 %v1837
    %1840 = vmin.xlane.f32.xlu0 %v1839
    %v1841 = vpop.xlane.xlu0 %1840
    %vm1842 = vcmp.eq.f32.partialorder %v1839, %v1841
    %v1843 = vsel %vm1842, %v1838, inf
    %1844 = vmin.xlane.f32.xlu0 %v1843
    %v1845 = vpop.xlane.xlu0 %1844
    %v1846 = vcvt.f32.s32 %v1845
    %v1847 = vcvt.f32.s32 %v1841
    %v1848 = vshll.u32 %v1847, 16
    %v1849 = vadd.s32 %v1848, %v1846
    %vm1850 = vcmp.eq.s32.totalorder %v17, %v1849
    %v1851 = vsel %vm1850, %v1763, 32
    %v1852 = vsel %vm1741, %v1851, 2147483647
    %v1853 = vand.u32 %v1852, 65535
    %v1854 = vshra.s32 %v1852, 16
    %v1855 = vcvt.s32.f32 %v1853
    %v1856 = vcvt.s32.f32 %v1854
    %1857 = vmin.xlane.f32.xlu0 %v1856
    %v1858 = vpop.xlane.xlu0 %1857
    %vm1859 = vcmp.eq.f32.partialorder %v1856, %v1858
    %v1860 = vsel %vm1859, %v1855, inf
    %1861 = vmin.xlane.f32.xlu0 %v1860
    %v1862 = vpop.xlane.xlu0 %1861
    %v1863 = vcvt.f32.s32 %v1862
    %v1864 = vcvt.f32.s32 %v1858
    %v1865 = vshll.u32 %v1864, 16
    %v1866 = vadd.s32 %v1865, %v1863
    %v1867 = vsel %vm1850, %v1781, 0.0
    %v1868 = vsel %vm1741, %v1867, 0.0
    %1869 = vadd.xlane.f32.xlu0 %v1868
    %v1870 = vpop.xlane.xlu0 %1869
    %v1871 = vsel %vm1850, -inf, %v1829
    %v1872 = vsel %vm1741, %v1871, -inf
    %1873 = vmax.xlane.f32.xlu0 %v1872
    %v1874 = vpop.xlane.xlu0 %1873
    %vm1875 = vcmp.eq.f32.partialorder %v1871, %v1874
    %v1876 = vsel %vm1875, %v17, 16
    %v1877 = vsel %vm1741, %v1876, 2147483647
    %v1878 = vand.u32 %v1877, 65535
    %v1879 = vshra.s32 %v1877, 16
    %v1880 = vcvt.s32.f32 %v1878
    %v1881 = vcvt.s32.f32 %v1879
    %1882 = vmin.xlane.f32.xlu0 %v1881
    %v1883 = vpop.xlane.xlu0 %1882
    %vm1884 = vcmp.eq.f32.partialorder %v1881, %v1883
    %v1885 = vsel %vm1884, %v1880, inf
    %1886 = vmin.xlane.f32.xlu0 %v1885
    %v1887 = vpop.xlane.xlu0 %1886
    %v1888 = vcvt.f32.s32 %v1887
    %v1889 = vcvt.f32.s32 %v1883
    %v1890 = vshll.u32 %v1889, 16
    %v1891 = vadd.s32 %v1890, %v1888
    %vm1892 = vcmp.eq.s32.totalorder %v17, %v1891
    %v1893 = vsel %vm1892, %v1763, 32
    %v1894 = vsel %vm1741, %v1893, 2147483647
    %v1895 = vand.u32 %v1894, 65535
    %v1896 = vshra.s32 %v1894, 16
    %v1897 = vcvt.s32.f32 %v1895
    %v1898 = vcvt.s32.f32 %v1896
    %1899 = vmin.xlane.f32.xlu0 %v1898
    %v1900 = vpop.xlane.xlu0 %1899
    %vm1901 = vcmp.eq.f32.partialorder %v1898, %v1900
    %v1902 = vsel %vm1901, %v1897, inf
    %1903 = vmin.xlane.f32.xlu0 %v1902
    %v1904 = vpop.xlane.xlu0 %1903
    %v1905 = vcvt.f32.s32 %v1904
    %v1906 = vcvt.f32.s32 %v1900
    %v1907 = vshll.u32 %v1906, 16
    %v1908 = vadd.s32 %v1907, %v1905
    %v1909 = vsel %vm1892, %v1781, 0.0
    %v1910 = vsel %vm1741, %v1909, 0.0
    %1911 = vadd.xlane.f32.xlu0 %v1910
    %v1912 = vpop.xlane.xlu0 %1911
    %v1913 = vsel %vm211, %v1744, %v1790
    %v1914 = vsel %vm214, %v1913, %v1832
    %v1915 = vsel %vm217, %v1914, %v1874
    %v1916 = vsel %vm211, %v1779, %v1824
    %v1917 = vsel %vm214, %v1916, %v1866
    %v1918 = vsel %vm217, %v1917, %v1908
    %v1919 = vsel %vm211, %v1786, %v1828
    %v1920 = vsel %vm214, %v1919, %v1870
    %v1921 = vsel %vm217, %v1920, %v1912
    %v1922 = vsel %vm1667, 1, 0
    %1923 = vset.pattern.permute.xlu0 0
    %1924 = vperm.xlu0 %1923, %v1922
    %v1925 = vpop.permute.xlu0 %1924
    %vm1926 = vcmp.eq.s32.totalorder %v1925, 1
    %v1927 = vsel %vm1926, %v1668, %v1915
    %vm1928 = vcmask 25600
    %1929 = vst.msk [vmem:[#allocation2] sm:$0x3] %vm1928, %v1927
    %vm1930 = vcmp.eq.s32.totalorder %v1664, 0
    %vm1931 = vcmp.eq.s32.totalorder %v1665, 0
    %v1932 = vld [vmem:[#allocation4] sm:$0x3]
    %v1933 = vsel %vm1930, 1, 0
    %v1934 = vsel %vm1931, 1, 0
    %1935 = vset.pattern.permute.xlu0 0
    %1936 = vperm.xlu0 %1935, %v1933
    %v1937 = vpop.permute.xlu0 %1936
    %1938 = vset.pattern.permute.xlu0 0
    %1939 = vperm.xlu0 %1938, %v1934
    %v1940 = vpop.permute.xlu0 %1939
    %vm1941 = vcmp.eq.s32.totalorder %v1937, 1
    %vm1942 = vcmp.eq.s32.totalorder %v1940, 1
    %v1944 = vrot.slane %v1921, 1
    %v1947 = vsel %vm1941, %v1921, 0.0
    %v1948 = vsel %vm1942, %v1944, 0.0
    %v1951 = vrot.slane %v1948, 7
    %v1952 = vsel %vm1678, %v1951, %v1947
    %v1954 = vadd.f32 %v1932, %v1952
    %1955 = vst.msk [vmem:[#allocation4] sm:$0x3] %vm1928, %v1954
    %v1956 = vld [vmem:[#allocation5] sm:$0x3]
    %v1957 = vld [vmem:[%s2 + $0x4] sm:$0x1]
    %v1958 = vld [vmem:[%s2 + $0xc] sm:$0x1]
    %1959 = vset.pattern.permute.xlu0 0
    %1960 = vperm.xlu0 %1959, %v1957
    %v1961 = vpop.permute.xlu0 %1960
    %1962 = vset.pattern.permute.xlu0 0
    %1963 = vperm.xlu0 %1962, %v1958
    %v1964 = vpop.permute.xlu0 %1963
    %v1965 = vrot.slane %v1964, 7
    %v1966 = vsel %vm1678, %v1965, %v1961
    %vm1967 = vcmp.ne.s32.totalorder %v1918, %v1966
    %v1968 = vsel %vm1967, 1, 0
    %v1969 = vrot.slane %v1968, 1
    %vm1970 = vcmp.ne.s32.totalorder %v1968, 0
    %vm1971 = vcmp.ne.s32.totalorder %v1969, 0
    %vm1972 = vmand %vm1941, %vm1970
    %vm1973 = vmand %vm1942, %vm1971
    %v1974 = vsel %vm1972, 1.0, 0.0
    %v1975 = vsel %vm1973, 1.0, 0.0
    %v1978 = vrot.slane %v1975, 7
    %v1979 = vsel %vm1678, %v1978, %v1974
    %v1981 = vadd.f32 %v1956, %v1979
    %1982 = vst.msk [vmem:[#allocation5] sm:$0x3] %vm1928, %v1981
    %v1983 = vrot.slane %v1665, 7
    %v1984 = vsel %vm1678, %v1983, %v1664
    %vm1985 = vcmask 1024
    %1986 = vst.msk [vmem:[#allocation3] sm:$0x3] %vm1985, %v1984
  $region37: #{_mwer_forward.1} parent=0 // pred_fallthru
    _
  %s1987 = sadd.s32 %s675, 5
  %p1988 = scmp.lt.s32.totalorder %s1987, 8
  // Predicated region
  $region38: #{_mwer_forward.1} parent=0 // pred_check
    %p1989 = pneg %p1988
  $region39: #{_mwer_forward.1} parent=0 // pred_check_branch
    %1991 = sbr.rel (%p1989) target = $region41
  $region40: #{_mwer_forward.1} parent=0 // pred_region
    %v1992 = vld [vmem:[%s1 + $0x5] sm:$0x1]
    %v1993 = vld [vmem:[%s1 + $0xd] sm:$0x1]
    %v1994 = vld [vmem:[#allocation3] sm:$0x3]
    %vm1995 = vcmp.eq.s32.totalorder %v1994, 1
    %v1996 = vld [vmem:[#allocation2] sm:$0x3]
    %1998 = vset.pattern.permute.xlu0 0
    %1999 = vperm.xlu0 %1998, %v1996
    %v2000 = vpop.permute.xlu0 %1999
    %v2004 = vrot.slane %v275, 5
    %v2005 = vrot.slane %v276, 4
    %vm2006 = vcmask 1041409
    %v2007 = vsel %vm2006, %v2005, %v2004
    %v2009 = vadd.f32 %v2000, %v2007
    %2010 = vset.pattern.permute.xlu0 1
    %2011 = vperm.xlu0 %2010, %v1996
    %v2012 = vpop.permute.xlu0 %2011
    %v2014 = vadd.f32 %v2012, %v2007
    %2015 = vset.pattern.permute.xlu0 2
    %2016 = vperm.xlu0 %2015, %v1996
    %v2017 = vpop.permute.xlu0 %2016
    %v2019 = vadd.f32 %v2017, %v2007
    %2020 = vset.pattern.permute.xlu0 3
    %2021 = vperm.xlu0 %2020, %v1996
    %v2022 = vpop.permute.xlu0 %2021
    %v2024 = vadd.f32 %v2022, %v2007
    %2026 = vrot.lane.b32.xlu0 %v2014, 4
    %v2027 = vpop.permute.xlu0 %2026
    %2030 = vrot.lane.b32.xlu0 %v2019, 8
    %v2031 = vpop.permute.xlu0 %2030
    %2034 = vrot.lane.b32.xlu0 %v2024, 12
    %v2035 = vpop.permute.xlu0 %2034
    %v2037 = vsel %vm26, %v2009, %v2027
    %vm2038 = vcmask 64512
    %v2039 = vsel %vm2038, %v2037, %v2031
    %vm2040 = vcmask 97280
    %v2041 = vsel %vm2040, %v2039, %v2035
    %v2042 = vrot.slane %v225, 7
    %vm2043 = vcmask 1046534
    %v2044 = vsel %vm2043, %v2042, %v224
    %2045 = vrot.lane.b32.xlu0 %v2044, 4
    %v2046 = vpop.permute.xlu0 %2045
    %2047 = vrot.lane.b32.xlu0 %v2044, 8
    %v2048 = vpop.permute.xlu0 %2047
    %2049 = vrot.lane.b32.xlu0 %v2044, 12
    %v2050 = vpop.permute.xlu0 %2049
    %v2051 = vsel %vm26, %v2044, %v2046
    %v2052 = vsel %vm2038, %v2051, %v2048
    %v2053 = vsel %vm2040, %v2052, %v2050
    %v2054 = vrot.slane %v276, 7
    %v2055 = vsel %vm2043, %v2054, %v275
    %2057 = vrot.lane.b32.xlu0 %v2055, 4
    %v2058 = vpop.permute.xlu0 %2057
    %2060 = vrot.lane.b32.xlu0 %v2055, 8
    %v2061 = vpop.permute.xlu0 %2060
    %2063 = vrot.lane.b32.xlu0 %v2055, 12
    %v2064 = vpop.permute.xlu0 %2063
    %v2066 = vsel %vm26, %v2055, %v2058
    %v2067 = vsel %vm2038, %v2066, %v2061
    %v2068 = vsel %vm2040, %v2067, %v2064
    %vm2069 = vcmask 123904
    %v2070 = vsel %vm2069, %v2041, -inf
    %2071 = vmax.xlane.f32.xlu0 %v2070
    %v2072 = vpop.xlane.xlu0 %2071
    %vm2073 = vcmp.eq.f32.partialorder %v2041, %v2072
    %v2074 = vsel %vm2073, %v17, 16
    %v2075 = vsel %vm2069, %v2074, 2147483647
    %v2076 = vand.u32 %v2075, 65535
    %v2077 = vshra.s32 %v2075, 16
    %v2078 = vcvt.s32.f32 %v2076
    %v2079 = vcvt.s32.f32 %v2077
    %2080 = vmin.xlane.f32.xlu0 %v2079
    %v2081 = vpop.xlane.xlu0 %2080
    %vm2082 = vcmp.eq.f32.partialorder %v2079, %v2081
    %v2083 = vsel %vm2082, %v2078, inf
    %2084 = vmin.xlane.f32.xlu0 %v2083
    %v2085 = vpop.xlane.xlu0 %2084
    %v2086 = vcvt.f32.s32 %v2085
    %v2087 = vcvt.f32.s32 %v2081
    %v2088 = vshll.u32 %v2087, 16
    %v2089 = vadd.s32 %v2088, %v2086
    %vm2090 = vcmp.eq.s32.totalorder %v17, %v2089
    %v2091 = vrot.slane %v2053, 5
    %v2092 = vsel %vm2090, %v2091, 32
    %v2093 = vsel %vm2069, %v2092, 2147483647
    %v2094 = vand.u32 %v2093, 65535
    %v2095 = vshra.s32 %v2093, 16
    %v2096 = vcvt.s32.f32 %v2094
    %v2097 = vcvt.s32.f32 %v2095
    %2098 = vmin.xlane.f32.xlu0 %v2097
    %v2099 = vpop.xlane.xlu0 %2098
    %vm2100 = vcmp.eq.f32.partialorder %v2097, %v2099
    %v2101 = vsel %vm2100, %v2096, inf
    %2102 = vmin.xlane.f32.xlu0 %v2101
    %v2103 = vpop.xlane.xlu0 %2102
    %v2104 = vcvt.f32.s32 %v2103
    %v2105 = vcvt.f32.s32 %v2099
    %v2106 = vshll.u32 %v2105, 16
    %v2107 = vadd.s32 %v2106, %v2104
    %v2109 = vrot.slane %v2068, 5
    %v2111 = vsel %vm2090, %v2109, 0.0
    %v2112 = vsel %vm2069, %v2111, 0.0
    %2113 = vadd.xlane.f32.xlu0 %v2112
    %v2114 = vpop.xlane.xlu0 %2113
    %v2115 = vsel %vm2090, -inf, %v2041
    %v2116 = vsel %vm2069, %v2115, -inf
    %2117 = vmax.xlane.f32.xlu0 %v2116
    %v2118 = vpop.xlane.xlu0 %2117
    %vm2119 = vcmp.eq.f32.partialorder %v2115, %v2118
    %v2120 = vsel %vm2119, %v17, 16
    %v2121 = vsel %vm2069, %v2120, 2147483647
    %v2122 = vand.u32 %v2121, 65535
    %v2123 = vshra.s32 %v2121, 16
    %v2124 = vcvt.s32.f32 %v2122
    %v2125 = vcvt.s32.f32 %v2123
    %2126 = vmin.xlane.f32.xlu0 %v2125
    %v2127 = vpop.xlane.xlu0 %2126
    %vm2128 = vcmp.eq.f32.partialorder %v2125, %v2127
    %v2129 = vsel %vm2128, %v2124, inf
    %2130 = vmin.xlane.f32.xlu0 %v2129
    %v2131 = vpop.xlane.xlu0 %2130
    %v2132 = vcvt.f32.s32 %v2131
    %v2133 = vcvt.f32.s32 %v2127
    %v2134 = vshll.u32 %v2133, 16
    %v2135 = vadd.s32 %v2134, %v2132
    %vm2136 = vcmp.eq.s32.totalorder %v17, %v2135
    %v2137 = vsel %vm2136, %v2091, 32
    %v2138 = vsel %vm2069, %v2137, 2147483647
    %v2139 = vand.u32 %v2138, 65535
    %v2140 = vshra.s32 %v2138, 16
    %v2141 = vcvt.s32.f32 %v2139
    %v2142 = vcvt.s32.f32 %v2140
    %2143 = vmin.xlane.f32.xlu0 %v2142
    %v2144 = vpop.xlane.xlu0 %2143
    %vm2145 = vcmp.eq.f32.partialorder %v2142, %v2144
    %v2146 = vsel %vm2145, %v2141, inf
    %2147 = vmin.xlane.f32.xlu0 %v2146
    %v2148 = vpop.xlane.xlu0 %2147
    %v2149 = vcvt.f32.s32 %v2148
    %v2150 = vcvt.f32.s32 %v2144
    %v2151 = vshll.u32 %v2150, 16
    %v2152 = vadd.s32 %v2151, %v2149
    %v2153 = vsel %vm2136, %v2109, 0.0
    %v2154 = vsel %vm2069, %v2153, 0.0
    %2155 = vadd.xlane.f32.xlu0 %v2154
    %v2156 = vpop.xlane.xlu0 %2155
    %v2157 = vsel %vm2136, -inf, %v2115
    %v2158 = vsel %vm2069, %v2157, -inf
    %2159 = vmax.xlane.f32.xlu0 %v2158
    %v2160 = vpop.xlane.xlu0 %2159
    %vm2161 = vcmp.eq.f32.partialorder %v2157, %v2160
    %v2162 = vsel %vm2161, %v17, 16
    %v2163 = vsel %vm2069, %v2162, 2147483647
    %v2164 = vand.u32 %v2163, 65535
    %v2165 = vshra.s32 %v2163, 16
    %v2166 = vcvt.s32.f32 %v2164
    %v2167 = vcvt.s32.f32 %v2165
    %2168 = vmin.xlane.f32.xlu0 %v2167
    %v2169 = vpop.xlane.xlu0 %2168
    %vm2170 = vcmp.eq.f32.partialorder %v2167, %v2169
    %v2171 = vsel %vm2170, %v2166, inf
    %2172 = vmin.xlane.f32.xlu0 %v2171
    %v2173 = vpop.xlane.xlu0 %2172
    %v2174 = vcvt.f32.s32 %v2173
    %v2175 = vcvt.f32.s32 %v2169
    %v2176 = vshll.u32 %v2175, 16
    %v2177 = vadd.s32 %v2176, %v2174
    %vm2178 = vcmp.eq.s32.totalorder %v17, %v2177
    %v2179 = vsel %vm2178, %v2091, 32
    %v2180 = vsel %vm2069, %v2179, 2147483647
    %v2181 = vand.u32 %v2180, 65535
    %v2182 = vshra.s32 %v2180, 16
    %v2183 = vcvt.s32.f32 %v2181
    %v2184 = vcvt.s32.f32 %v2182
    %2185 = vmin.xlane.f32.xlu0 %v2184
    %v2186 = vpop.xlane.xlu0 %2185
    %vm2187 = vcmp.eq.f32.partialorder %v2184, %v2186
    %v2188 = vsel %vm2187, %v2183, inf
    %2189 = vmin.xlane.f32.xlu0 %v2188
    %v2190 = vpop.xlane.xlu0 %2189
    %v2191 = vcvt.f32.s32 %v2190
    %v2192 = vcvt.f32.s32 %v2186
    %v2193 = vshll.u32 %v2192, 16
    %v2194 = vadd.s32 %v2193, %v2191
    %v2195 = vsel %vm2178, %v2109, 0.0
    %v2196 = vsel %vm2069, %v2195, 0.0
    %2197 = vadd.xlane.f32.xlu0 %v2196
    %v2198 = vpop.xlane.xlu0 %2197
    %v2199 = vsel %vm2178, -inf, %v2157
    %v2200 = vsel %vm2069, %v2199, -inf
    %2201 = vmax.xlane.f32.xlu0 %v2200
    %v2202 = vpop.xlane.xlu0 %2201
    %vm2203 = vcmp.eq.f32.partialorder %v2199, %v2202
    %v2204 = vsel %vm2203, %v17, 16
    %v2205 = vsel %vm2069, %v2204, 2147483647
    %v2206 = vand.u32 %v2205, 65535
    %v2207 = vshra.s32 %v2205, 16
    %v2208 = vcvt.s32.f32 %v2206
    %v2209 = vcvt.s32.f32 %v2207
    %2210 = vmin.xlane.f32.xlu0 %v2209
    %v2211 = vpop.xlane.xlu0 %2210
    %vm2212 = vcmp.eq.f32.partialorder %v2209, %v2211
    %v2213 = vsel %vm2212, %v2208, inf
    %2214 = vmin.xlane.f32.xlu0 %v2213
    %v2215 = vpop.xlane.xlu0 %2214
    %v2216 = vcvt.f32.s32 %v2215
    %v2217 = vcvt.f32.s32 %v2211
    %v2218 = vshll.u32 %v2217, 16
    %v2219 = vadd.s32 %v2218, %v2216
    %vm2220 = vcmp.eq.s32.totalorder %v17, %v2219
    %v2221 = vsel %vm2220, %v2091, 32
    %v2222 = vsel %vm2069, %v2221, 2147483647
    %v2223 = vand.u32 %v2222, 65535
    %v2224 = vshra.s32 %v2222, 16
    %v2225 = vcvt.s32.f32 %v2223
    %v2226 = vcvt.s32.f32 %v2224
    %2227 = vmin.xlane.f32.xlu0 %v2226
    %v2228 = vpop.xlane.xlu0 %2227
    %vm2229 = vcmp.eq.f32.partialorder %v2226, %v2228
    %v2230 = vsel %vm2229, %v2225, inf
    %2231 = vmin.xlane.f32.xlu0 %v2230
    %v2232 = vpop.xlane.xlu0 %2231
    %v2233 = vcvt.f32.s32 %v2232
    %v2234 = vcvt.f32.s32 %v2228
    %v2235 = vshll.u32 %v2234, 16
    %v2236 = vadd.s32 %v2235, %v2233
    %v2237 = vsel %vm2220, %v2109, 0.0
    %v2238 = vsel %vm2069, %v2237, 0.0
    %2239 = vadd.xlane.f32.xlu0 %v2238
    %v2240 = vpop.xlane.xlu0 %2239
    %v2241 = vsel %vm211, %v2072, %v2118
    %v2242 = vsel %vm214, %v2241, %v2160
    %v2243 = vsel %vm217, %v2242, %v2202
    %v2244 = vsel %vm211, %v2107, %v2152
    %v2245 = vsel %vm214, %v2244, %v2194
    %v2246 = vsel %vm217, %v2245, %v2236
    %v2247 = vsel %vm211, %v2114, %v2156
    %v2248 = vsel %vm214, %v2247, %v2198
    %v2249 = vsel %vm217, %v2248, %v2240
    %v2250 = vsel %vm1995, 1, 0
    %2251 = vset.pattern.permute.xlu0 0
    %2252 = vperm.xlu0 %2251, %v2250
    %v2253 = vpop.permute.xlu0 %2252
    %vm2254 = vcmp.eq.s32.totalorder %v2253, 1
    %v2255 = vsel %vm2254, %v1996, %v2243
    %vm2256 = vcmask 25600
    %2257 = vst.msk [vmem:[#allocation2] sm:$0x3] %vm2256, %v2255
    %vm2258 = vcmp.eq.s32.totalorder %v1992, 0
    %vm2259 = vcmp.eq.s32.totalorder %v1993, 0
    %v2260 = vld [vmem:[#allocation4] sm:$0x3]
    %v2261 = vsel %vm2258, 1, 0
    %v2262 = vsel %vm2259, 1, 0
    %2263 = vset.pattern.permute.xlu0 0
    %2264 = vperm.xlu0 %2263, %v2261
    %v2265 = vpop.permute.xlu0 %2264
    %2266 = vset.pattern.permute.xlu0 0
    %2267 = vperm.xlu0 %2266, %v2262
    %v2268 = vpop.permute.xlu0 %2267
    %vm2269 = vcmp.eq.s32.totalorder %v2265, 1
    %vm2270 = vcmp.eq.s32.totalorder %v2268, 1
    %v2272 = vrot.slane %v2249, 1
    %v2275 = vsel %vm2269, %v2249, 0.0
    %v2276 = vsel %vm2270, %v2272, 0.0
    %v2279 = vrot.slane %v2276, 7
    %v2280 = vsel %vm2006, %v2279, %v2275
    %v2282 = vadd.f32 %v2260, %v2280
    %2283 = vst.msk [vmem:[#allocation4] sm:$0x3] %vm2256, %v2282
    %v2284 = vld [vmem:[#allocation5] sm:$0x3]
    %v2285 = vld [vmem:[%s2 + $0x5] sm:$0x1]
    %v2286 = vld [vmem:[%s2 + $0xd] sm:$0x1]
    %2287 = vset.pattern.permute.xlu0 0
    %2288 = vperm.xlu0 %2287, %v2285
    %v2289 = vpop.permute.xlu0 %2288
    %2290 = vset.pattern.permute.xlu0 0
    %2291 = vperm.xlu0 %2290, %v2286
    %v2292 = vpop.permute.xlu0 %2291
    %v2293 = vrot.slane %v2292, 7
    %v2294 = vsel %vm2006, %v2293, %v2289
    %vm2295 = vcmp.ne.s32.totalorder %v2246, %v2294
    %v2296 = vsel %vm2295, 1, 0
    %v2297 = vrot.slane %v2296, 1
    %vm2298 = vcmp.ne.s32.totalorder %v2296, 0
    %vm2299 = vcmp.ne.s32.totalorder %v2297, 0
    %vm2300 = vmand %vm2269, %vm2298
    %vm2301 = vmand %vm2270, %vm2299
    %v2302 = vsel %vm2300, 1.0, 0.0
    %v2303 = vsel %vm2301, 1.0, 0.0
    %v2306 = vrot.slane %v2303, 7
    %v2307 = vsel %vm2006, %v2306, %v2302
    %v2309 = vadd.f32 %v2284, %v2307
    %2310 = vst.msk [vmem:[#allocation5] sm:$0x3] %vm2256, %v2309
    %v2311 = vrot.slane %v1993, 7
    %v2312 = vsel %vm2006, %v2311, %v1992
    %vm2313 = vcmask 1024
    %2314 = vst.msk [vmem:[#allocation3] sm:$0x3] %vm2313, %v2312
  $region41: #{_mwer_forward.1} parent=0 // pred_fallthru
    _
  %s2315 = sadd.s32 %s675, 6
  %p2316 = scmp.lt.s32.totalorder %s2315, 8
  // Predicated region
  $region42: #{_mwer_forward.1} parent=0 // pred_check
    %p2317 = pneg %p2316
  $region43: #{_mwer_forward.1} parent=0 // pred_check_branch
    %2319 = sbr.rel (%p2317) target = $region45
  $region44: #{_mwer_forward.1} parent=0 // pred_region
    %v2320 = vld [vmem:[%s1 + $0x6] sm:$0x1]
    %v2321 = vld [vmem:[%s1 + $0xe] sm:$0x1]
    %v2322 = vld [vmem:[#allocation3] sm:$0x3]
    %vm2323 = vcmp.eq.s32.totalorder %v2322, 1
    %v2324 = vld [vmem:[#allocation2] sm:$0x3]
    %2326 = vset.pattern.permute.xlu0 0
    %2327 = vperm.xlu0 %2326, %v2324
    %v2328 = vpop.permute.xlu0 %2327
    %v2332 = vrot.slane %v275, 6
    %v2333 = vrot.slane %v276, 5
    %vm2334 = vcmask 1041409
    %v2335 = vsel %vm2334, %v2333, %v2332
    %v2337 = vadd.f32 %v2328, %v2335
    %2338 = vset.pattern.permute.xlu0 1
    %2339 = vperm.xlu0 %2338, %v2324
    %v2340 = vpop.permute.xlu0 %2339
    %v2342 = vadd.f32 %v2340, %v2335
    %2343 = vset.pattern.permute.xlu0 2
    %2344 = vperm.xlu0 %2343, %v2324
    %v2345 = vpop.permute.xlu0 %2344
    %v2347 = vadd.f32 %v2345, %v2335
    %2348 = vset.pattern.permute.xlu0 3
    %2349 = vperm.xlu0 %2348, %v2324
    %v2350 = vpop.permute.xlu0 %2349
    %v2352 = vadd.f32 %v2350, %v2335
    %2354 = vrot.lane.b32.xlu0 %v2342, 4
    %v2355 = vpop.permute.xlu0 %2354
    %2358 = vrot.lane.b32.xlu0 %v2347, 8
    %v2359 = vpop.permute.xlu0 %2358
    %2362 = vrot.lane.b32.xlu0 %v2352, 12
    %v2363 = vpop.permute.xlu0 %2362
    %v2365 = vsel %vm26, %v2337, %v2355
    %vm2366 = vcmask 64512
    %v2367 = vsel %vm2366, %v2365, %v2359
    %vm2368 = vcmask 97280
    %v2369 = vsel %vm2368, %v2367, %v2363
    %v2370 = vrot.slane %v225, 7
    %vm2371 = vcmask 1047559
    %v2372 = vsel %vm2371, %v2370, %v224
    %2373 = vrot.lane.b32.xlu0 %v2372, 4
    %v2374 = vpop.permute.xlu0 %2373
    %2375 = vrot.lane.b32.xlu0 %v2372, 8
    %v2376 = vpop.permute.xlu0 %2375
    %2377 = vrot.lane.b32.xlu0 %v2372, 12
    %v2378 = vpop.permute.xlu0 %2377
    %v2379 = vsel %vm26, %v2372, %v2374
    %v2380 = vsel %vm2366, %v2379, %v2376
    %v2381 = vsel %vm2368, %v2380, %v2378
    %v2382 = vrot.slane %v276, 7
    %v2383 = vsel %vm2371, %v2382, %v275
    %2385 = vrot.lane.b32.xlu0 %v2383, 4
    %v2386 = vpop.permute.xlu0 %2385
    %2388 = vrot.lane.b32.xlu0 %v2383, 8
    %v2389 = vpop.permute.xlu0 %2388
    %2391 = vrot.lane.b32.xlu0 %v2383, 12
    %v2392 = vpop.permute.xlu0 %2391
    %v2394 = vsel %vm26, %v2383, %v2386
    %v2395 = vsel %vm2366, %v2394, %v2389
    %v2396 = vsel %vm2368, %v2395, %v2392
    %vm2397 = vcmask 123904
    %v2398 = vsel %vm2397, %v2369, -inf
    %2399 = vmax.xlane.f32.xlu0 %v2398
    %v2400 = vpop.xlane.xlu0 %2399
    %vm2401 = vcmp.eq.f32.partialorder %v2369, %v2400
    %v2402 = vsel %vm2401, %v17, 16
    %v2403 = vsel %vm2397, %v2402, 2147483647
    %v2404 = vand.u32 %v2403, 65535
    %v2405 = vshra.s32 %v2403, 16
    %v2406 = vcvt.s32.f32 %v2404
    %v2407 = vcvt.s32.f32 %v2405
    %2408 = vmin.xlane.f32.xlu0 %v2407
    %v2409 = vpop.xlane.xlu0 %2408
    %vm2410 = vcmp.eq.f32.partialorder %v2407, %v2409
    %v2411 = vsel %vm2410, %v2406, inf
    %2412 = vmin.xlane.f32.xlu0 %v2411
    %v2413 = vpop.xlane.xlu0 %2412
    %v2414 = vcvt.f32.s32 %v2413
    %v2415 = vcvt.f32.s32 %v2409
    %v2416 = vshll.u32 %v2415, 16
    %v2417 = vadd.s32 %v2416, %v2414
    %vm2418 = vcmp.eq.s32.totalorder %v17, %v2417
    %v2419 = vrot.slane %v2381, 6
    %v2420 = vsel %vm2418, %v2419, 32
    %v2421 = vsel %vm2397, %v2420, 2147483647
    %v2422 = vand.u32 %v2421, 65535
    %v2423 = vshra.s32 %v2421, 16
    %v2424 = vcvt.s32.f32 %v2422
    %v2425 = vcvt.s32.f32 %v2423
    %2426 = vmin.xlane.f32.xlu0 %v2425
    %v2427 = vpop.xlane.xlu0 %2426
    %vm2428 = vcmp.eq.f32.partialorder %v2425, %v2427
    %v2429 = vsel %vm2428, %v2424, inf
    %2430 = vmin.xlane.f32.xlu0 %v2429
    %v2431 = vpop.xlane.xlu0 %2430
    %v2432 = vcvt.f32.s32 %v2431
    %v2433 = vcvt.f32.s32 %v2427
    %v2434 = vshll.u32 %v2433, 16
    %v2435 = vadd.s32 %v2434, %v2432
    %v2437 = vrot.slane %v2396, 6
    %v2439 = vsel %vm2418, %v2437, 0.0
    %v2440 = vsel %vm2397, %v2439, 0.0
    %2441 = vadd.xlane.f32.xlu0 %v2440
    %v2442 = vpop.xlane.xlu0 %2441
    %v2443 = vsel %vm2418, -inf, %v2369
    %v2444 = vsel %vm2397, %v2443, -inf
    %2445 = vmax.xlane.f32.xlu0 %v2444
    %v2446 = vpop.xlane.xlu0 %2445
    %vm2447 = vcmp.eq.f32.partialorder %v2443, %v2446
    %v2448 = vsel %vm2447, %v17, 16
    %v2449 = vsel %vm2397, %v2448, 2147483647
    %v2450 = vand.u32 %v2449, 65535
    %v2451 = vshra.s32 %v2449, 16
    %v2452 = vcvt.s32.f32 %v2450
    %v2453 = vcvt.s32.f32 %v2451
    %2454 = vmin.xlane.f32.xlu0 %v2453
    %v2455 = vpop.xlane.xlu0 %2454
    %vm2456 = vcmp.eq.f32.partialorder %v2453, %v2455
    %v2457 = vsel %vm2456, %v2452, inf
    %2458 = vmin.xlane.f32.xlu0 %v2457
    %v2459 = vpop.xlane.xlu0 %2458
    %v2460 = vcvt.f32.s32 %v2459
    %v2461 = vcvt.f32.s32 %v2455
    %v2462 = vshll.u32 %v2461, 16
    %v2463 = vadd.s32 %v2462, %v2460
    %vm2464 = vcmp.eq.s32.totalorder %v17, %v2463
    %v2465 = vsel %vm2464, %v2419, 32
    %v2466 = vsel %vm2397, %v2465, 2147483647
    %v2467 = vand.u32 %v2466, 65535
    %v2468 = vshra.s32 %v2466, 16
    %v2469 = vcvt.s32.f32 %v2467
    %v2470 = vcvt.s32.f32 %v2468
    %2471 = vmin.xlane.f32.xlu0 %v2470
    %v2472 = vpop.xlane.xlu0 %2471
    %vm2473 = vcmp.eq.f32.partialorder %v2470, %v2472
    %v2474 = vsel %vm2473, %v2469, inf
    %2475 = vmin.xlane.f32.xlu0 %v2474
    %v2476 = vpop.xlane.xlu0 %2475
    %v2477 = vcvt.f32.s32 %v2476
    %v2478 = vcvt.f32.s32 %v2472
    %v2479 = vshll.u32 %v2478, 16
    %v2480 = vadd.s32 %v2479, %v2477
    %v2481 = vsel %vm2464, %v2437, 0.0
    %v2482 = vsel %vm2397, %v2481, 0.0
    %2483 = vadd.xlane.f32.xlu0 %v2482
    %v2484 = vpop.xlane.xlu0 %2483
    %v2485 = vsel %vm2464, -inf, %v2443
    %v2486 = vsel %vm2397, %v2485, -inf
    %2487 = vmax.xlane.f32.xlu0 %v2486
    %v2488 = vpop.xlane.xlu0 %2487
    %vm2489 = vcmp.eq.f32.partialorder %v2485, %v2488
    %v2490 = vsel %vm2489, %v17, 16
    %v2491 = vsel %vm2397, %v2490, 2147483647
    %v2492 = vand.u32 %v2491, 65535
    %v2493 = vshra.s32 %v2491, 16
    %v2494 = vcvt.s32.f32 %v2492
    %v2495 = vcvt.s32.f32 %v2493
    %2496 = vmin.xlane.f32.xlu0 %v2495
    %v2497 = vpop.xlane.xlu0 %2496
    %vm2498 = vcmp.eq.f32.partialorder %v2495, %v2497
    %v2499 = vsel %vm2498, %v2494, inf
    %2500 = vmin.xlane.f32.xlu0 %v2499
    %v2501 = vpop.xlane.xlu0 %2500
    %v2502 = vcvt.f32.s32 %v2501
    %v2503 = vcvt.f32.s32 %v2497
    %v2504 = vshll.u32 %v2503, 16
    %v2505 = vadd.s32 %v2504, %v2502
    %vm2506 = vcmp.eq.s32.totalorder %v17, %v2505
    %v2507 = vsel %vm2506, %v2419, 32
    %v2508 = vsel %vm2397, %v2507, 2147483647
    %v2509 = vand.u32 %v2508, 65535
    %v2510 = vshra.s32 %v2508, 16
    %v2511 = vcvt.s32.f32 %v2509
    %v2512 = vcvt.s32.f32 %v2510
    %2513 = vmin.xlane.f32.xlu0 %v2512
    %v2514 = vpop.xlane.xlu0 %2513
    %vm2515 = vcmp.eq.f32.partialorder %v2512, %v2514
    %v2516 = vsel %vm2515, %v2511, inf
    %2517 = vmin.xlane.f32.xlu0 %v2516
    %v2518 = vpop.xlane.xlu0 %2517
    %v2519 = vcvt.f32.s32 %v2518
    %v2520 = vcvt.f32.s32 %v2514
    %v2521 = vshll.u32 %v2520, 16
    %v2522 = vadd.s32 %v2521, %v2519
    %v2523 = vsel %vm2506, %v2437, 0.0
    %v2524 = vsel %vm2397, %v2523, 0.0
    %2525 = vadd.xlane.f32.xlu0 %v2524
    %v2526 = vpop.xlane.xlu0 %2525
    %v2527 = vsel %vm2506, -inf, %v2485
    %v2528 = vsel %vm2397, %v2527, -inf
    %2529 = vmax.xlane.f32.xlu0 %v2528
    %v2530 = vpop.xlane.xlu0 %2529
    %vm2531 = vcmp.eq.f32.partialorder %v2527, %v2530
    %v2532 = vsel %vm2531, %v17, 16
    %v2533 = vsel %vm2397, %v2532, 2147483647
    %v2534 = vand.u32 %v2533, 65535
    %v2535 = vshra.s32 %v2533, 16
    %v2536 = vcvt.s32.f32 %v2534
    %v2537 = vcvt.s32.f32 %v2535
    %2538 = vmin.xlane.f32.xlu0 %v2537
    %v2539 = vpop.xlane.xlu0 %2538
    %vm2540 = vcmp.eq.f32.partialorder %v2537, %v2539
    %v2541 = vsel %vm2540, %v2536, inf
    %2542 = vmin.xlane.f32.xlu0 %v2541
    %v2543 = vpop.xlane.xlu0 %2542
    %v2544 = vcvt.f32.s32 %v2543
    %v2545 = vcvt.f32.s32 %v2539
    %v2546 = vshll.u32 %v2545, 16
    %v2547 = vadd.s32 %v2546, %v2544
    %vm2548 = vcmp.eq.s32.totalorder %v17, %v2547
    %v2549 = vsel %vm2548, %v2419, 32
    %v2550 = vsel %vm2397, %v2549, 2147483647
    %v2551 = vand.u32 %v2550, 65535
    %v2552 = vshra.s32 %v2550, 16
    %v2553 = vcvt.s32.f32 %v2551
    %v2554 = vcvt.s32.f32 %v2552
    %2555 = vmin.xlane.f32.xlu0 %v2554
    %v2556 = vpop.xlane.xlu0 %2555
    %vm2557 = vcmp.eq.f32.partialorder %v2554, %v2556
    %v2558 = vsel %vm2557, %v2553, inf
    %2559 = vmin.xlane.f32.xlu0 %v2558
    %v2560 = vpop.xlane.xlu0 %2559
    %v2561 = vcvt.f32.s32 %v2560
    %v2562 = vcvt.f32.s32 %v2556
    %v2563 = vshll.u32 %v2562, 16
    %v2564 = vadd.s32 %v2563, %v2561
    %v2565 = vsel %vm2548, %v2437, 0.0
    %v2566 = vsel %vm2397, %v2565, 0.0
    %2567 = vadd.xlane.f32.xlu0 %v2566
    %v2568 = vpop.xlane.xlu0 %2567
    %v2569 = vsel %vm211, %v2400, %v2446
    %v2570 = vsel %vm214, %v2569, %v2488
    %v2571 = vsel %vm217, %v2570, %v2530
    %v2572 = vsel %vm211, %v2435, %v2480
    %v2573 = vsel %vm214, %v2572, %v2522
    %v2574 = vsel %vm217, %v2573, %v2564
    %v2575 = vsel %vm211, %v2442, %v2484
    %v2576 = vsel %vm214, %v2575, %v2526
    %v2577 = vsel %vm217, %v2576, %v2568
    %v2578 = vsel %vm2323, 1, 0
    %2579 = vset.pattern.permute.xlu0 0
    %2580 = vperm.xlu0 %2579, %v2578
    %v2581 = vpop.permute.xlu0 %2580
    %vm2582 = vcmp.eq.s32.totalorder %v2581, 1
    %v2583 = vsel %vm2582, %v2324, %v2571
    %vm2584 = vcmask 25600
    %2585 = vst.msk [vmem:[#allocation2] sm:$0x3] %vm2584, %v2583
    %vm2586 = vcmp.eq.s32.totalorder %v2320, 0
    %vm2587 = vcmp.eq.s32.totalorder %v2321, 0
    %v2588 = vld [vmem:[#allocation4] sm:$0x3]
    %v2589 = vsel %vm2586, 1, 0
    %v2590 = vsel %vm2587, 1, 0
    %2591 = vset.pattern.permute.xlu0 0
    %2592 = vperm.xlu0 %2591, %v2589
    %v2593 = vpop.permute.xlu0 %2592
    %2594 = vset.pattern.permute.xlu0 0
    %2595 = vperm.xlu0 %2594, %v2590
    %v2596 = vpop.permute.xlu0 %2595
    %vm2597 = vcmp.eq.s32.totalorder %v2593, 1
    %vm2598 = vcmp.eq.s32.totalorder %v2596, 1
    %v2600 = vrot.slane %v2577, 1
    %v2603 = vsel %vm2597, %v2577, 0.0
    %v2604 = vsel %vm2598, %v2600, 0.0
    %v2607 = vrot.slane %v2604, 7
    %v2608 = vsel %vm2334, %v2607, %v2603
    %v2610 = vadd.f32 %v2588, %v2608
    %2611 = vst.msk [vmem:[#allocation4] sm:$0x3] %vm2584, %v2610
    %v2612 = vld [vmem:[#allocation5] sm:$0x3]
    %v2613 = vld [vmem:[%s2 + $0x6] sm:$0x1]
    %v2614 = vld [vmem:[%s2 + $0xe] sm:$0x1]
    %2615 = vset.pattern.permute.xlu0 0
    %2616 = vperm.xlu0 %2615, %v2613
    %v2617 = vpop.permute.xlu0 %2616
    %2618 = vset.pattern.permute.xlu0 0
    %2619 = vperm.xlu0 %2618, %v2614
    %v2620 = vpop.permute.xlu0 %2619
    %v2621 = vrot.slane %v2620, 7
    %v2622 = vsel %vm2334, %v2621, %v2617
    %vm2623 = vcmp.ne.s32.totalorder %v2574, %v2622
    %v2624 = vsel %vm2623, 1, 0
    %v2625 = vrot.slane %v2624, 1
    %vm2626 = vcmp.ne.s32.totalorder %v2624, 0
    %vm2627 = vcmp.ne.s32.totalorder %v2625, 0
    %vm2628 = vmand %vm2597, %vm2626
    %vm2629 = vmand %vm2598, %vm2627
    %v2630 = vsel %vm2628, 1.0, 0.0
    %v2631 = vsel %vm2629, 1.0, 0.0
    %v2634 = vrot.slane %v2631, 7
    %v2635 = vsel %vm2334, %v2634, %v2630
    %v2637 = vadd.f32 %v2612, %v2635
    %2638 = vst.msk [vmem:[#allocation5] sm:$0x3] %vm2584, %v2637
    %v2639 = vrot.slane %v2321, 7
    %v2640 = vsel %vm2334, %v2639, %v2320
    %vm2641 = vcmask 1024
    %2642 = vst.msk [vmem:[#allocation3] sm:$0x3] %vm2641, %v2640
  $region45: #{_mwer_forward.1} parent=0 // pred_fallthru
    _
  %s2643 = sadd.s32 %s675, 7
  %p2644 = scmp.lt.s32.totalorder %s2643, 8
  // Predicated region
  $region46: #{_mwer_forward.1} parent=0 // pred_check
    %p2645 = pneg %p2644
  $region47: #{_mwer_forward.1} parent=0 // pred_check_branch
    %2647 = sbr.rel (%p2645) target = $region49
  $region48: #{_mwer_forward.1} parent=0 // pred_region
    %v2648 = vld [vmem:[%s1 + $0x7] sm:$0x1]
    %v2649 = vld [vmem:[%s1 + $0xf] sm:$0x1]
    %v2650 = vld [vmem:[#allocation3] sm:$0x3]
    %vm2651 = vcmp.eq.s32.totalorder %v2650, 1
    %v2652 = vld [vmem:[#allocation2] sm:$0x3]
    %2654 = vset.pattern.permute.xlu0 0
    %2655 = vperm.xlu0 %2654, %v2652
    %v2656 = vpop.permute.xlu0 %2655
    %v2660 = vrot.slane %v275, 7
    %v2661 = vrot.slane %v276, 6
    %vm2662 = vcmask 1041409
    %v2663 = vsel %vm2662, %v2661, %v2660
    %v2665 = vadd.f32 %v2656, %v2663
    %2666 = vset.pattern.permute.xlu0 1
    %2667 = vperm.xlu0 %2666, %v2652
    %v2668 = vpop.permute.xlu0 %2667
    %v2670 = vadd.f32 %v2668, %v2663
    %2671 = vset.pattern.permute.xlu0 2
    %2672 = vperm.xlu0 %2671, %v2652
    %v2673 = vpop.permute.xlu0 %2672
    %v2675 = vadd.f32 %v2673, %v2663
    %2676 = vset.pattern.permute.xlu0 3
    %2677 = vperm.xlu0 %2676, %v2652
    %v2678 = vpop.permute.xlu0 %2677
    %v2680 = vadd.f32 %v2678, %v2663
    %2682 = vrot.lane.b32.xlu0 %v2670, 4
    %v2683 = vpop.permute.xlu0 %2682
    %2686 = vrot.lane.b32.xlu0 %v2675, 8
    %v2687 = vpop.permute.xlu0 %2686
    %2690 = vrot.lane.b32.xlu0 %v2680, 12
    %v2691 = vpop.permute.xlu0 %2690
    %v2693 = vsel %vm26, %v2665, %v2683
    %vm2694 = vcmask 64512
    %v2695 = vsel %vm2694, %v2693, %v2687
    %vm2696 = vcmask 97280
    %v2697 = vsel %vm2696, %v2695, %v2691
    %v2698 = vrot.slane %v225, 7
    %2699 = vrot.lane.b32.xlu0 %v224, 4
    %v2700 = vpop.permute.xlu0 %2699
    %2701 = vrot.lane.b32.xlu0 %v2698, 4
    %v2702 = vpop.permute.xlu0 %2701
    %2703 = vrot.lane.b32.xlu0 %v224, 8
    %v2704 = vpop.permute.xlu0 %2703
    %2705 = vrot.lane.b32.xlu0 %v2698, 8
    %v2706 = vpop.permute.xlu0 %2705
    %2707 = vrot.lane.b32.xlu0 %v224, 12
    %v2708 = vpop.permute.xlu0 %2707
    %2709 = vrot.lane.b32.xlu0 %v2698, 12
    %v2710 = vpop.permute.xlu0 %2709
    %v2711 = vsel %vm26, %v224, %v2700
    %v2712 = vsel %vm26, %v2698, %v2702
    %v2713 = vsel %vm2694, %v2711, %v2704
    %v2714 = vsel %vm2694, %v2712, %v2706
    %v2715 = vsel %vm2696, %v2713, %v2708
    %v2716 = vsel %vm2696, %v2714, %v2710
    %v2717 = vrot.slane %v276, 7
    %2720 = vrot.lane.b32.xlu0 %v275, 4
    %v2721 = vpop.permute.xlu0 %2720
    %2722 = vrot.lane.b32.xlu0 %v2717, 4
    %v2723 = vpop.permute.xlu0 %2722
    %2726 = vrot.lane.b32.xlu0 %v275, 8
    %v2727 = vpop.permute.xlu0 %2726
    %2728 = vrot.lane.b32.xlu0 %v2717, 8
    %v2729 = vpop.permute.xlu0 %2728
    %2732 = vrot.lane.b32.xlu0 %v275, 12
    %v2733 = vpop.permute.xlu0 %2732
    %2734 = vrot.lane.b32.xlu0 %v2717, 12
    %v2735 = vpop.permute.xlu0 %2734
    %v2738 = vsel %vm26, %v275, %v2721
    %v2739 = vsel %vm26, %v2717, %v2723
    %v2740 = vsel %vm2694, %v2738, %v2727
    %v2741 = vsel %vm2694, %v2739, %v2729
    %v2742 = vsel %vm2696, %v2740, %v2733
    %v2743 = vsel %vm2696, %v2741, %v2735
    %vm2744 = vcmask 123904
    %v2745 = vsel %vm2744, %v2697, -inf
    %2746 = vmax.xlane.f32.xlu0 %v2745
    %v2747 = vpop.xlane.xlu0 %2746
    %vm2748 = vcmp.eq.f32.partialorder %v2697, %v2747
    %v2749 = vsel %vm2748, %v17, 16
    %v2750 = vsel %vm2744, %v2749, 2147483647
    %v2751 = vand.u32 %v2750, 65535
    %v2752 = vshra.s32 %v2750, 16
    %v2753 = vcvt.s32.f32 %v2751
    %v2754 = vcvt.s32.f32 %v2752
    %2755 = vmin.xlane.f32.xlu0 %v2754
    %v2756 = vpop.xlane.xlu0 %2755
    %vm2757 = vcmp.eq.f32.partialorder %v2754, %v2756
    %v2758 = vsel %vm2757, %v2753, inf
    %2759 = vmin.xlane.f32.xlu0 %v2758
    %v2760 = vpop.xlane.xlu0 %2759
    %v2761 = vcvt.f32.s32 %v2760
    %v2762 = vcvt.f32.s32 %v2756
    %v2763 = vshll.u32 %v2762, 16
    %v2764 = vadd.s32 %v2763, %v2761
    %vm2765 = vcmp.eq.s32.totalorder %v17, %v2764
    %vm2766 = vcmask 1040384
    %v2767 = vrot.slane %v2715, 7
    %v2768 = vrot.slane %v2716, 7
    %v2769 = vsel %vm2766, %v2767, %v2768
    %v2770 = vsel %vm2765, %v2769, 32
    %v2771 = vsel %vm2744, %v2770, 2147483647
    %v2772 = vand.u32 %v2771, 65535
    %v2773 = vshra.s32 %v2771, 16
    %v2774 = vcvt.s32.f32 %v2772
    %v2775 = vcvt.s32.f32 %v2773
    %2776 = vmin.xlane.f32.xlu0 %v2775
    %v2777 = vpop.xlane.xlu0 %2776
    %vm2778 = vcmp.eq.f32.partialorder %v2775, %v2777
    %v2779 = vsel %vm2778, %v2774, inf
    %2780 = vmin.xlane.f32.xlu0 %v2779
    %v2781 = vpop.xlane.xlu0 %2780
    %v2782 = vcvt.f32.s32 %v2781
    %v2783 = vcvt.f32.s32 %v2777
    %v2784 = vshll.u32 %v2783, 16
    %v2785 = vadd.s32 %v2784, %v2782
    %v2788 = vrot.slane %v2742, 7
    %v2789 = vrot.slane %v2743, 7
    %v2790 = vsel %vm2766, %v2788, %v2789
    %v2792 = vsel %vm2765, %v2790, 0.0
    %v2793 = vsel %vm2744, %v2792, 0.0
    %2794 = vadd.xlane.f32.xlu0 %v2793
    %v2795 = vpop.xlane.xlu0 %2794
    %v2796 = vsel %vm2765, -inf, %v2697
    %v2797 = vsel %vm2744, %v2796, -inf
    %2798 = vmax.xlane.f32.xlu0 %v2797
    %v2799 = vpop.xlane.xlu0 %2798
    %vm2800 = vcmp.eq.f32.partialorder %v2796, %v2799
    %v2801 = vsel %vm2800, %v17, 16
    %v2802 = vsel %vm2744, %v2801, 2147483647
    %v2803 = vand.u32 %v2802, 65535
    %v2804 = vshra.s32 %v2802, 16
    %v2805 = vcvt.s32.f32 %v2803
    %v2806 = vcvt.s32.f32 %v2804
    %2807 = vmin.xlane.f32.xlu0 %v2806
    %v2808 = vpop.xlane.xlu0 %2807
    %vm2809 = vcmp.eq.f32.partialorder %v2806, %v2808
    %v2810 = vsel %vm2809, %v2805, inf
    %2811 = vmin.xlane.f32.xlu0 %v2810
    %v2812 = vpop.xlane.xlu0 %2811
    %v2813 = vcvt.f32.s32 %v2812
    %v2814 = vcvt.f32.s32 %v2808
    %v2815 = vshll.u32 %v2814, 16
    %v2816 = vadd.s32 %v2815, %v2813
    %vm2817 = vcmp.eq.s32.totalorder %v17, %v2816
    %v2818 = vsel %vm2817, %v2769, 32
    %v2819 = vsel %vm2744, %v2818, 2147483647
    %v2820 = vand.u32 %v2819, 65535
    %v2821 = vshra.s32 %v2819, 16
    %v2822 = vcvt.s32.f32 %v2820
    %v2823 = vcvt.s32.f32 %v2821
    %2824 = vmin.xlane.f32.xlu0 %v2823
    %v2825 = vpop.xlane.xlu0 %2824
    %vm2826 = vcmp.eq.f32.partialorder %v2823, %v2825
    %v2827 = vsel %vm2826, %v2822, inf
    %2828 = vmin.xlane.f32.xlu0 %v2827
    %v2829 = vpop.xlane.xlu0 %2828
    %v2830 = vcvt.f32.s32 %v2829
    %v2831 = vcvt.f32.s32 %v2825
    %v2832 = vshll.u32 %v2831, 16
    %v2833 = vadd.s32 %v2832, %v2830
    %v2834 = vsel %vm2817, %v2790, 0.0
    %v2835 = vsel %vm2744, %v2834, 0.0
    %2836 = vadd.xlane.f32.xlu0 %v2835
    %v2837 = vpop.xlane.xlu0 %2836
    %v2838 = vsel %vm2817, -inf, %v2796
    %v2839 = vsel %vm2744, %v2838, -inf
    %2840 = vmax.xlane.f32.xlu0 %v2839
    %v2841 = vpop.xlane.xlu0 %2840
    %vm2842 = vcmp.eq.f32.partialorder %v2838, %v2841
    %v2843 = vsel %vm2842, %v17, 16
    %v2844 = vsel %vm2744, %v2843, 2147483647
    %v2845 = vand.u32 %v2844, 65535
    %v2846 = vshra.s32 %v2844, 16
    %v2847 = vcvt.s32.f32 %v2845
    %v2848 = vcvt.s32.f32 %v2846
    %2849 = vmin.xlane.f32.xlu0 %v2848
    %v2850 = vpop.xlane.xlu0 %2849
    %vm2851 = vcmp.eq.f32.partialorder %v2848, %v2850
    %v2852 = vsel %vm2851, %v2847, inf
    %2853 = vmin.xlane.f32.xlu0 %v2852
    %v2854 = vpop.xlane.xlu0 %2853
    %v2855 = vcvt.f32.s32 %v2854
    %v2856 = vcvt.f32.s32 %v2850
    %v2857 = vshll.u32 %v2856, 16
    %v2858 = vadd.s32 %v2857, %v2855
    %vm2859 = vcmp.eq.s32.totalorder %v17, %v2858
    %v2860 = vsel %vm2859, %v2769, 32
    %v2861 = vsel %vm2744, %v2860, 2147483647
    %v2862 = vand.u32 %v2861, 65535
    %v2863 = vshra.s32 %v2861, 16
    %v2864 = vcvt.s32.f32 %v2862
    %v2865 = vcvt.s32.f32 %v2863
    %2866 = vmin.xlane.f32.xlu0 %v2865
    %v2867 = vpop.xlane.xlu0 %2866
    %vm2868 = vcmp.eq.f32.partialorder %v2865, %v2867
    %v2869 = vsel %vm2868, %v2864, inf
    %2870 = vmin.xlane.f32.xlu0 %v2869
    %v2871 = vpop.xlane.xlu0 %2870
    %v2872 = vcvt.f32.s32 %v2871
    %v2873 = vcvt.f32.s32 %v2867
    %v2874 = vshll.u32 %v2873, 16
    %v2875 = vadd.s32 %v2874, %v2872
    %v2876 = vsel %vm2859, %v2790, 0.0
    %v2877 = vsel %vm2744, %v2876, 0.0
    %2878 = vadd.xlane.f32.xlu0 %v2877
    %v2879 = vpop.xlane.xlu0 %2878
    %v2880 = vsel %vm2859, -inf, %v2838
    %v2881 = vsel %vm2744, %v2880, -inf
    %2882 = vmax.xlane.f32.xlu0 %v2881
    %v2883 = vpop.xlane.xlu0 %2882
    %vm2884 = vcmp.eq.f32.partialorder %v2880, %v2883
    %v2885 = vsel %vm2884, %v17, 16
    %v2886 = vsel %vm2744, %v2885, 2147483647
    %v2887 = vand.u32 %v2886, 65535
    %v2888 = vshra.s32 %v2886, 16
    %v2889 = vcvt.s32.f32 %v2887
    %v2890 = vcvt.s32.f32 %v2888
    %2891 = vmin.xlane.f32.xlu0 %v2890
    %v2892 = vpop.xlane.xlu0 %2891
    %vm2893 = vcmp.eq.f32.partialorder %v2890, %v2892
    %v2894 = vsel %vm2893, %v2889, inf
    %2895 = vmin.xlane.f32.xlu0 %v2894
    %v2896 = vpop.xlane.xlu0 %2895
    %v2897 = vcvt.f32.s32 %v2896
    %v2898 = vcvt.f32.s32 %v2892
    %v2899 = vshll.u32 %v2898, 16
    %v2900 = vadd.s32 %v2899, %v2897
    %vm2901 = vcmp.eq.s32.totalorder %v17, %v2900
    %v2902 = vsel %vm2901, %v2769, 32
    %v2903 = vsel %vm2744, %v2902, 2147483647
    %v2904 = vand.u32 %v2903, 65535
    %v2905 = vshra.s32 %v2903, 16
    %v2906 = vcvt.s32.f32 %v2904
    %v2907 = vcvt.s32.f32 %v2905
    %2908 = vmin.xlane.f32.xlu0 %v2907
    %v2909 = vpop.xlane.xlu0 %2908
    %vm2910 = vcmp.eq.f32.partialorder %v2907, %v2909
    %v2911 = vsel %vm2910, %v2906, inf
    %2912 = vmin.xlane.f32.xlu0 %v2911
    %v2913 = vpop.xlane.xlu0 %2912
    %v2914 = vcvt.f32.s32 %v2913
    %v2915 = vcvt.f32.s32 %v2909
    %v2916 = vshll.u32 %v2915, 16
    %v2917 = vadd.s32 %v2916, %v2914
    %v2918 = vsel %vm2901, %v2790, 0.0
    %v2919 = vsel %vm2744, %v2918, 0.0
    %2920 = vadd.xlane.f32.xlu0 %v2919
    %v2921 = vpop.xlane.xlu0 %2920
    %v2922 = vsel %vm211, %v2747, %v2799
    %v2923 = vsel %vm214, %v2922, %v2841
    %v2924 = vsel %vm217, %v2923, %v2883
    %v2925 = vsel %vm211, %v2785, %v2833
    %v2926 = vsel %vm214, %v2925, %v2875
    %v2927 = vsel %vm217, %v2926, %v2917
    %v2928 = vsel %vm211, %v2795, %v2837
    %v2929 = vsel %vm214, %v2928, %v2879
    %v2930 = vsel %vm217, %v2929, %v2921
    %v2931 = vsel %vm2651, 1, 0
    %2932 = vset.pattern.permute.xlu0 0
    %2933 = vperm.xlu0 %2932, %v2931
    %v2934 = vpop.permute.xlu0 %2933
    %vm2935 = vcmp.eq.s32.totalorder %v2934, 1
    %v2936 = vsel %vm2935, %v2652, %v2924
    %vm2937 = vcmask 25600
    %2938 = vst.msk [vmem:[#allocation2] sm:$0x3] %vm2937, %v2936
    %vm2939 = vcmp.eq.s32.totalorder %v2648, 0
    %vm2940 = vcmp.eq.s32.totalorder %v2649, 0
    %v2941 = vld [vmem:[#allocation4] sm:$0x3]
    %v2942 = vsel %vm2939, 1, 0
    %v2943 = vsel %vm2940, 1, 0
    %2944 = vset.pattern.permute.xlu0 0
    %2945 = vperm.xlu0 %2944, %v2942
    %v2946 = vpop.permute.xlu0 %2945
    %2947 = vset.pattern.permute.xlu0 0
    %2948 = vperm.xlu0 %2947, %v2943
    %v2949 = vpop.permute.xlu0 %2948
    %vm2950 = vcmp.eq.s32.totalorder %v2946, 1
    %vm2951 = vcmp.eq.s32.totalorder %v2949, 1
    %v2953 = vrot.slane %v2930, 1
    %v2956 = vsel %vm2950, %v2930, 0.0
    %v2957 = vsel %vm2951, %v2953, 0.0
    %v2960 = vrot.slane %v2957, 7
    %v2961 = vsel %vm2662, %v2960, %v2956
    %v2963 = vadd.f32 %v2941, %v2961
    %2964 = vst.msk [vmem:[#allocation4] sm:$0x3] %vm2937, %v2963
    %v2965 = vld [vmem:[#allocation5] sm:$0x3]
    %v2966 = vld [vmem:[%s2 + $0x7] sm:$0x1]
    %v2967 = vld [vmem:[%s2 + $0xf] sm:$0x1]
    %2968 = vset.pattern.permute.xlu0 0
    %2969 = vperm.xlu0 %2968, %v2966
    %v2970 = vpop.permute.xlu0 %2969
    %2971 = vset.pattern.permute.xlu0 0
    %2972 = vperm.xlu0 %2971, %v2967
    %v2973 = vpop.permute.xlu0 %2972
    %v2974 = vrot.slane %v2973, 7
    %v2975 = vsel %vm2662, %v2974, %v2970
    %vm2976 = vcmp.ne.s32.totalorder %v2927, %v2975
    %v2977 = vsel %vm2976, 1, 0
    %v2978 = vrot.slane %v2977, 1
    %vm2979 = vcmp.ne.s32.totalorder %v2977, 0
    %vm2980 = vcmp.ne.s32.totalorder %v2978, 0
    %vm2981 = vmand %vm2950, %vm2979
    %vm2982 = vmand %vm2951, %vm2980
    %v2983 = vsel %vm2981, 1.0, 0.0
    %v2984 = vsel %vm2982, 1.0, 0.0
    %v2987 = vrot.slane %v2984, 7
    %v2988 = vsel %vm2662, %v2987, %v2983
    %v2990 = vadd.f32 %v2965, %v2988
    %2991 = vst.msk [vmem:[#allocation5] sm:$0x3] %vm2937, %v2990
    %v2992 = vrot.slane %v2649, 7
    %v2993 = vsel %vm2662, %v2992, %v2648
    %vm2994 = vcmask 1024
    %2995 = vst.msk [vmem:[#allocation3] sm:$0x3] %vm2994, %v2993
  $region49: #{_mwer_forward.1} parent=0 // pred_fallthru
    _
  // Predicated region
  $region50: #{_mwer_forward.1} parent=0 // pred_check
    %p2996 = pneg %p277
  $region51: #{_mwer_forward.1} parent=0 // pred_check_branch
    %2998 = sbr.rel (%p2996) target = $region53
  $region52: #{_mwer_forward.1} parent=0 // pred_region
    %v2999 = vld [vmem:[#allocation4] sm:$0x3]
    %v3000 = vld [vmem:[#allocation5] sm:$0x3]
    %vm3001 = vcmask 25600
    %v3002 = vsel %vm3001, %v2999, -inf
    %3003 = vmax.xlane.f32.xlu0 %v3002
    %v3004 = vpop.xlane.xlu0 %3003
    %v3005 = vsub.f32 %v2999, %v3004
    %v3006 = vmul.f32 %v3005, 1.442695
    %v3007 = vpow.pop %v3006
    %v3008 = vsel %vm3001, %v3007, 0.0
    %3009 = vadd.xlane.f32.xlu0 %v3008
    %v3010 = vpop.xlane.xlu0 %3009
    %v3011 = vlog2.pop %v3010
    %v3012 = vmul.f32 %v3011, 0.6931472
    %v3013 = vadd.f32 %v3004, %v3012
    %v3014 = vsub.f32 %v2999, %v3013
    %v3015 = vmul.f32 %v3014, 1.442695
    %v3016 = vpow.pop %v3015
    %v3017 = vsel %vm3001, %v3000, 0.0
    %3018 = vadd.xlane.f32.xlu0 %v3017
    %v3019 = vpop.xlane.xlu0 %3018
    %v3020 = vrcp.pop 4.0
    %v3021 = vmul.f32 %v3019, %v3020
    %v3022 = vsub.f32 %v3000, %v3021
    %v3023 = vmul.f32 %v3016, %v3022
    %v3024 = vsel %vm3001, %v3023, 0.0
    %3025 = vadd.xlane.f32.xlu0 %v3024
    %v3026 = vpop.xlane.xlu0 %3025
    %vm3027 = vcmask 1024
    %3028 = vst.msk [vmem:[%s3] sm:$0x3] %vm3027, %v3026
  $region53: #{_mwer_forward.1} parent=0 // pred_fallthru
    _
  // Predicated region
  $region54: #{_mwer_forward.1} parent=0 // pred_check
    _
  $region55: #{_mwer_forward.1} parent=0 // pred_check_branch
    %3030 = sbr.rel (0) target = $region57
  $region56: #{_mwer_forward.1} parent=0 // pred_region
    _
  $region57: #{_mwer_forward.1} parent=0 // pred_fallthru
    _
  // Predicated region
  $region58: #{_mwer_forward.1} parent=0 // pred_check
    _
  $region59: #{_mwer_forward.1} parent=0 // pred_check_branch
    %3032 = sbr.rel (0) target = $region61
  $region60: #{_mwer_forward.1} parent=0 // pred_region
    _
  $region61: #{_mwer_forward.1} parent=0 // pred_fallthru
    _

</llo_original>
